<compile_context>
chip_gen: v5e
topology: v5e:2x2
jax: 0.10.0
libtpu: 0.0.40
codegen_flags: <defaults>
</compile_context>

<pallas_src>
import jax
import jax.numpy as jnp
from jax.experimental import pallas as pl
from jax.experimental.pallas import tpu as pltpu


def _sigmoid_via_tanh(x):
    # Exact identity: sigmoid(x) = 0.5*tanh(x/2) + 0.5 (tanh is one EUP op).
    return 0.5 * jnp.tanh(0.5 * x) + 0.5


def lstm_kernel(x_ref, wih0_ref, b0_ref, b1_ref, wfc_ref, bfc_ref,
                whh0_hbm, whh1_hbm, wih1_hbm,
                out_ref,
                whh0_v, whh1_v, wih1_v, sem):
    B = out_ref.shape[0]
    TB = x_ref.shape[0]
    T = TB // B
    HP = whh0_v.shape[0]          # per-gate padded hidden width (128)
    G = 4 * HP

    # Kick off the recurrent-weight DMAs (HBM -> VMEM scratch) immediately so
    # they overlap the hoisted input projection below.
    cp_whh0 = pltpu.make_async_copy(whh0_hbm, whh0_v, sem.at[0])
    cp_whh1 = pltpu.make_async_copy(whh1_hbm, whh1_v, sem.at[1])
    cp_wih1 = pltpu.make_async_copy(wih1_hbm, wih1_v, sem.at[2])
    cp_whh0.start()
    cp_whh1.start()
    cp_wih1.start()

    # Hoisted layer-0 input projection for all timesteps in ONE matmul
    # (independent of the recurrence -> off the sequential critical path).
    xp = (jnp.dot(x_ref[...], wih0_ref[...], preferred_element_type=jnp.float32)
          + jnp.broadcast_to(b0_ref[...], (TB, G)))          # (T*B, 4*HP)
    b1b = jnp.broadcast_to(b1_ref[...], (B, G))

    # Recurrent weights must be resident before the time loop starts.
    cp_whh0.wait()
    cp_whh1.wait()
    cp_wih1.wait()

    def gates_to_hc(g, c_prev):
        # Gate layout is (i | f | o | g): the three sigmoid gates form one
        # contiguous 3*HP lane slab -> single EUP tanh covers all of them.
        sg = _sigmoid_via_tanh(g[:, 0:3 * HP])
        i_g = sg[:, 0 * HP:1 * HP]
        f_g = sg[:, 1 * HP:2 * HP]
        o_g = sg[:, 2 * HP:3 * HP]
        g_g = jnp.tanh(g[:, 3 * HP:4 * HP])
        c_new = f_g * c_prev + i_g * g_g
        h_new = o_g * jnp.tanh(c_new)
        return h_new, c_new

    zeros = jnp.zeros((B, HP), jnp.float32)
    h0, c0, h1, c1 = zeros, zeros, zeros, zeros

    # Static unroll over time (T is small/static; fori_loop only if T grows).
    # TODO(synk): hold whh0/whh1/wih1 stationary in the MXU across the loop via
    # pltpu.matmul_push_rhs / matmul_acc_lhs / matmul_pop to avoid re-pushing
    # the RHS weights every step; jnp.dot re-pushes them each iteration.
    for t in range(T):
        # Layer-1 recurrent half depends only on h1(t-1): issue it first so it
        # overlaps layer-0's matmul + nonlinearity for this step.
        g1_rec = jnp.dot(h1, whh1_v[...], preferred_element_type=jnp.float32)

        # Layer 0: only the recurrent matmul sits on the sequential chain.
        g0 = xp[t * B:(t + 1) * B, :] + jnp.dot(
            h0, whh0_v[...], preferred_element_type=jnp.float32)
        h0, c0 = gates_to_hc(g0, c0)

        # Layer 1: input half + recurrent half (no concat, no fused matmul).
        g1 = (g1_rec
              + jnp.dot(h0, wih1_v[...], preferred_element_type=jnp.float32)
              + b1b)
        h1, c1 = gates_to_hc(g1, c1)

    # FC head on the last timestep's top-layer hidden state.
    out_ref[...] = (jnp.dot(h1, wfc_ref[...], preferred_element_type=jnp.float32)
                    + bfc_ref[...])


@jax.jit
def lstm_forward(x, kp):
    """x: (B, T, I) batch-first, float32.  kp: packed kernel params.  Returns (B, O)."""
    B, T, I = x.shape
    O = kp["wfc"].shape[1]
    HP, G = kp["whh0"].shape

    # Time-major rows: row t*B + b  <->  x[b, t, :].
    x_tb = jnp.transpose(x, (1, 0, 2)).reshape(T * B, I)

    vmem = lambda: pl.BlockSpec(memory_space=pltpu.MemorySpace.VMEM)
    hbm = lambda: pl.BlockSpec(memory_space=pl.ANY)

    return pl.pallas_call(
        lstm_kernel,
        out_shape=jax.ShapeDtypeStruct((B, O), jnp.float32),
        in_specs=[vmem(),            # x        (T*B, I)
                  vmem(),            # wih0     (I, 4*HP)
                  vmem(),            # b0       (1, 4*HP)
                  vmem(),            # b1       (1, 4*HP)
                  vmem(),            # wfc      (HP, O)
                  vmem(),            # bfc      (1, O)
                  hbm(),             # whh0     (manually DMA'd)
                  hbm(),             # whh1
                  hbm()],            # wih1
        out_specs=vmem(),
        scratch_shapes=[pltpu.VMEM((HP, G), jnp.float32),   # whh0 scratch
                        pltpu.VMEM((HP, G), jnp.float32),   # whh1 scratch
                        pltpu.VMEM((HP, G), jnp.float32),   # wih1 scratch
                        pltpu.SemaphoreType.DMA((3,))],
    )(x_tb, kp["wih0"], kp["b0"], kp["b1"], kp["wfc"], kp["bfc"],
      kp["whh0"], kp["whh1"], kp["wih1"])


# ----------------------------- parameter handling -----------------------------

def init_raw_params(key, input_size=2, hidden_size=50, output_size=2):
    """PyTorch-layout params, uniform(-1/sqrt(H), 1/sqrt(H)) like nn.LSTM / nn.Linear."""
    H, I, O = hidden_size, input_size, output_size
    k = 1.0 / jnp.sqrt(jnp.float32(H))
    keys = jax.random.split(key, 10)
    u = lambda kk, shape: jax.random.uniform(kk, shape, jnp.float32, -k, k)
    return {
        "w_ih0": u(keys[0], (4 * H, I)), "w_hh0": u(keys[1], (4 * H, H)),
        "b_ih0": u(keys[2], (4 * H,)),   "b_hh0": u(keys[3], (4 * H,)),
        "w_ih1": u(keys[4], (4 * H, H)), "w_hh1": u(keys[5], (4 * H, H)),
        "b_ih1": u(keys[6], (4 * H,)),   "b_hh1": u(keys[7], (4 * H,)),
        "w_fc": u(keys[8], (O, H)),      "b_fc": u(keys[9], (O,)),
    }


# PyTorch packs LSTM gates as (i, f, g, o) along the 4H axis; the kernel wants
# (i, f, o, g) so the three sigmoid gates form one contiguous 3*HP lane slab.
_TORCH_GATE_TO_KERNEL_BLOCK = (0, 1, 3, 2)   # i->0, f->1, g->3, o->2


def pack_params(p, hidden_size=50):
    """Pad / transpose PyTorch weights into the lane-aligned kernel layout.

    Each gate occupies its own 128-lane block (order i, f, o, g), recurrent
    weights are row-padded to HP, and layer-1 keeps W_hh1 / W_ih1 separate so
    the kernel can overlap the h1-dependent half with layer-0.
    Padding lanes of h/c provably stay zero (zero weights/bias lanes, zero init).
    """
    H = hidden_size
    HP = ((H + 127) // 128) * 128

    def gates_cols(w):                      # (4H, K) torch layout -> (K, 4*HP)
        K = w.shape[1]
        out = jnp.zeros((K, 4 * HP), jnp.float32)
        for tg, kg in enumerate(_TORCH_GATE_TO_KERNEL_BLOCK):
            out = out.at[:, kg * HP: kg * HP + H].set(w[tg * H:(tg + 1) * H, :].T)
        return out

    def gates_bias(b):                      # (4H,) -> (1, 4*HP)
        out = jnp.zeros((1, 4 * HP), jnp.float32)
        for tg, kg in enumerate(_TORCH_GATE_TO_KERNEL_BLOCK):
            out = out.at[:, kg * HP: kg * HP + H].set(b[tg * H:(tg + 1) * H][None, :])
        return out

    def pad_rows(w, rows):                  # (K, N) -> (rows, N), zero-padded
        return jnp.zeros((rows, w.shape[1]), jnp.float32).at[: w.shape[0]].set(w)

    wih0 = gates_cols(p["w_ih0"])                            # (I, 4*HP)
    whh0 = pad_rows(gates_cols(p["w_hh0"]), HP)              # (HP, 4*HP)
    b0 = gates_bias(p["b_ih0"] + p["b_hh0"])                 # (1, 4*HP)

    whh1 = pad_rows(gates_cols(p["w_hh1"]), HP)              # (HP, 4*HP), consumes h1(t-1)
    wih1 = pad_rows(gates_cols(p["w_ih1"]), HP)              # (HP, 4*HP), consumes h0(t)
    b1 = gates_bias(p["b_ih1"] + p["b_hh1"])                 # (1, 4*HP)

    wfc = pad_rows(p["w_fc"].T, HP)                          # (HP, O)
    bfc = p["b_fc"][None, :]                                 # (1, O)

    return {"wih0": wih0, "whh0": whh0, "b0": b0,
            "whh1": whh1, "wih1": wih1, "b1": b1,
            "wfc": wfc, "bfc": bfc}


# --------------------------------- reference ----------------------------------

def lstm_reference(x, p):
    """Pure-JAX reference of the PyTorch forward (full-f32 matmuls, torch gate order)."""
    B, T, _ = x.shape
    H = p["w_hh0"].shape[1]
    hi = jax.lax.Precision.HIGHEST

    def cell(x_in, h, c, wih, whh, b):
        g = (jnp.dot(x_in, wih.T, precision=hi)
             + jnp.dot(h, whh.T, precision=hi) + b)
        i = jax.nn.sigmoid(g[:, :H])
        f = jax.nn.sigmoid(g[:, H:2 * H])
        gg = jnp.tanh(g[:, 2 * H:3 * H])
        o = jax.nn.sigmoid(g[:, 3 * H:])
        c = f * c + i * gg
        h = o * jnp.tanh(c)
        return h, c

    h0 = c0 = h1 = c1 = jnp.zeros((B, H), jnp.float32)
    b0 = p["b_ih0"] + p["b_hh0"]
    b1 = p["b_ih1"] + p["b_hh1"]
    for t in range(T):
        xt = x[:, t, :]
        h0, c0 = cell(xt, h0, c0, p["w_ih0"], p["w_hh0"], b0)
        h1, c1 = cell(h0, h1, c1, p["w_ih1"], p["w_hh1"], b1)
    return jnp.dot(h1, p["w_fc"].T, precision=hi) + p["b_fc"]


if __name__ == "__main__":
    B, T, I, H, O = 2, 8, 2, 50, 2
    key = jax.random.PRNGKey(0)
    k_x, k_p = jax.random.split(key)
    x = jax.random.normal(k_x, (B, T, I), jnp.float32)

    raw = init_raw_params(k_p, input_size=I, hidden_size=H, output_size=O)
    kp = pack_params(raw, hidden_size=H)

    out = lstm_forward(x, kp)
    out = jax.block_until_ready(out)

    ref = lstm_reference(x, raw)
    assert out.shape == (B, O)
    # Kernel matmuls use the MXU's default (single-pass bf16) path; tolerance
    # covers bf16 mantissa rounding compounded across the 8-step recurrence.
    assert jnp.allclose(out, ref, atol=2e-2, rtol=2e-2), (out, ref)
    print("KERNEL_OK")
</pallas_src>

<mosaic_0001>
module attributes {stable_mosaic.version = 11 : i64} {
  func.func @lstm_kernel(%arg0: memref<16x2xf32, #tpu.memory_space<vmem>>, %arg1: memref<2x512xf32, #tpu.memory_space<vmem>>, %arg2: memref<1x512xf32, #tpu.memory_space<vmem>>, %arg3: memref<1x512xf32, #tpu.memory_space<vmem>>, %arg4: memref<128x2xf32, #tpu.memory_space<vmem>>, %arg5: memref<1x2xf32, #tpu.memory_space<vmem>>, %arg6: memref<128x512xf32, #tpu.memory_space<any>>, %arg7: memref<128x512xf32, #tpu.memory_space<any>>, %arg8: memref<128x512xf32, #tpu.memory_space<any>>, %arg9: memref<2x2xf32, #tpu.memory_space<vmem>>, %arg10: memref<128x512xf32, #tpu.memory_space<vmem>>, %arg11: memref<128x512xf32, #tpu.memory_space<vmem>>, %arg12: memref<128x512xf32, #tpu.memory_space<vmem>>, %arg13: memref<3x!tpu.dma_semaphore, #tpu.memory_space<semaphore_mem>>) attributes {dimension_semantics = [], scalar_prefetch = 0 : i64, scratch_operands = 4 : i64, tpu.core_type = #tpu.core_type<tc>} {
    %c0_i32 = arith.constant 0 : i32
    %0 = tpu.memref_slice %arg13[%c0_i32] : memref<3x!tpu.dma_semaphore, #tpu.memory_space<semaphore_mem>> -> memref<1x!tpu.dma_semaphore, #tpu.memory_space<semaphore_mem>>
    %1 = tpu.memref_squeeze %0 : memref<1x!tpu.dma_semaphore, #tpu.memory_space<semaphore_mem>> -> memref<!tpu.dma_semaphore, #tpu.memory_space<semaphore_mem>>
    tpu.enqueue_dma source(%arg6 : memref<128x512xf32, #tpu.memory_space<any>>) target(%arg10 : memref<128x512xf32, #tpu.memory_space<vmem>>) target_semaphore(%1 : memref<!tpu.dma_semaphore, #tpu.memory_space<semaphore_mem>>)
    %c1_i32 = arith.constant 1 : i32
    %2 = tpu.memref_slice %arg13[%c1_i32] : memref<3x!tpu.dma_semaphore, #tpu.memory_space<semaphore_mem>> -> memref<1x!tpu.dma_semaphore, #tpu.memory_space<semaphore_mem>>
    %3 = tpu.memref_squeeze %2 : memref<1x!tpu.dma_semaphore, #tpu.memory_space<semaphore_mem>> -> memref<!tpu.dma_semaphore, #tpu.memory_space<semaphore_mem>>
    tpu.enqueue_dma source(%arg7 : memref<128x512xf32, #tpu.memory_space<any>>) target(%arg11 : memref<128x512xf32, #tpu.memory_space<vmem>>) target_semaphore(%3 : memref<!tpu.dma_semaphore, #tpu.memory_space<semaphore_mem>>)
    %c2_i32 = arith.constant 2 : i32
    %4 = tpu.memref_slice %arg13[%c2_i32] : memref<3x!tpu.dma_semaphore, #tpu.memory_space<semaphore_mem>> -> memref<1x!tpu.dma_semaphore, #tpu.memory_space<semaphore_mem>>
    %5 = tpu.memref_squeeze %4 : memref<1x!tpu.dma_semaphore, #tpu.memory_space<semaphore_mem>> -> memref<!tpu.dma_semaphore, #tpu.memory_space<semaphore_mem>>
    tpu.enqueue_dma source(%arg8 : memref<128x512xf32, #tpu.memory_space<any>>) target(%arg12 : memref<128x512xf32, #tpu.memory_space<vmem>>) target_semaphore(%5 : memref<!tpu.dma_semaphore, #tpu.memory_space<semaphore_mem>>)
    %c0 = arith.constant 0 : index
    %c0_0 = arith.constant 0 : index
    %6 = vector.load %arg0[%c0, %c0_0] : memref<16x2xf32, #tpu.memory_space<vmem>>, vector<16x2xf32>
    %c0_1 = arith.constant 0 : index
    %c0_2 = arith.constant 0 : index
    %7 = vector.load %arg1[%c0_1, %c0_2] : memref<2x512xf32, #tpu.memory_space<vmem>>, vector<2x512xf32>
    %cst = arith.constant dense<0.000000e+00> : vector<16x512xf32>
    %8 = tpu.matmul %6, %7, %cst {dimension_numbers = #tpu.dot_dimension_numbers<[1], [0], [0], [1], [0, 0, 1, 1], [], []>} : vector<16x2xf32>, vector<2x512xf32>, vector<16x512xf32> -> vector<16x512xf32>
    %c0_3 = arith.constant 0 : index
    %c0_4 = arith.constant 0 : index
    %9 = vector.load %arg2[%c0_3, %c0_4] : memref<1x512xf32, #tpu.memory_space<vmem>>, vector<1x512xf32>
    %10 = vector.shape_cast %9 : vector<1x512xf32> to vector<1x512xf32>
    %11 = vector.broadcast %10 : vector<1x512xf32> to vector<16x512xf32>
    %12 = arith.addf %8, %11 : vector<16x512xf32>
    %c0_5 = arith.constant 0 : index
    %c0_6 = arith.constant 0 : index
    %13 = vector.load %arg3[%c0_5, %c0_6] : memref<1x512xf32, #tpu.memory_space<vmem>>, vector<1x512xf32>
    %14 = vector.shape_cast %13 : vector<1x512xf32> to vector<1x512xf32>
    %15 = vector.broadcast %14 : vector<1x512xf32> to vector<2x512xf32>
    %c0_i32_7 = arith.constant 0 : i32
    %16 = tpu.memref_slice %arg13[%c0_i32_7] : memref<3x!tpu.dma_semaphore, #tpu.memory_space<semaphore_mem>> -> memref<1x!tpu.dma_semaphore, #tpu.memory_space<semaphore_mem>>
    %17 = tpu.memref_squeeze %16 : memref<1x!tpu.dma_semaphore, #tpu.memory_space<semaphore_mem>> -> memref<!tpu.dma_semaphore, #tpu.memory_space<semaphore_mem>>
    tpu.wait_dma2 semaphore(%17 : memref<!tpu.dma_semaphore, #tpu.memory_space<semaphore_mem>>) src(%arg6 : memref<128x512xf32, #tpu.memory_space<any>>) dst(%arg10 : memref<128x512xf32, #tpu.memory_space<vmem>>)
    %c1_i32_8 = arith.constant 1 : i32
    %18 = tpu.memref_slice %arg13[%c1_i32_8] : memref<3x!tpu.dma_semaphore, #tpu.memory_space<semaphore_mem>> -> memref<1x!tpu.dma_semaphore, #tpu.memory_space<semaphore_mem>>
    %19 = tpu.memref_squeeze %18 : memref<1x!tpu.dma_semaphore, #tpu.memory_space<semaphore_mem>> -> memref<!tpu.dma_semaphore, #tpu.memory_space<semaphore_mem>>
    tpu.wait_dma2 semaphore(%19 : memref<!tpu.dma_semaphore, #tpu.memory_space<semaphore_mem>>) src(%arg7 : memref<128x512xf32, #tpu.memory_space<any>>) dst(%arg11 : memref<128x512xf32, #tpu.memory_space<vmem>>)
    %c2_i32_9 = arith.constant 2 : i32
    %20 = tpu.memref_slice %arg13[%c2_i32_9] : memref<3x!tpu.dma_semaphore, #tpu.memory_space<semaphore_mem>> -> memref<1x!tpu.dma_semaphore, #tpu.memory_space<semaphore_mem>>
    %21 = tpu.memref_squeeze %20 : memref<1x!tpu.dma_semaphore, #tpu.memory_space<semaphore_mem>> -> memref<!tpu.dma_semaphore, #tpu.memory_space<semaphore_mem>>
    tpu.wait_dma2 semaphore(%21 : memref<!tpu.dma_semaphore, #tpu.memory_space<semaphore_mem>>) src(%arg8 : memref<128x512xf32, #tpu.memory_space<any>>) dst(%arg12 : memref<128x512xf32, #tpu.memory_space<vmem>>)
    %cst_10 = arith.constant 0.000000e+00 : f32
    %22 = vector.broadcast %cst_10 : f32 to vector<2x128xf32>
    %c0_11 = arith.constant 0 : index
    %c0_12 = arith.constant 0 : index
    %23 = vector.load %arg11[%c0_11, %c0_12] : memref<128x512xf32, #tpu.memory_space<vmem>>, vector<128x512xf32>
    %cst_13 = arith.constant dense<0.000000e+00> : vector<2x512xf32>
    %24 = tpu.matmul %22, %23, %cst_13 {dimension_numbers = #tpu.dot_dimension_numbers<[1], [0], [0], [1], [0, 0, 1, 1], [], []>} : vector<2x128xf32>, vector<128x512xf32>, vector<2x512xf32> -> vector<2x512xf32>
    %25 = vector.extract_strided_slice %12 {offsets = [0, 0], sizes = [2, 512], strides = [1, 1]} : vector<16x512xf32> to vector<2x512xf32>
    %c0_14 = arith.constant 0 : index
    %c0_15 = arith.constant 0 : index
    %26 = vector.load %arg10[%c0_14, %c0_15] : memref<128x512xf32, #tpu.memory_space<vmem>>, vector<128x512xf32>
    %cst_16 = arith.constant dense<0.000000e+00> : vector<2x512xf32>
    %27 = tpu.matmul %22, %26, %cst_16 {dimension_numbers = #tpu.dot_dimension_numbers<[1], [0], [0], [1], [0, 0, 1, 1], [], []>} : vector<2x128xf32>, vector<128x512xf32>, vector<2x512xf32> -> vector<2x512xf32>
    %28 = arith.addf %25, %27 : vector<2x512xf32>
    %29 = vector.extract_strided_slice %28 {offsets = [0, 0], sizes = [2, 384], strides = [1, 1]} : vector<2x512xf32> to vector<2x384xf32>
    %cst_17 = arith.constant 5.000000e-01 : f32
    %30 = vector.broadcast %cst_17 : f32 to vector<2x384xf32>
    %31 = arith.mulf %30, %29 : vector<2x384xf32>
    %32 = math.tanh %31 : vector<2x384xf32>
    %cst_18 = arith.constant 5.000000e-01 : f32
    %33 = vector.broadcast %cst_18 : f32 to vector<2x384xf32>
    %34 = arith.mulf %33, %32 : vector<2x384xf32>
    %cst_19 = arith.constant 5.000000e-01 : f32
    %35 = vector.broadcast %cst_19 : f32 to vector<2x384xf32>
    %36 = arith.addf %34, %35 : vector<2x384xf32>
    %37 = vector.extract_strided_slice %36 {offsets = [0, 0], sizes = [2, 128], strides = [1, 1]} : vector<2x384xf32> to vector<2x128xf32>
    %38 = vector.extract_strided_slice %36 {offsets = [0, 128], sizes = [2, 128], strides = [1, 1]} : vector<2x384xf32> to vector<2x128xf32>
    %39 = vector.extract_strided_slice %36 {offsets = [0, 256], sizes = [2, 128], strides = [1, 1]} : vector<2x384xf32> to vector<2x128xf32>
    %40 = vector.extract_strided_slice %28 {offsets = [0, 384], sizes = [2, 128], strides = [1, 1]} : vector<2x512xf32> to vector<2x128xf32>
    %41 = math.tanh %40 : vector<2x128xf32>
    %42 = arith.mulf %38, %22 : vector<2x128xf32>
    %43 = arith.mulf %37, %41 : vector<2x128xf32>
    %44 = arith.addf %42, %43 : vector<2x128xf32>
    %45 = math.tanh %44 : vector<2x128xf32>
    %46 = arith.mulf %39, %45 : vector<2x128xf32>
    %c0_20 = arith.constant 0 : index
    %c0_21 = arith.constant 0 : index
    %47 = vector.load %arg12[%c0_20, %c0_21] : memref<128x512xf32, #tpu.memory_space<vmem>>, vector<128x512xf32>
    %cst_22 = arith.constant dense<0.000000e+00> : vector<2x512xf32>
    %48 = tpu.matmul %46, %47, %cst_22 {dimension_numbers = #tpu.dot_dimension_numbers<[1], [0], [0], [1], [0, 0, 1, 1], [], []>} : vector<2x128xf32>, vector<128x512xf32>, vector<2x512xf32> -> vector<2x512xf32>
    %49 = arith.addf %24, %48 : vector<2x512xf32>
    %50 = arith.addf %49, %15 : vector<2x512xf32>
    %51 = vector.extract_strided_slice %50 {offsets = [0, 0], sizes = [2, 384], strides = [1, 1]} : vector<2x512xf32> to vector<2x384xf32>
    %cst_23 = arith.constant 5.000000e-01 : f32
    %52 = vector.broadcast %cst_23 : f32 to vector<2x384xf32>
    %53 = arith.mulf %52, %51 : vector<2x384xf32>
    %54 = math.tanh %53 : vector<2x384xf32>
    %cst_24 = arith.constant 5.000000e-01 : f32
    %55 = vector.broadcast %cst_24 : f32 to vector<2x384xf32>
    %56 = arith.mulf %55, %54 : vector<2x384xf32>
    %cst_25 = arith.constant 5.000000e-01 : f32
    %57 = vector.broadcast %cst_25 : f32 to vector<2x384xf32>
    %58 = arith.addf %56, %57 : vector<2x384xf32>
    %59 = vector.extract_strided_slice %58 {offsets = [0, 0], sizes = [2, 128], strides = [1, 1]} : vector<2x384xf32> to vector<2x128xf32>
    %60 = vector.extract_strided_slice %58 {offsets = [0, 128], sizes = [2, 128], strides = [1, 1]} : vector<2x384xf32> to vector<2x128xf32>
    %61 = vector.extract_strided_slice %58 {offsets = [0, 256], sizes = [2, 128], strides = [1, 1]} : vector<2x384xf32> to vector<2x128xf32>
    %62 = vector.extract_strided_slice %50 {offsets = [0, 384], sizes = [2, 128], strides = [1, 1]} : vector<2x512xf32> to vector<2x128xf32>
    %63 = math.tanh %62 : vector<2x128xf32>
    %64 = arith.mulf %60, %22 : vector<2x128xf32>
    %65 = arith.mulf %59, %63 : vector<2x128xf32>
    %66 = arith.addf %64, %65 : vector<2x128xf32>
    %67 = math.tanh %66 : vector<2x128xf32>
    %68 = arith.mulf %61, %67 : vector<2x128xf32>
    %c0_26 = arith.constant 0 : index
    %c0_27 = arith.constant 0 : index
    %69 = vector.load %arg11[%c0_26, %c0_27] : memref<128x512xf32, #tpu.memory_space<vmem>>, vector<128x512xf32>
    %cst_28 = arith.constant dense<0.000000e+00> : vector<2x512xf32>
    %70 = tpu.matmul %68, %69, %cst_28 {dimension_numbers = #tpu.dot_dimension_numbers<[1], [0], [0], [1], [0, 0, 1, 1], [], []>} : vector<2x128xf32>, vector<128x512xf32>, vector<2x512xf32> -> vector<2x512xf32>
    %71 = vector.extract_strided_slice %12 {offsets = [2, 0], sizes = [2, 512], strides = [1, 1]} : vector<16x512xf32> to vector<2x512xf32>
    %c0_29 = arith.constant 0 : index
    %c0_30 = arith.constant 0 : index
    %72 = vector.load %arg10[%c0_29, %c0_30] : memref<128x512xf32, #tpu.memory_space<vmem>>, vector<128x512xf32>
    %cst_31 = arith.constant dense<0.000000e+00> : vector<2x512xf32>
    %73 = tpu.matmul %46, %72, %cst_31 {dimension_numbers = #tpu.dot_dimension_numbers<[1], [0], [0], [1], [0, 0, 1, 1], [], []>} : vector<2x128xf32>, vector<128x512xf32>, vector<2x512xf32> -> vector<2x512xf32>
    %74 = arith.addf %71, %73 : vector<2x512xf32>
    %75 = vector.extract_strided_slice %74 {offsets = [0, 0], sizes = [2, 384], strides = [1, 1]} : vector<2x512xf32> to vector<2x384xf32>
    %cst_32 = arith.constant 5.000000e-01 : f32
    %76 = vector.broadcast %cst_32 : f32 to vector<2x384xf32>
    %77 = arith.mulf %76, %75 : vector<2x384xf32>
    %78 = math.tanh %77 : vector<2x384xf32>
    %cst_33 = arith.constant 5.000000e-01 : f32
    %79 = vector.broadcast %cst_33 : f32 to vector<2x384xf32>
    %80 = arith.mulf %79, %78 : vector<2x384xf32>
    %cst_34 = arith.constant 5.000000e-01 : f32
    %81 = vector.broadcast %cst_34 : f32 to vector<2x384xf32>
    %82 = arith.addf %80, %81 : vector<2x384xf32>
    %83 = vector.extract_strided_slice %82 {offsets = [0, 0], sizes = [2, 128], strides = [1, 1]} : vector<2x384xf32> to vector<2x128xf32>
    %84 = vector.extract_strided_slice %82 {offsets = [0, 128], sizes = [2, 128], strides = [1, 1]} : vector<2x384xf32> to vector<2x128xf32>
    %85 = vector.extract_strided_slice %82 {offsets = [0, 256], sizes = [2, 128], strides = [1, 1]} : vector<2x384xf32> to vector<2x128xf32>
    %86 = vector.extract_strided_slice %74 {offsets = [0, 384], sizes = [2, 128], strides = [1, 1]} : vector<2x512xf32> to vector<2x128xf32>
    %87 = math.tanh %86 : vector<2x128xf32>
    %88 = arith.mulf %84, %44 : vector<2x128xf32>
    %89 = arith.mulf %83, %87 : vector<2x128xf32>
    %90 = arith.addf %88, %89 : vector<2x128xf32>
    %91 = math.tanh %90 : vector<2x128xf32>
    %92 = arith.mulf %85, %91 : vector<2x128xf32>
    %c0_35 = arith.constant 0 : index
    %c0_36 = arith.constant 0 : index
    %93 = vector.load %arg12[%c0_35, %c0_36] : memref<128x512xf32, #tpu.memory_space<vmem>>, vector<128x512xf32>
    %cst_37 = arith.constant dense<0.000000e+00> : vector<2x512xf32>
    %94 = tpu.matmul %92, %93, %cst_37 {dimension_numbers = #tpu.dot_dimension_numbers<[1], [0], [0], [1], [0, 0, 1, 1], [], []>} : vector<2x128xf32>, vector<128x512xf32>, vector<2x512xf32> -> vector<2x512xf32>
    %95 = arith.addf %70, %94 : vector<2x512xf32>
    %96 = arith.addf %95, %15 : vector<2x512xf32>
    %97 = vector.extract_strided_slice %96 {offsets = [0, 0], sizes = [2, 384], strides = [1, 1]} : vector<2x512xf32> to vector<2x384xf32>
    %cst_38 = arith.constant 5.000000e-01 : f32
    %98 = vector.broadcast %cst_38 : f32 to vector<2x384xf32>
    %99 = arith.mulf %98, %97 : vector<2x384xf32>
    %100 = math.tanh %99 : vector<2x384xf32>
    %cst_39 = arith.constant 5.000000e-01 : f32
    %101 = vector.broadcast %cst_39 : f32 to vector<2x384xf32>
    %102 = arith.mulf %101, %100 : vector<2x384xf32>
    %cst_40 = arith.constant 5.000000e-01 : f32
    %103 = vector.broadcast %cst_40 : f32 to vector<2x384xf32>
    %104 = arith.addf %102, %103 : vector<2x384xf32>
    %105 = vector.extract_strided_slice %104 {offsets = [0, 0], sizes = [2, 128], strides = [1, 1]} : vector<2x384xf32> to vector<2x128xf32>
    %106 = vector.extract_strided_slice %104 {offsets = [0, 128], sizes = [2, 128], strides = [1, 1]} : vector<2x384xf32> to vector<2x128xf32>
    %107 = vector.extract_strided_slice %104 {offsets = [0, 256], sizes = [2, 128], strides = [1, 1]} : vector<2x384xf32> to vector<2x128xf32>
    %108 = vector.extract_strided_slice %96 {offsets = [0, 384], sizes = [2, 128], strides = [1, 1]} : vector<2x512xf32> to vector<2x128xf32>
    %109 = math.tanh %108 : vector<2x128xf32>
    %110 = arith.mulf %106, %66 : vector<2x128xf32>
    %111 = arith.mulf %105, %109 : vector<2x128xf32>
    %112 = arith.addf %110, %111 : vector<2x128xf32>
    %113 = math.tanh %112 : vector<2x128xf32>
    %114 = arith.mulf %107, %113 : vector<2x128xf32>
    %c0_41 = arith.constant 0 : index
    %c0_42 = arith.constant 0 : index
    %115 = vector.load %arg11[%c0_41, %c0_42] : memref<128x512xf32, #tpu.memory_space<vmem>>, vector<128x512xf32>
    %cst_43 = arith.constant dense<0.000000e+00> : vector<2x512xf32>
    %116 = tpu.matmul %114, %115, %cst_43 {dimension_numbers = #tpu.dot_dimension_numbers<[1], [0], [0], [1], [0, 0, 1, 1], [], []>} : vector<2x128xf32>, vector<128x512xf32>, vector<2x512xf32> -> vector<2x512xf32>
    %117 = vector.extract_strided_slice %12 {offsets = [4, 0], sizes = [2, 512], strides = [1, 1]} : vector<16x512xf32> to vector<2x512xf32>
    %c0_44 = arith.constant 0 : index
    %c0_45 = arith.constant 0 : index
    %118 = vector.load %arg10[%c0_44, %c0_45] : memref<128x512xf32, #tpu.memory_space<vmem>>, vector<128x512xf32>
    %cst_46 = arith.constant dense<0.000000e+00> : vector<2x512xf32>
    %119 = tpu.matmul %92, %118, %cst_46 {dimension_numbers = #tpu.dot_dimension_numbers<[1], [0], [0], [1], [0, 0, 1, 1], [], []>} : vector<2x128xf32>, vector<128x512xf32>, vector<2x512xf32> -> vector<2x512xf32>
    %120 = arith.addf %117, %119 : vector<2x512xf32>
    %121 = vector.extract_strided_slice %120 {offsets = [0, 0], sizes = [2, 384], strides = [1, 1]} : vector<2x512xf32> to vector<2x384xf32>
    %cst_47 = arith.constant 5.000000e-01 : f32
    %122 = vector.broadcast %cst_47 : f32 to vector<2x384xf32>
    %123 = arith.mulf %122, %121 : vector<2x384xf32>
    %124 = math.tanh %123 : vector<2x384xf32>
    %cst_48 = arith.constant 5.000000e-01 : f32
    %125 = vector.broadcast %cst_48 : f32 to vector<2x384xf32>
    %126 = arith.mulf %125, %124 : vector<2x384xf32>
    %cst_49 = arith.constant 5.000000e-01 : f32
    %127 = vector.broadcast %cst_49 : f32 to vector<2x384xf32>
    %128 = arith.addf %126, %127 : vector<2x384xf32>
    %129 = vector.extract_strided_slice %128 {offsets = [0, 0], sizes = [2, 128], strides = [1, 1]} : vector<2x384xf32> to vector<2x128xf32>
    %130 = vector.extract_strided_slice %128 {offsets = [0, 128], sizes = [2, 128], strides = [1, 1]} : vector<2x384xf32> to vector<2x128xf32>
    %131 = vector.extract_strided_slice %128 {offsets = [0, 256], sizes = [2, 128], strides = [1, 1]} : vector<2x384xf32> to vector<2x128xf32>
    %132 = vector.extract_strided_slice %120 {offsets = [0, 384], sizes = [2, 128], strides = [1, 1]} : vector<2x512xf32> to vector<2x128xf32>
    %133 = math.tanh %132 : vector<2x128xf32>
    %134 = arith.mulf %130, %90 : vector<2x128xf32>
    %135 = arith.mulf %129, %133 : vector<2x128xf32>
    %136 = arith.addf %134, %135 : vector<2x128xf32>
    %137 = math.tanh %136 : vector<2x128xf32>
    %138 = arith.mulf %131, %137 : vector<2x128xf32>
    %c0_50 = arith.constant 0 : index
    %c0_51 = arith.constant 0 : index
    %139 = vector.load %arg12[%c0_50, %c0_51] : memref<128x512xf32, #tpu.memory_space<vmem>>, vector<128x512xf32>
    %cst_52 = arith.constant dense<0.000000e+00> : vector<2x512xf32>
    %140 = tpu.matmul %138, %139, %cst_52 {dimension_numbers = #tpu.dot_dimension_numbers<[1], [0], [0], [1], [0, 0, 1, 1], [], []>} : vector<2x128xf32>, vector<128x512xf32>, vector<2x512xf32> -> vector<2x512xf32>
    %141 = arith.addf %116, %140 : vector<2x512xf32>
    %142 = arith.addf %141, %15 : vector<2x512xf32>
    %143 = vector.extract_strided_slice %142 {offsets = [0, 0], sizes = [2, 384], strides = [1, 1]} : vector<2x512xf32> to vector<2x384xf32>
    %cst_53 = arith.constant 5.000000e-01 : f32
    %144 = vector.broadcast %cst_53 : f32 to vector<2x384xf32>
    %145 = arith.mulf %144, %143 : vector<2x384xf32>
    %146 = math.tanh %145 : vector<2x384xf32>
    %cst_54 = arith.constant 5.000000e-01 : f32
    %147 = vector.broadcast %cst_54 : f32 to vector<2x384xf32>
    %148 = arith.mulf %147, %146 : vector<2x384xf32>
    %cst_55 = arith.constant 5.000000e-01 : f32
    %149 = vector.broadcast %cst_55 : f32 to vector<2x384xf32>
    %150 = arith.addf %148, %149 : vector<2x384xf32>
    %151 = vector.extract_strided_slice %150 {offsets = [0, 0], sizes = [2, 128], strides = [1, 1]} : vector<2x384xf32> to vector<2x128xf32>
    %152 = vector.extract_strided_slice %150 {offsets = [0, 128], sizes = [2, 128], strides = [1, 1]} : vector<2x384xf32> to vector<2x128xf32>
    %153 = vector.extract_strided_slice %150 {offsets = [0, 256], sizes = [2, 128], strides = [1, 1]} : vector<2x384xf32> to vector<2x128xf32>
    %154 = vector.extract_strided_slice %142 {offsets = [0, 384], sizes = [2, 128], strides = [1, 1]} : vector<2x512xf32> to vector<2x128xf32>
    %155 = math.tanh %154 : vector<2x128xf32>
    %156 = arith.mulf %152, %112 : vector<2x128xf32>
    %157 = arith.mulf %151, %155 : vector<2x128xf32>
    %158 = arith.addf %156, %157 : vector<2x128xf32>
    %159 = math.tanh %158 : vector<2x128xf32>
    %160 = arith.mulf %153, %159 : vector<2x128xf32>
    %c0_56 = arith.constant 0 : index
    %c0_57 = arith.constant 0 : index
    %161 = vector.load %arg11[%c0_56, %c0_57] : memref<128x512xf32, #tpu.memory_space<vmem>>, vector<128x512xf32>
    %cst_58 = arith.constant dense<0.000000e+00> : vector<2x512xf32>
    %162 = tpu.matmul %160, %161, %cst_58 {dimension_numbers = #tpu.dot_dimension_numbers<[1], [0], [0], [1], [0, 0, 1, 1], [], []>} : vector<2x128xf32>, vector<128x512xf32>, vector<2x512xf32> -> vector<2x512xf32>
    %163 = vector.extract_strided_slice %12 {offsets = [6, 0], sizes = [2, 512], strides = [1, 1]} : vector<16x512xf32> to vector<2x512xf32>
    %c0_59 = arith.constant 0 : index
    %c0_60 = arith.constant 0 : index
    %164 = vector.load %arg10[%c0_59, %c0_60] : memref<128x512xf32, #tpu.memory_space<vmem>>, vector<128x512xf32>
    %cst_61 = arith.constant dense<0.000000e+00> : vector<2x512xf32>
    %165 = tpu.matmul %138, %164, %cst_61 {dimension_numbers = #tpu.dot_dimension_numbers<[1], [0], [0], [1], [0, 0, 1, 1], [], []>} : vector<2x128xf32>, vector<128x512xf32>, vector<2x512xf32> -> vector<2x512xf32>
    %166 = arith.addf %163, %165 : vector<2x512xf32>
    %167 = vector.extract_strided_slice %166 {offsets = [0, 0], sizes = [2, 384], strides = [1, 1]} : vector<2x512xf32> to vector<2x384xf32>
    %cst_62 = arith.constant 5.000000e-01 : f32
    %168 = vector.broadcast %cst_62 : f32 to vector<2x384xf32>
    %169 = arith.mulf %168, %167 : vector<2x384xf32>
    %170 = math.tanh %169 : vector<2x384xf32>
    %cst_63 = arith.constant 5.000000e-01 : f32
    %171 = vector.broadcast %cst_63 : f32 to vector<2x384xf32>
    %172 = arith.mulf %171, %170 : vector<2x384xf32>
    %cst_64 = arith.constant 5.000000e-01 : f32
    %173 = vector.broadcast %cst_64 : f32 to vector<2x384xf32>
    %174 = arith.addf %172, %173 : vector<2x384xf32>
    %175 = vector.extract_strided_slice %174 {offsets = [0, 0], sizes = [2, 128], strides = [1, 1]} : vector<2x384xf32> to vector<2x128xf32>
    %176 = vector.extract_strided_slice %174 {offsets = [0, 128], sizes = [2, 128], strides = [1, 1]} : vector<2x384xf32> to vector<2x128xf32>
    %177 = vector.extract_strided_slice %174 {offsets = [0, 256], sizes = [2, 128], strides = [1, 1]} : vector<2x384xf32> to vector<2x128xf32>
    %178 = vector.extract_strided_slice %166 {offsets = [0, 384], sizes = [2, 128], strides = [1, 1]} : vector<2x512xf32> to vector<2x128xf32>
    %179 = math.tanh %178 : vector<2x128xf32>
    %180 = arith.mulf %176, %136 : vector<2x128xf32>
    %181 = arith.mulf %175, %179 : vector<2x128xf32>
    %182 = arith.addf %180, %181 : vector<2x128xf32>
    %183 = math.tanh %182 : vector<2x128xf32>
    %184 = arith.mulf %177, %183 : vector<2x128xf32>
    %c0_65 = arith.constant 0 : index
    %c0_66 = arith.constant 0 : index
    %185 = vector.load %arg12[%c0_65, %c0_66] : memref<128x512xf32, #tpu.memory_space<vmem>>, vector<128x512xf32>
    %cst_67 = arith.constant dense<0.000000e+00> : vector<2x512xf32>
    %186 = tpu.matmul %184, %185, %cst_67 {dimension_numbers = #tpu.dot_dimension_numbers<[1], [0], [0], [1], [0, 0, 1, 1], [], []>} : vector<2x128xf32>, vector<128x512xf32>, vector<2x512xf32> -> vector<2x512xf32>
    %187 = arith.addf %162, %186 : vector<2x512xf32>
    %188 = arith.addf %187, %15 : vector<2x512xf32>
    %189 = vector.extract_strided_slice %188 {offsets = [0, 0], sizes = [2, 384], strides = [1, 1]} : vector<2x512xf32> to vector<2x384xf32>
    %cst_68 = arith.constant 5.000000e-01 : f32
    %190 = vector.broadcast %cst_68 : f32 to vector<2x384xf32>
    %191 = arith.mulf %190, %189 : vector<2x384xf32>
    %192 = math.tanh %191 : vector<2x384xf32>
    %cst_69 = arith.constant 5.000000e-01 : f32
    %193 = vector.broadcast %cst_69 : f32 to vector<2x384xf32>
    %194 = arith.mulf %193, %192 : vector<2x384xf32>
    %cst_70 = arith.constant 5.000000e-01 : f32
    %195 = vector.broadcast %cst_70 : f32 to vector<2x384xf32>
    %196 = arith.addf %194, %195 : vector<2x384xf32>
    %197 = vector.extract_strided_slice %196 {offsets = [0, 0], sizes = [2, 128], strides = [1, 1]} : vector<2x384xf32> to vector<2x128xf32>
    %198 = vector.extract_strided_slice %196 {offsets = [0, 128], sizes = [2, 128], strides = [1, 1]} : vector<2x384xf32> to vector<2x128xf32>
    %199 = vector.extract_strided_slice %196 {offsets = [0, 256], sizes = [2, 128], strides = [1, 1]} : vector<2x384xf32> to vector<2x128xf32>
    %200 = vector.extract_strided_slice %188 {offsets = [0, 384], sizes = [2, 128], strides = [1, 1]} : vector<2x512xf32> to vector<2x128xf32>
    %201 = math.tanh %200 : vector<2x128xf32>
    %202 = arith.mulf %198, %158 : vector<2x128xf32>
    %203 = arith.mulf %197, %201 : vector<2x128xf32>
    %204 = arith.addf %202, %203 : vector<2x128xf32>
    %205 = math.tanh %204 : vector<2x128xf32>
    %206 = arith.mulf %199, %205 : vector<2x128xf32>
    %c0_71 = arith.constant 0 : index
    %c0_72 = arith.constant 0 : index
    %207 = vector.load %arg11[%c0_71, %c0_72] : memref<128x512xf32, #tpu.memory_space<vmem>>, vector<128x512xf32>
    %cst_73 = arith.constant dense<0.000000e+00> : vector<2x512xf32>
    %208 = tpu.matmul %206, %207, %cst_73 {dimension_numbers = #tpu.dot_dimension_numbers<[1], [0], [0], [1], [0, 0, 1, 1], [], []>} : vector<2x128xf32>, vector<128x512xf32>, vector<2x512xf32> -> vector<2x512xf32>
    %209 = vector.extract_strided_slice %12 {offsets = [8, 0], sizes = [2, 512], strides = [1, 1]} : vector<16x512xf32> to vector<2x512xf32>
    %c0_74 = arith.constant 0 : index
    %c0_75 = arith.constant 0 : index
    %210 = vector.load %arg10[%c0_74, %c0_75] : memref<128x512xf32, #tpu.memory_space<vmem>>, vector<128x512xf32>
    %cst_76 = arith.constant dense<0.000000e+00> : vector<2x512xf32>
    %211 = tpu.matmul %184, %210, %cst_76 {dimension_numbers = #tpu.dot_dimension_numbers<[1], [0], [0], [1], [0, 0, 1, 1], [], []>} : vector<2x128xf32>, vector<128x512xf32>, vector<2x512xf32> -> vector<2x512xf32>
    %212 = arith.addf %209, %211 : vector<2x512xf32>
    %213 = vector.extract_strided_slice %212 {offsets = [0, 0], sizes = [2, 384], strides = [1, 1]} : vector<2x512xf32> to vector<2x384xf32>
    %cst_77 = arith.constant 5.000000e-01 : f32
    %214 = vector.broadcast %cst_77 : f32 to vector<2x384xf32>
    %215 = arith.mulf %214, %213 : vector<2x384xf32>
    %216 = math.tanh %215 : vector<2x384xf32>
    %cst_78 = arith.constant 5.000000e-01 : f32
    %217 = vector.broadcast %cst_78 : f32 to vector<2x384xf32>
    %218 = arith.mulf %217, %216 : vector<2x384xf32>
    %cst_79 = arith.constant 5.000000e-01 : f32
    %219 = vector.broadcast %cst_79 : f32 to vector<2x384xf32>
    %220 = arith.addf %218, %219 : vector<2x384xf32>
    %221 = vector.extract_strided_slice %220 {offsets = [0, 0], sizes = [2, 128], strides = [1, 1]} : vector<2x384xf32> to vector<2x128xf32>
    %222 = vector.extract_strided_slice %220 {offsets = [0, 128], sizes = [2, 128], strides = [1, 1]} : vector<2x384xf32> to vector<2x128xf32>
    %223 = vector.extract_strided_slice %220 {offsets = [0, 256], sizes = [2, 128], strides = [1, 1]} : vector<2x384xf32> to vector<2x128xf32>
    %224 = vector.extract_strided_slice %212 {offsets = [0, 384], sizes = [2, 128], strides = [1, 1]} : vector<2x512xf32> to vector<2x128xf32>
    %225 = math.tanh %224 : vector<2x128xf32>
    %226 = arith.mulf %222, %182 : vector<2x128xf32>
    %227 = arith.mulf %221, %225 : vector<2x128xf32>
    %228 = arith.addf %226, %227 : vector<2x128xf32>
    %229 = math.tanh %228 : vector<2x128xf32>
    %230 = arith.mulf %223, %229 : vector<2x128xf32>
    %c0_80 = arith.constant 0 : index
    %c0_81 = arith.constant 0 : index
    %231 = vector.load %arg12[%c0_80, %c0_81] : memref<128x512xf32, #tpu.memory_space<vmem>>, vector<128x512xf32>
    %cst_82 = arith.constant dense<0.000000e+00> : vector<2x512xf32>
    %232 = tpu.matmul %230, %231, %cst_82 {dimension_numbers = #tpu.dot_dimension_numbers<[1], [0], [0], [1], [0, 0, 1, 1], [], []>} : vector<2x128xf32>, vector<128x512xf32>, vector<2x512xf32> -> vector<2x512xf32>
    %233 = arith.addf %208, %232 : vector<2x512xf32>
    %234 = arith.addf %233, %15 : vector<2x512xf32>
    %235 = vector.extract_strided_slice %234 {offsets = [0, 0], sizes = [2, 384], strides = [1, 1]} : vector<2x512xf32> to vector<2x384xf32>
    %cst_83 = arith.constant 5.000000e-01 : f32
    %236 = vector.broadcast %cst_83 : f32 to vector<2x384xf32>
    %237 = arith.mulf %236, %235 : vector<2x384xf32>
    %238 = math.tanh %237 : vector<2x384xf32>
    %cst_84 = arith.constant 5.000000e-01 : f32
    %239 = vector.broadcast %cst_84 : f32 to vector<2x384xf32>
    %240 = arith.mulf %239, %238 : vector<2x384xf32>
    %cst_85 = arith.constant 5.000000e-01 : f32
    %241 = vector.broadcast %cst_85 : f32 to vector<2x384xf32>
    %242 = arith.addf %240, %241 : vector<2x384xf32>
    %243 = vector.extract_strided_slice %242 {offsets = [0, 0], sizes = [2, 128], strides = [1, 1]} : vector<2x384xf32> to vector<2x128xf32>
    %244 = vector.extract_strided_slice %242 {offsets = [0, 128], sizes = [2, 128], strides = [1, 1]} : vector<2x384xf32> to vector<2x128xf32>
    %245 = vector.extract_strided_slice %242 {offsets = [0, 256], sizes = [2, 128], strides = [1, 1]} : vector<2x384xf32> to vector<2x128xf32>
    %246 = vector.extract_strided_slice %234 {offsets = [0, 384], sizes = [2, 128], strides = [1, 1]} : vector<2x512xf32> to vector<2x128xf32>
    %247 = math.tanh %246 : vector<2x128xf32>
    %248 = arith.mulf %244, %204 : vector<2x128xf32>
    %249 = arith.mulf %243, %247 : vector<2x128xf32>
    %250 = arith.addf %248, %249 : vector<2x128xf32>
    %251 = math.tanh %250 : vector<2x128xf32>
    %252 = arith.mulf %245, %251 : vector<2x128xf32>
    %c0_86 = arith.constant 0 : index
    %c0_87 = arith.constant 0 : index
    %253 = vector.load %arg11[%c0_86, %c0_87] : memref<128x512xf32, #tpu.memory_space<vmem>>, vector<128x512xf32>
    %cst_88 = arith.constant dense<0.000000e+00> : vector<2x512xf32>
    %254 = tpu.matmul %252, %253, %cst_88 {dimension_numbers = #tpu.dot_dimension_numbers<[1], [0], [0], [1], [0, 0, 1, 1], [], []>} : vector<2x128xf32>, vector<128x512xf32>, vector<2x512xf32> -> vector<2x512xf32>
    %255 = vector.extract_strided_slice %12 {offsets = [10, 0], sizes = [2, 512], strides = [1, 1]} : vector<16x512xf32> to vector<2x512xf32>
    %c0_89 = arith.constant 0 : index
    %c0_90 = arith.constant 0 : index
    %256 = vector.load %arg10[%c0_89, %c0_90] : memref<128x512xf32, #tpu.memory_space<vmem>>, vector<128x512xf32>
    %cst_91 = arith.constant dense<0.000000e+00> : vector<2x512xf32>
    %257 = tpu.matmul %230, %256, %cst_91 {dimension_numbers = #tpu.dot_dimension_numbers<[1], [0], [0], [1], [0, 0, 1, 1], [], []>} : vector<2x128xf32>, vector<128x512xf32>, vector<2x512xf32> -> vector<2x512xf32>
    %258 = arith.addf %255, %257 : vector<2x512xf32>
    %259 = vector.extract_strided_slice %258 {offsets = [0, 0], sizes = [2, 384], strides = [1, 1]} : vector<2x512xf32> to vector<2x384xf32>
    %cst_92 = arith.constant 5.000000e-01 : f32
    %260 = vector.broadcast %cst_92 : f32 to vector<2x384xf32>
    %261 = arith.mulf %260, %259 : vector<2x384xf32>
    %262 = math.tanh %261 : vector<2x384xf32>
    %cst_93 = arith.constant 5.000000e-01 : f32
    %263 = vector.broadcast %cst_93 : f32 to vector<2x384xf32>
    %264 = arith.mulf %263, %262 : vector<2x384xf32>
    %cst_94 = arith.constant 5.000000e-01 : f32
    %265 = vector.broadcast %cst_94 : f32 to vector<2x384xf32>
    %266 = arith.addf %264, %265 : vector<2x384xf32>
    %267 = vector.extract_strided_slice %266 {offsets = [0, 0], sizes = [2, 128], strides = [1, 1]} : vector<2x384xf32> to vector<2x128xf32>
    %268 = vector.extract_strided_slice %266 {offsets = [0, 128], sizes = [2, 128], strides = [1, 1]} : vector<2x384xf32> to vector<2x128xf32>
    %269 = vector.extract_strided_slice %266 {offsets = [0, 256], sizes = [2, 128], strides = [1, 1]} : vector<2x384xf32> to vector<2x128xf32>
    %270 = vector.extract_strided_slice %258 {offsets = [0, 384], sizes = [2, 128], strides = [1, 1]} : vector<2x512xf32> to vector<2x128xf32>
    %271 = math.tanh %270 : vector<2x128xf32>
    %272 = arith.mulf %268, %228 : vector<2x128xf32>
    %273 = arith.mulf %267, %271 : vector<2x128xf32>
    %274 = arith.addf %272, %273 : vector<2x128xf32>
    %275 = math.tanh %274 : vector<2x128xf32>
    %276 = arith.mulf %269, %275 : vector<2x128xf32>
    %c0_95 = arith.constant 0 : index
    %c0_96 = arith.constant 0 : index
    %277 = vector.load %arg12[%c0_95, %c0_96] : memref<128x512xf32, #tpu.memory_space<vmem>>, vector<128x512xf32>
    %cst_97 = arith.constant dense<0.000000e+00> : vector<2x512xf32>
    %278 = tpu.matmul %276, %277, %cst_97 {dimension_numbers = #tpu.dot_dimension_numbers<[1], [0], [0], [1], [0, 0, 1, 1], [], []>} : vector<2x128xf32>, vector<128x512xf32>, vector<2x512xf32> -> vector<2x512xf32>
    %279 = arith.addf %254, %278 : vector<2x512xf32>
    %280 = arith.addf %279, %15 : vector<2x512xf32>
    %281 = vector.extract_strided_slice %280 {offsets = [0, 0], sizes = [2, 384], strides = [1, 1]} : vector<2x512xf32> to vector<2x384xf32>
    %cst_98 = arith.constant 5.000000e-01 : f32
    %282 = vector.broadcast %cst_98 : f32 to vector<2x384xf32>
    %283 = arith.mulf %282, %281 : vector<2x384xf32>
    %284 = math.tanh %283 : vector<2x384xf32>
    %cst_99 = arith.constant 5.000000e-01 : f32
    %285 = vector.broadcast %cst_99 : f32 to vector<2x384xf32>
    %286 = arith.mulf %285, %284 : vector<2x384xf32>
    %cst_100 = arith.constant 5.000000e-01 : f32
    %287 = vector.broadcast %cst_100 : f32 to vector<2x384xf32>
    %288 = arith.addf %286, %287 : vector<2x384xf32>
    %289 = vector.extract_strided_slice %288 {offsets = [0, 0], sizes = [2, 128], strides = [1, 1]} : vector<2x384xf32> to vector<2x128xf32>
    %290 = vector.extract_strided_slice %288 {offsets = [0, 128], sizes = [2, 128], strides = [1, 1]} : vector<2x384xf32> to vector<2x128xf32>
    %291 = vector.extract_strided_slice %288 {offsets = [0, 256], sizes = [2, 128], strides = [1, 1]} : vector<2x384xf32> to vector<2x128xf32>
    %292 = vector.extract_strided_slice %280 {offsets = [0, 384], sizes = [2, 128], strides = [1, 1]} : vector<2x512xf32> to vector<2x128xf32>
    %293 = math.tanh %292 : vector<2x128xf32>
    %294 = arith.mulf %290, %250 : vector<2x128xf32>
    %295 = arith.mulf %289, %293 : vector<2x128xf32>
    %296 = arith.addf %294, %295 : vector<2x128xf32>
    %297 = math.tanh %296 : vector<2x128xf32>
    %298 = arith.mulf %291, %297 : vector<2x128xf32>
    %c0_101 = arith.constant 0 : index
    %c0_102 = arith.constant 0 : index
    %299 = vector.load %arg11[%c0_101, %c0_102] : memref<128x512xf32, #tpu.memory_space<vmem>>, vector<128x512xf32>
    %cst_103 = arith.constant dense<0.000000e+00> : vector<2x512xf32>
    %300 = tpu.matmul %298, %299, %cst_103 {dimension_numbers = #tpu.dot_dimension_numbers<[1], [0], [0], [1], [0, 0, 1, 1], [], []>} : vector<2x128xf32>, vector<128x512xf32>, vector<2x512xf32> -> vector<2x512xf32>
    %301 = vector.extract_strided_slice %12 {offsets = [12, 0], sizes = [2, 512], strides = [1, 1]} : vector<16x512xf32> to vector<2x512xf32>
    %c0_104 = arith.constant 0 : index
    %c0_105 = arith.constant 0 : index
    %302 = vector.load %arg10[%c0_104, %c0_105] : memref<128x512xf32, #tpu.memory_space<vmem>>, vector<128x512xf32>
    %cst_106 = arith.constant dense<0.000000e+00> : vector<2x512xf32>
    %303 = tpu.matmul %276, %302, %cst_106 {dimension_numbers = #tpu.dot_dimension_numbers<[1], [0], [0], [1], [0, 0, 1, 1], [], []>} : vector<2x128xf32>, vector<128x512xf32>, vector<2x512xf32> -> vector<2x512xf32>
    %304 = arith.addf %301, %303 : vector<2x512xf32>
    %305 = vector.extract_strided_slice %304 {offsets = [0, 0], sizes = [2, 384], strides = [1, 1]} : vector<2x512xf32> to vector<2x384xf32>
    %cst_107 = arith.constant 5.000000e-01 : f32
    %306 = vector.broadcast %cst_107 : f32 to vector<2x384xf32>
    %307 = arith.mulf %306, %305 : vector<2x384xf32>
    %308 = math.tanh %307 : vector<2x384xf32>
    %cst_108 = arith.constant 5.000000e-01 : f32
    %309 = vector.broadcast %cst_108 : f32 to vector<2x384xf32>
    %310 = arith.mulf %309, %308 : vector<2x384xf32>
    %cst_109 = arith.constant 5.000000e-01 : f32
    %311 = vector.broadcast %cst_109 : f32 to vector<2x384xf32>
    %312 = arith.addf %310, %311 : vector<2x384xf32>
    %313 = vector.extract_strided_slice %312 {offsets = [0, 0], sizes = [2, 128], strides = [1, 1]} : vector<2x384xf32> to vector<2x128xf32>
    %314 = vector.extract_strided_slice %312 {offsets = [0, 128], sizes = [2, 128], strides = [1, 1]} : vector<2x384xf32> to vector<2x128xf32>
    %315 = vector.extract_strided_slice %312 {offsets = [0, 256], sizes = [2, 128], strides = [1, 1]} : vector<2x384xf32> to vector<2x128xf32>
    %316 = vector.extract_strided_slice %304 {offsets = [0, 384], sizes = [2, 128], strides = [1, 1]} : vector<2x512xf32> to vector<2x128xf32>
    %317 = math.tanh %316 : vector<2x128xf32>
    %318 = arith.mulf %314, %274 : vector<2x128xf32>
    %319 = arith.mulf %313, %317 : vector<2x128xf32>
    %320 = arith.addf %318, %319 : vector<2x128xf32>
    %321 = math.tanh %320 : vector<2x128xf32>
    %322 = arith.mulf %315, %321 : vector<2x128xf32>
    %c0_110 = arith.constant 0 : index
    %c0_111 = arith.constant 0 : index
    %323 = vector.load %arg12[%c0_110, %c0_111] : memref<128x512xf32, #tpu.memory_space<vmem>>, vector<128x512xf32>
    %cst_112 = arith.constant dense<0.000000e+00> : vector<2x512xf32>
    %324 = tpu.matmul %322, %323, %cst_112 {dimension_numbers = #tpu.dot_dimension_numbers<[1], [0], [0], [1], [0, 0, 1, 1], [], []>} : vector<2x128xf32>, vector<128x512xf32>, vector<2x512xf32> -> vector<2x512xf32>
    %325 = arith.addf %300, %324 : vector<2x512xf32>
    %326 = arith.addf %325, %15 : vector<2x512xf32>
    %327 = vector.extract_strided_slice %326 {offsets = [0, 0], sizes = [2, 384], strides = [1, 1]} : vector<2x512xf32> to vector<2x384xf32>
    %cst_113 = arith.constant 5.000000e-01 : f32
    %328 = vector.broadcast %cst_113 : f32 to vector<2x384xf32>
    %329 = arith.mulf %328, %327 : vector<2x384xf32>
    %330 = math.tanh %329 : vector<2x384xf32>
    %cst_114 = arith.constant 5.000000e-01 : f32
    %331 = vector.broadcast %cst_114 : f32 to vector<2x384xf32>
    %332 = arith.mulf %331, %330 : vector<2x384xf32>
    %cst_115 = arith.constant 5.000000e-01 : f32
    %333 = vector.broadcast %cst_115 : f32 to vector<2x384xf32>
    %334 = arith.addf %332, %333 : vector<2x384xf32>
    %335 = vector.extract_strided_slice %334 {offsets = [0, 0], sizes = [2, 128], strides = [1, 1]} : vector<2x384xf32> to vector<2x128xf32>
    %336 = vector.extract_strided_slice %334 {offsets = [0, 128], sizes = [2, 128], strides = [1, 1]} : vector<2x384xf32> to vector<2x128xf32>
    %337 = vector.extract_strided_slice %334 {offsets = [0, 256], sizes = [2, 128], strides = [1, 1]} : vector<2x384xf32> to vector<2x128xf32>
    %338 = vector.extract_strided_slice %326 {offsets = [0, 384], sizes = [2, 128], strides = [1, 1]} : vector<2x512xf32> to vector<2x128xf32>
    %339 = math.tanh %338 : vector<2x128xf32>
    %340 = arith.mulf %336, %296 : vector<2x128xf32>
    %341 = arith.mulf %335, %339 : vector<2x128xf32>
    %342 = arith.addf %340, %341 : vector<2x128xf32>
    %343 = math.tanh %342 : vector<2x128xf32>
    %344 = arith.mulf %337, %343 : vector<2x128xf32>
    %c0_116 = arith.constant 0 : index
    %c0_117 = arith.constant 0 : index
    %345 = vector.load %arg11[%c0_116, %c0_117] : memref<128x512xf32, #tpu.memory_space<vmem>>, vector<128x512xf32>
    %cst_118 = arith.constant dense<0.000000e+00> : vector<2x512xf32>
    %346 = tpu.matmul %344, %345, %cst_118 {dimension_numbers = #tpu.dot_dimension_numbers<[1], [0], [0], [1], [0, 0, 1, 1], [], []>} : vector<2x128xf32>, vector<128x512xf32>, vector<2x512xf32> -> vector<2x512xf32>
    %347 = vector.extract_strided_slice %12 {offsets = [14, 0], sizes = [2, 512], strides = [1, 1]} : vector<16x512xf32> to vector<2x512xf32>
    %c0_119 = arith.constant 0 : index
    %c0_120 = arith.constant 0 : index
    %348 = vector.load %arg10[%c0_119, %c0_120] : memref<128x512xf32, #tpu.memory_space<vmem>>, vector<128x512xf32>
    %cst_121 = arith.constant dense<0.000000e+00> : vector<2x512xf32>
    %349 = tpu.matmul %322, %348, %cst_121 {dimension_numbers = #tpu.dot_dimension_numbers<[1], [0], [0], [1], [0, 0, 1, 1], [], []>} : vector<2x128xf32>, vector<128x512xf32>, vector<2x512xf32> -> vector<2x512xf32>
    %350 = arith.addf %347, %349 : vector<2x512xf32>
    %351 = vector.extract_strided_slice %350 {offsets = [0, 0], sizes = [2, 384], strides = [1, 1]} : vector<2x512xf32> to vector<2x384xf32>
    %cst_122 = arith.constant 5.000000e-01 : f32
    %352 = vector.broadcast %cst_122 : f32 to vector<2x384xf32>
    %353 = arith.mulf %352, %351 : vector<2x384xf32>
    %354 = math.tanh %353 : vector<2x384xf32>
    %cst_123 = arith.constant 5.000000e-01 : f32
    %355 = vector.broadcast %cst_123 : f32 to vector<2x384xf32>
    %356 = arith.mulf %355, %354 : vector<2x384xf32>
    %cst_124 = arith.constant 5.000000e-01 : f32
    %357 = vector.broadcast %cst_124 : f32 to vector<2x384xf32>
    %358 = arith.addf %356, %357 : vector<2x384xf32>
    %359 = vector.extract_strided_slice %358 {offsets = [0, 0], sizes = [2, 128], strides = [1, 1]} : vector<2x384xf32> to vector<2x128xf32>
    %360 = vector.extract_strided_slice %358 {offsets = [0, 128], sizes = [2, 128], strides = [1, 1]} : vector<2x384xf32> to vector<2x128xf32>
    %361 = vector.extract_strided_slice %358 {offsets = [0, 256], sizes = [2, 128], strides = [1, 1]} : vector<2x384xf32> to vector<2x128xf32>
    %362 = vector.extract_strided_slice %350 {offsets = [0, 384], sizes = [2, 128], strides = [1, 1]} : vector<2x512xf32> to vector<2x128xf32>
    %363 = math.tanh %362 : vector<2x128xf32>
    %364 = arith.mulf %360, %320 : vector<2x128xf32>
    %365 = arith.mulf %359, %363 : vector<2x128xf32>
    %366 = arith.addf %364, %365 : vector<2x128xf32>
    %367 = math.tanh %366 : vector<2x128xf32>
    %368 = arith.mulf %361, %367 : vector<2x128xf32>
    %c0_125 = arith.constant 0 : index
    %c0_126 = arith.constant 0 : index
    %369 = vector.load %arg12[%c0_125, %c0_126] : memref<128x512xf32, #tpu.memory_space<vmem>>, vector<128x512xf32>
    %cst_127 = arith.constant dense<0.000000e+00> : vector<2x512xf32>
    %370 = tpu.matmul %368, %369, %cst_127 {dimension_numbers = #tpu.dot_dimension_numbers<[1], [0], [0], [1], [0, 0, 1, 1], [], []>} : vector<2x128xf32>, vector<128x512xf32>, vector<2x512xf32> -> vector<2x512xf32>
    %371 = arith.addf %346, %370 : vector<2x512xf32>
    %372 = arith.addf %371, %15 : vector<2x512xf32>
    %373 = vector.extract_strided_slice %372 {offsets = [0, 0], sizes = [2, 384], strides = [1, 1]} : vector<2x512xf32> to vector<2x384xf32>
    %cst_128 = arith.constant 5.000000e-01 : f32
    %374 = vector.broadcast %cst_128 : f32 to vector<2x384xf32>
    %375 = arith.mulf %374, %373 : vector<2x384xf32>
    %376 = math.tanh %375 : vector<2x384xf32>
    %cst_129 = arith.constant 5.000000e-01 : f32
    %377 = vector.broadcast %cst_129 : f32 to vector<2x384xf32>
    %378 = arith.mulf %377, %376 : vector<2x384xf32>
    %cst_130 = arith.constant 5.000000e-01 : f32
    %379 = vector.broadcast %cst_130 : f32 to vector<2x384xf32>
    %380 = arith.addf %378, %379 : vector<2x384xf32>
    %381 = vector.extract_strided_slice %380 {offsets = [0, 0], sizes = [2, 128], strides = [1, 1]} : vector<2x384xf32> to vector<2x128xf32>
    %382 = vector.extract_strided_slice %380 {offsets = [0, 128], sizes = [2, 128], strides = [1, 1]} : vector<2x384xf32> to vector<2x128xf32>
    %383 = vector.extract_strided_slice %380 {offsets = [0, 256], sizes = [2, 128], strides = [1, 1]} : vector<2x384xf32> to vector<2x128xf32>
    %384 = vector.extract_strided_slice %372 {offsets = [0, 384], sizes = [2, 128], strides = [1, 1]} : vector<2x512xf32> to vector<2x128xf32>
    %385 = math.tanh %384 : vector<2x128xf32>
    %386 = arith.mulf %382, %342 : vector<2x128xf32>
    %387 = arith.mulf %381, %385 : vector<2x128xf32>
    %388 = arith.addf %386, %387 : vector<2x128xf32>
    %389 = math.tanh %388 : vector<2x128xf32>
    %390 = arith.mulf %383, %389 : vector<2x128xf32>
    %c0_131 = arith.constant 0 : index
    %c0_132 = arith.constant 0 : index
    %391 = vector.load %arg4[%c0_131, %c0_132] : memref<128x2xf32, #tpu.memory_space<vmem>>, vector<128x2xf32>
    %cst_133 = arith.constant dense<0.000000e+00> : vector<2x2xf32>
    %392 = tpu.matmul %390, %391, %cst_133 {dimension_numbers = #tpu.dot_dimension_numbers<[1], [0], [0], [1], [0, 0, 1, 1], [], []>} : vector<2x128xf32>, vector<128x2xf32>, vector<2x2xf32> -> vector<2x2xf32>
    %c0_134 = arith.constant 0 : index
    %c0_135 = arith.constant 0 : index
    %393 = vector.load %arg5[%c0_134, %c0_135] : memref<1x2xf32, #tpu.memory_space<vmem>>, vector<1x2xf32>
    %394 = vector.broadcast %393 : vector<1x2xf32> to vector<2x2xf32>
    %395 = arith.addf %392, %394 : vector<2x2xf32>
    %c0_136 = arith.constant 0 : index
    %c0_137 = arith.constant 0 : index
    %396 = vector.load %arg9[%c0_136, %c0_137] : memref<2x2xf32, #tpu.memory_space<vmem>>, vector<2x2xf32>
    tpu.vector_store %arg9[%c0_136, %c0_137], %395 {strides = array<i32>} : memref<2x2xf32, #tpu.memory_space<vmem>>, vector<2x2xf32>,
    return
  }
}

</mosaic_0001>

<llo_original>
// kernel: lstm_forward.1
$region0: #{lstm_forward.1}
  #allocation0 [shape = 'u32[]', space=smem, size = 0x4, offset = 0x4, fixed_abs, tag = 'smem constant byte address 0x4 - core index']
  #allocation1 [shape = 'u32[72,128]{1,0:T(1,128)}', space=vmem, size = 0x9000, scoped, tag = 'internal scratch']
  #allocation2 [shape = 'f32[128,512]{1,0:T(8,128)}', space=vmem, size = 0x40000, scoped, tag = 'scratch operand']
  #allocation3 [shape = 'f32[128,512]{1,0:T(8,128)}', space=vmem, size = 0x40000, scoped, tag = 'scratch operand']
  #allocation4 [shape = 'f32[128,512]{1,0:T(8,128)}', space=vmem, size = 0x40000, scoped, tag = 'scratch operand']
  #allocation5 [shape = 's32[3]{0}', space=sflag, size = 0xc, scoped, tag = 'scratch operand']
  #allocation8 [shape = 's32[]', space=sflag, size = 0x4, offset = 0, fixed_abs, tag = 'sflag constant byte address 0x0 - dummy sync flag']
  #allocation9 [shape = 's32[]', space=sflag, size = 0x4, offset = 0, fixed_abs, tag = 'sflag constant byte address 0x0 - dummy sync flag']
  #allocation10 [shape = 'u32[]', space=smem, size = 0x4, offset = 0x44, fixed_abs, tag = 'smem constant byte address 0x44 - assertion arg 0']
  #allocation11 [shape = 'u32[]', space=smem, size = 0x4, offset = 0x48, fixed_abs, tag = 'smem constant byte address 0x48 - assertion arg 1']
  #allocation12 [shape = 's32[]', space=sflag, size = 0x4, offset = 0, fixed_abs, tag = 'sflag constant byte address 0x0 - dummy sync flag']
  #allocation13 [shape = 's32[]', space=sflag, size = 0x4, offset = 0, fixed_abs, tag = 'sflag constant byte address 0x0 - dummy sync flag']
  #allocation14 [shape = 's32[]', space=sflag, size = 0x4, offset = 0, fixed_abs, tag = 'sflag constant byte address 0x0 - dummy sync flag']
  #allocation15 [shape = 's32[]', space=sflag, size = 0x4, offset = 0, fixed_abs, tag = 'sflag constant byte address 0x0 - dummy sync flag']
  %s0 = inlined_call_operand.vmem [shape: f32[16,2], index: 0, kind: input, shape index: {}]
  %s1 = inlined_call_operand.vmem [shape: f32[2,512], index: 1, kind: input, shape index: {}]
  %s2 = inlined_call_operand.vmem [shape: f32[1,512], index: 2, kind: input, shape index: {}]
  %s3 = inlined_call_operand.vmem [shape: f32[1,512], index: 3, kind: input, shape index: {}]
  %s4 = inlined_call_operand.vmem [shape: f32[128,2], index: 4, kind: input, shape index: {}]
  %s5 = inlined_call_operand.vmem [shape: f32[1,2], index: 5, kind: input, shape index: {}]
  %s6 = inlined_call_operand.hbm [shape: f32[128,512], index: 6, kind: input, shape index: {}]
  %s7 = inlined_call_operand.hbm [shape: f32[128,512], index: 7, kind: input, shape index: {}]
  %s8 = inlined_call_operand.hbm [shape: f32[128,512], index: 8, kind: input, shape index: {}]
  %s9 = inlined_call_operand.hbm [shape: f32[2,2], index: 9, kind: output, shape index: {}]
  %s10 = sld [smem:[#allocation0]]
  $region46: #{lstm_forward.1} parent=0
    _
  %s12 = ssub.s32 1, %s10
  %s13 = scalar_select 0, %s12, %s10
  $region1: #{lstm_forward.1} parent=0
    #allocation6 [shape = 'u8[1024]{0}', space=vmem, size = 0x400, scoped, tag = 'output window, operand 0, single buffered']
    #allocation7 [shape = 's32[1]{0}', space=sflag, size = 0x4, scoped, tag = 'scoped memory for lstm_forward.1']
    %14 = vsyncpa [#allocation7], 0
    // Predicated region
    $region2: #{lstm_forward.1} parent=1 // pred_check
      _
    $region3: #{lstm_forward.1} parent=1 // pred_check_branch
      %16 = sbr.rel (0) target = $region5
    $region4: #{lstm_forward.1} parent=1 // pred_region
      _
    $region5: #{lstm_forward.1} parent=1 // pred_fallthru
      _
    // Predicated region
    $region6: #{lstm_forward.1} parent=1 // pred_check
      _
    $region7: #{lstm_forward.1} parent=1 // pred_check_branch
      %18 = sbr.rel (0) target = $region9
    $region8: #{lstm_forward.1} parent=1 // pred_region
      _
    $region9: #{lstm_forward.1} parent=1 // pred_fallthru
      _
    // Predicated region
    $region10: #{lstm_forward.1} parent=1 // pred_check
      _
    $region11: #{lstm_forward.1} parent=1 // pred_check_branch
      %20 = sbr.rel (0) target = $region13
    $region12: #{lstm_forward.1} parent=1 // pred_region
      _
    $region13: #{lstm_forward.1} parent=1 // pred_fallthru
      _
    // Predicated region
    $region14: #{lstm_forward.1} parent=1 // pred_check
      _
    $region15: #{lstm_forward.1} parent=1 // pred_check_branch
      %22 = sbr.rel (0) target = $region17
    $region16: #{lstm_forward.1} parent=1 // pred_region
      _
    $region17: #{lstm_forward.1} parent=1 // pred_fallthru
      _
    // Predicated region
    $region18: #{lstm_forward.1} parent=1 // pred_check
      _
    $region19: #{lstm_forward.1} parent=1 // pred_check_branch
      %24 = sbr.rel (0) target = $region21
    $region20: #{lstm_forward.1} parent=1 // pred_region
      _
    $region21: #{lstm_forward.1} parent=1 // pred_fallthru
      _
    // Predicated region
    $region22: #{lstm_forward.1} parent=1 // pred_check
      _
    $region23: #{lstm_forward.1} parent=1 // pred_check_branch
      %26 = sbr.rel (0) target = $region25
    $region24: #{lstm_forward.1} parent=1 // pred_region
      _
    $region25: #{lstm_forward.1} parent=1 // pred_fallthru
      _
    // Predicated region
    $region26: #{lstm_forward.1} parent=1 // pred_check
      _
    $region27: #{lstm_forward.1} parent=1 // pred_check_branch
      %28 = sbr.rel target = $region29
    $region28: #{lstm_forward.1} parent=1 // pred_region
      %29 = sst [smem:[#allocation10]] [#allocation9]
      %30 = sst [smem:[#allocation11]] [#allocation8]
    $region29: #{lstm_forward.1} parent=1 // pred_fallthru
      _
    %32 = shalt.err (0)
    %s34 = sshll.u32 %s6, 4
    %s35 = int_to_ptr.hbm [resolvable:$true] %s34
    %s36 = sshll.u32 [#allocation2], 4
    %s37 = int_to_ptr.vmem [resolvable:$true] %s36
    %39 = dma.hbm_to_vmem [thread:$0]  %s35, 8192, %s37, [#allocation5]
    %s40 = scalar_lea.sflag [#allocation5], 1
    // Predicated region
    $region30: #{lstm_forward.1} parent=1 // pred_check
      _
    $region31: #{lstm_forward.1} parent=1 // pred_check_branch
      %42 = sbr.rel target = $region33
    $region32: #{lstm_forward.1} parent=1 // pred_region
      %43 = sst [smem:[#allocation10]] [#allocation13]
      %44 = sst [smem:[#allocation11]] [#allocation12]
    $region33: #{lstm_forward.1} parent=1 // pred_fallthru
      _
    %46 = shalt.err (0)
    %s48 = sshll.u32 %s7, 4
    %s49 = int_to_ptr.hbm [resolvable:$true] %s48
    %s50 = sshll.u32 [#allocation3], 4
    %s51 = int_to_ptr.vmem [resolvable:$true] %s50
    %53 = dma.hbm_to_vmem [thread:$0]  %s49, 8192, %s51, %s40
    %s54 = scalar_lea.sflag [#allocation5], 2
    // Predicated region
    $region34: #{lstm_forward.1} parent=1 // pred_check
      _
    $region35: #{lstm_forward.1} parent=1 // pred_check_branch
      %56 = sbr.rel target = $region37
    $region36: #{lstm_forward.1} parent=1 // pred_region
      %57 = sst [smem:[#allocation10]] [#allocation15]
      %58 = sst [smem:[#allocation11]] [#allocation14]
    $region37: #{lstm_forward.1} parent=1 // pred_fallthru
      _
    %60 = shalt.err (0)
    %s62 = sshll.u32 %s8, 4
    %s63 = int_to_ptr.hbm [resolvable:$true] %s62
    %s64 = sshll.u32 [#allocation4], 4
    %s65 = int_to_ptr.vmem [resolvable:$true] %s64
    %67 = dma.hbm_to_vmem [thread:$0]  %s63, 8192, %s65, %s54
    %v68 = vld [vmem:[%s0] sm:$0xff]
    %v69 = vld [vmem:[%s0 + $0x8] sm:$0xff]
    %v70 = vld [vmem:[%s1] sm:$0xff]
    %v71 = vld [vmem:[%s2] sm:$0xf]
    %v73 = vperm.slane %v71, 0
    %v74 = vperm.slane %v71, 1
    %v75 = vperm.slane %v71, 2
    %v76 = vperm.slane %v71, 3
    %82 = vst [vmem:[#allocation1] ss:$4 sm:$0xff] %v70
    %v83 = vld.sshfl [vmem:[#allocation1] sm:$0xff pattern:$0x73625140]
    %v84 = vld.sshfl [vmem:[#allocation1 + $0x8] sm:$0xff pattern:$0x73625140]
    %v85 = vld.sshfl [vmem:[#allocation1 + $0x10] sm:$0xff pattern:$0x73625140]
    %v86 = vld.sshfl [vmem:[#allocation1 + $0x18] sm:$0xff pattern:$0x73625140]
    %vm87 = vcmask 15360
    %v89 = vsel %vm87, %v68, 0
    %v92 = vsel %vm87, %v69, 0
    %vm94 = vcmask 1041408
    %v95 = vsel %vm94, %v83, 0
    %v97 = vsel %vm94, %v84, 0
    %v99 = vsel %vm94, %v85, 0
    %v101 = vsel %vm94, %v86, 0
    %103 = vmatpush.msra.mxu0 0.0
    %104 = vmatpush.msra.mxu0 0.0
    %105 = vmatpush.msra.mxu0 0.0
    %106 = vmatpush.msra.mxu0 0.0
    %107 = vmatpush.msra.mxu0 0.0
    %108 = vmatpush.msra.mxu0 0.0
    %109 = vmatpush.msra.mxu0 0.0
    %110 = vmatpush.msra.mxu0 0.0
    %111 = vmatpush.msra.mxu0 0.0
    %112 = vmatpush.msra.mxu0 0.0
    %113 = vmatpush.msra.mxu0 0.0
    %114 = vmatpush.msra.mxu0 0.0
    %115 = vmatpush.msra.mxu0 0.0
    %116 = vmatpush.msra.mxu0 0.0
    %117 = vmatpush.msra.mxu0 0.0
    %118 = vmatpush.msra.mxu0 %v95
    %119 = vmatmul.f32.gmra.mxu0 %v89
    %v120 = vpop.f32.mrf.mxu0
    %v121 = vadd.f32 %v73, %v120
    %122 = vmatmul.f32.gmra.mxu0 %v92
    %v123 = vpop.f32.mrf.mxu0
    %v124 = vadd.f32 %v73, %v123
    %125 = vdwg.mxu0
    %126 = vmatpush.msra.mxu0 0.0
    %127 = vmatpush.msra.mxu0 0.0
    %128 = vmatpush.msra.mxu0 0.0
    %129 = vmatpush.msra.mxu0 0.0
    %130 = vmatpush.msra.mxu0 0.0
    %131 = vmatpush.msra.mxu0 0.0
    %132 = vmatpush.msra.mxu0 0.0
    %133 = vmatpush.msra.mxu0 0.0
    %134 = vmatpush.msra.mxu0 0.0
    %135 = vmatpush.msra.mxu0 0.0
    %136 = vmatpush.msra.mxu0 0.0
    %137 = vmatpush.msra.mxu0 0.0
    %138 = vmatpush.msra.mxu0 0.0
    %139 = vmatpush.msra.mxu0 0.0
    %140 = vmatpush.msra.mxu0 0.0
    %141 = vmatpush.msra.mxu0 %v97
    %142 = vmatmul.f32.gmra.mxu0 %v89
    %v143 = vpop.f32.mrf.mxu0
    %v144 = vadd.f32 %v74, %v143
    %145 = vmatmul.f32.gmra.mxu0 %v92
    %v146 = vpop.f32.mrf.mxu0
    %v147 = vadd.f32 %v74, %v146
    %148 = vdwg.mxu0
    %149 = vmatpush.msra.mxu0 0.0
    %150 = vmatpush.msra.mxu0 0.0
    %151 = vmatpush.msra.mxu0 0.0
    %152 = vmatpush.msra.mxu0 0.0
    %153 = vmatpush.msra.mxu0 0.0
    %154 = vmatpush.msra.mxu0 0.0
    %155 = vmatpush.msra.mxu0 0.0
    %156 = vmatpush.msra.mxu0 0.0
    %157 = vmatpush.msra.mxu0 0.0
    %158 = vmatpush.msra.mxu0 0.0
    %159 = vmatpush.msra.mxu0 0.0
    %160 = vmatpush.msra.mxu0 0.0
    %161 = vmatpush.msra.mxu0 0.0
    %162 = vmatpush.msra.mxu0 0.0
    %163 = vmatpush.msra.mxu0 0.0
    %164 = vmatpush.msra.mxu0 %v99
    %165 = vmatmul.f32.gmra.mxu0 %v89
    %v166 = vpop.f32.mrf.mxu0
    %v167 = vadd.f32 %v75, %v166
    %168 = vmatmul.f32.gmra.mxu0 %v92
    %v169 = vpop.f32.mrf.mxu0
    %v170 = vadd.f32 %v75, %v169
    %171 = vdwg.mxu0
    %172 = vmatpush.msra.mxu0 0.0
    %173 = vmatpush.msra.mxu0 0.0
    %174 = vmatpush.msra.mxu0 0.0
    %175 = vmatpush.msra.mxu0 0.0
    %176 = vmatpush.msra.mxu0 0.0
    %177 = vmatpush.msra.mxu0 0.0
    %178 = vmatpush.msra.mxu0 0.0
    %179 = vmatpush.msra.mxu0 0.0
    %180 = vmatpush.msra.mxu0 0.0
    %181 = vmatpush.msra.mxu0 0.0
    %182 = vmatpush.msra.mxu0 0.0
    %183 = vmatpush.msra.mxu0 0.0
    %184 = vmatpush.msra.mxu0 0.0
    %185 = vmatpush.msra.mxu0 0.0
    %186 = vmatpush.msra.mxu0 0.0
    %187 = vmatpush.msra.mxu0 %v101
    %188 = vmatmul.f32.gmra.mxu0 %v89
    %v189 = vpop.f32.mrf.mxu0
    %v190 = vadd.f32 %v76, %v189
    %191 = vmatmul.f32.gmra.mxu0 %v92
    %v192 = vpop.f32.mrf.mxu0
    %v193 = vadd.f32 %v76, %v192
    %194 = vdwg.mxu0
    %v195 = vld [vmem:[%s3] sm:$0xf]
    %v197 = vperm.slane %v195, 0
    %v198 = vperm.slane %v195, 1
    %v199 = vperm.slane %v195, 2
    %v200 = vperm.slane %v195, 3
    %s205 = smul.u32 8, 16
    %s206 = smul.u32 %s205, 4
    %s207 = sshll.u32 %s206, 4
    %208 = dma.done [#allocation5], %s207
    %s209 = sshll.u32 %s206, 4
    %210 = dma.done %s40, %s209
    %s211 = sshll.u32 %s206, 4
    %212 = dma.done %s54, %s211
    %v213 = vld [vmem:[#allocation3] sm:$0xff]
    %v214 = vld [vmem:[#allocation3 + $0x8] sm:$0xff]
    %v215 = vld [vmem:[#allocation3 + $0x10] sm:$0xff]
    %v216 = vld [vmem:[#allocation3 + $0x18] sm:$0xff]
    %v217 = vld [vmem:[#allocation3 + $0x20] sm:$0xff]
    %v218 = vld [vmem:[#allocation3 + $0x28] sm:$0xff]
    %v219 = vld [vmem:[#allocation3 + $0x30] sm:$0xff]
    %v220 = vld [vmem:[#allocation3 + $0x38] sm:$0xff]
    %v221 = vld [vmem:[#allocation3 + $0x40] sm:$0xff]
    %v222 = vld [vmem:[#allocation3 + $0x48] sm:$0xff]
    %v223 = vld [vmem:[#allocation3 + $0x50] sm:$0xff]
    %v224 = vld [vmem:[#allocation3 + $0x58] sm:$0xff]
    %v225 = vld [vmem:[#allocation3 + $0x60] sm:$0xff]
    %v226 = vld [vmem:[#allocation3 + $0x68] sm:$0xff]
    %v227 = vld [vmem:[#allocation3 + $0x70] sm:$0xff]
    %v228 = vld [vmem:[#allocation3 + $0x78] sm:$0xff]
    %v229 = vld [vmem:[#allocation3 + $0x80] sm:$0xff]
    %v230 = vld [vmem:[#allocation3 + $0x88] sm:$0xff]
    %v231 = vld [vmem:[#allocation3 + $0x90] sm:$0xff]
    %v232 = vld [vmem:[#allocation3 + $0x98] sm:$0xff]
    %v233 = vld [vmem:[#allocation3 + $0xa0] sm:$0xff]
    %v234 = vld [vmem:[#allocation3 + $0xa8] sm:$0xff]
    %v235 = vld [vmem:[#allocation3 + $0xb0] sm:$0xff]
    %v236 = vld [vmem:[#allocation3 + $0xb8] sm:$0xff]
    %v237 = vld [vmem:[#allocation3 + $0xc0] sm:$0xff]
    %v238 = vld [vmem:[#allocation3 + $0xc8] sm:$0xff]
    %v239 = vld [vmem:[#allocation3 + $0xd0] sm:$0xff]
    %v240 = vld [vmem:[#allocation3 + $0xd8] sm:$0xff]
    %v241 = vld [vmem:[#allocation3 + $0xe0] sm:$0xff]
    %v242 = vld [vmem:[#allocation3 + $0xe8] sm:$0xff]
    %v243 = vld [vmem:[#allocation3 + $0xf0] sm:$0xff]
    %v244 = vld [vmem:[#allocation3 + $0xf8] sm:$0xff]
    %v245 = vld [vmem:[#allocation3 + $0x100] sm:$0xff]
    %v246 = vld [vmem:[#allocation3 + $0x108] sm:$0xff]
    %v247 = vld [vmem:[#allocation3 + $0x110] sm:$0xff]
    %v248 = vld [vmem:[#allocation3 + $0x118] sm:$0xff]
    %v249 = vld [vmem:[#allocation3 + $0x120] sm:$0xff]
    %v250 = vld [vmem:[#allocation3 + $0x128] sm:$0xff]
    %v251 = vld [vmem:[#allocation3 + $0x130] sm:$0xff]
    %v252 = vld [vmem:[#allocation3 + $0x138] sm:$0xff]
    %v253 = vld [vmem:[#allocation3 + $0x140] sm:$0xff]
    %v254 = vld [vmem:[#allocation3 + $0x148] sm:$0xff]
    %v255 = vld [vmem:[#allocation3 + $0x150] sm:$0xff]
    %v256 = vld [vmem:[#allocation3 + $0x158] sm:$0xff]
    %v257 = vld [vmem:[#allocation3 + $0x160] sm:$0xff]
    %v258 = vld [vmem:[#allocation3 + $0x168] sm:$0xff]
    %v259 = vld [vmem:[#allocation3 + $0x170] sm:$0xff]
    %v260 = vld [vmem:[#allocation3 + $0x178] sm:$0xff]
    %v261 = vld [vmem:[#allocation3 + $0x180] sm:$0xff]
    %v262 = vld [vmem:[#allocation3 + $0x188] sm:$0xff]
    %v263 = vld [vmem:[#allocation3 + $0x190] sm:$0xff]
    %v264 = vld [vmem:[#allocation3 + $0x198] sm:$0xff]
    %v265 = vld [vmem:[#allocation3 + $0x1a0] sm:$0xff]
    %v266 = vld [vmem:[#allocation3 + $0x1a8] sm:$0xff]
    %v267 = vld [vmem:[#allocation3 + $0x1b0] sm:$0xff]
    %v268 = vld [vmem:[#allocation3 + $0x1b8] sm:$0xff]
    %v269 = vld [vmem:[#allocation3 + $0x1c0] sm:$0xff]
    %v270 = vld [vmem:[#allocation3 + $0x1c8] sm:$0xff]
    %v271 = vld [vmem:[#allocation3 + $0x1d0] sm:$0xff]
    %v272 = vld [vmem:[#allocation3 + $0x1d8] sm:$0xff]
    %v273 = vld [vmem:[#allocation3 + $0x1e0] sm:$0xff]
    %v274 = vld [vmem:[#allocation3 + $0x1e8] sm:$0xff]
    %v275 = vld [vmem:[#allocation3 + $0x1f0] sm:$0xff]
    %v276 = vld [vmem:[#allocation3 + $0x1f8] sm:$0xff]
    %v277 = vld [vmem:[#allocation2] sm:$0xff]
    %v278 = vld [vmem:[#allocation2 + $0x8] sm:$0xff]
    %v279 = vld [vmem:[#allocation2 + $0x10] sm:$0xff]
    %v280 = vld [vmem:[#allocation2 + $0x18] sm:$0xff]
    %v281 = vld [vmem:[#allocation2 + $0x20] sm:$0xff]
    %v282 = vld [vmem:[#allocation2 + $0x28] sm:$0xff]
    %v283 = vld [vmem:[#allocation2 + $0x30] sm:$0xff]
    %v284 = vld [vmem:[#allocation2 + $0x38] sm:$0xff]
    %v285 = vld [vmem:[#allocation2 + $0x40] sm:$0xff]
    %v286 = vld [vmem:[#allocation2 + $0x48] sm:$0xff]
    %v287 = vld [vmem:[#allocation2 + $0x50] sm:$0xff]
    %v288 = vld [vmem:[#allocation2 + $0x58] sm:$0xff]
    %v289 = vld [vmem:[#allocation2 + $0x60] sm:$0xff]
    %v290 = vld [vmem:[#allocation2 + $0x68] sm:$0xff]
    %v291 = vld [vmem:[#allocation2 + $0x70] sm:$0xff]
    %v292 = vld [vmem:[#allocation2 + $0x78] sm:$0xff]
    %v293 = vld [vmem:[#allocation2 + $0x80] sm:$0xff]
    %v294 = vld [vmem:[#allocation2 + $0x88] sm:$0xff]
    %v295 = vld [vmem:[#allocation2 + $0x90] sm:$0xff]
    %v296 = vld [vmem:[#allocation2 + $0x98] sm:$0xff]
    %v297 = vld [vmem:[#allocation2 + $0xa0] sm:$0xff]
    %v298 = vld [vmem:[#allocation2 + $0xa8] sm:$0xff]
    %v299 = vld [vmem:[#allocation2 + $0xb0] sm:$0xff]
    %v300 = vld [vmem:[#allocation2 + $0xb8] sm:$0xff]
    %v301 = vld [vmem:[#allocation2 + $0xc0] sm:$0xff]
    %v302 = vld [vmem:[#allocation2 + $0xc8] sm:$0xff]
    %v303 = vld [vmem:[#allocation2 + $0xd0] sm:$0xff]
    %v304 = vld [vmem:[#allocation2 + $0xd8] sm:$0xff]
    %v305 = vld [vmem:[#allocation2 + $0xe0] sm:$0xff]
    %v306 = vld [vmem:[#allocation2 + $0xe8] sm:$0xff]
    %v307 = vld [vmem:[#allocation2 + $0xf0] sm:$0xff]
    %v308 = vld [vmem:[#allocation2 + $0xf8] sm:$0xff]
    %v309 = vld [vmem:[#allocation2 + $0x100] sm:$0xff]
    %v310 = vld [vmem:[#allocation2 + $0x108] sm:$0xff]
    %v311 = vld [vmem:[#allocation2 + $0x110] sm:$0xff]
    %v312 = vld [vmem:[#allocation2 + $0x118] sm:$0xff]
    %v313 = vld [vmem:[#allocation2 + $0x120] sm:$0xff]
    %v314 = vld [vmem:[#allocation2 + $0x128] sm:$0xff]
    %v315 = vld [vmem:[#allocation2 + $0x130] sm:$0xff]
    %v316 = vld [vmem:[#allocation2 + $0x138] sm:$0xff]
    %v317 = vld [vmem:[#allocation2 + $0x140] sm:$0xff]
    %v318 = vld [vmem:[#allocation2 + $0x148] sm:$0xff]
    %v319 = vld [vmem:[#allocation2 + $0x150] sm:$0xff]
    %v320 = vld [vmem:[#allocation2 + $0x158] sm:$0xff]
    %v321 = vld [vmem:[#allocation2 + $0x160] sm:$0xff]
    %v322 = vld [vmem:[#allocation2 + $0x168] sm:$0xff]
    %v323 = vld [vmem:[#allocation2 + $0x170] sm:$0xff]
    %v324 = vld [vmem:[#allocation2 + $0x178] sm:$0xff]
    %v325 = vld [vmem:[#allocation2 + $0x180] sm:$0xff]
    %v326 = vld [vmem:[#allocation2 + $0x188] sm:$0xff]
    %v327 = vld [vmem:[#allocation2 + $0x190] sm:$0xff]
    %v328 = vld [vmem:[#allocation2 + $0x198] sm:$0xff]
    %v329 = vld [vmem:[#allocation2 + $0x1a0] sm:$0xff]
    %v330 = vld [vmem:[#allocation2 + $0x1a8] sm:$0xff]
    %v331 = vld [vmem:[#allocation2 + $0x1b0] sm:$0xff]
    %v332 = vld [vmem:[#allocation2 + $0x1b8] sm:$0xff]
    %v333 = vld [vmem:[#allocation2 + $0x1c0] sm:$0xff]
    %v334 = vld [vmem:[#allocation2 + $0x1c8] sm:$0xff]
    %v335 = vld [vmem:[#allocation2 + $0x1d0] sm:$0xff]
    %v336 = vld [vmem:[#allocation2 + $0x1d8] sm:$0xff]
    %v337 = vld [vmem:[#allocation2 + $0x1e0] sm:$0xff]
    %v338 = vld [vmem:[#allocation2 + $0x1e8] sm:$0xff]
    %v339 = vld [vmem:[#allocation2 + $0x1f0] sm:$0xff]
    %v340 = vld [vmem:[#allocation2 + $0x1f8] sm:$0xff]
    %341 = vmatpush.msra.mxu0 %v337
    %342 = vmatpush.msra.mxu0 %v333
    %343 = vmatpush.msra.mxu0 %v329
    %344 = vmatpush.msra.mxu0 %v325
    %345 = vmatpush.msra.mxu0 %v321
    %346 = vmatpush.msra.mxu0 %v317
    %347 = vmatpush.msra.mxu0 %v313
    %348 = vmatpush.msra.mxu0 %v309
    %349 = vmatpush.msra.mxu0 %v305
    %350 = vmatpush.msra.mxu0 %v301
    %351 = vmatpush.msra.mxu0 %v297
    %352 = vmatpush.msra.mxu0 %v293
    %353 = vmatpush.msra.mxu0 %v289
    %354 = vmatpush.msra.mxu0 %v285
    %355 = vmatpush.msra.mxu0 %v281
    %356 = vmatpush.msra.mxu0 %v277
    %357 = vmatmul.f32.gmra.mxu0 0.0
    %v358 = vpop.f32.mrf.mxu0
    %v359 = vadd.f32 0.0, %v358
    %360 = vdwg.mxu0
    %361 = vmatpush.msra.mxu0 %v338
    %362 = vmatpush.msra.mxu0 %v334
    %363 = vmatpush.msra.mxu0 %v330
    %364 = vmatpush.msra.mxu0 %v326
    %365 = vmatpush.msra.mxu0 %v322
    %366 = vmatpush.msra.mxu0 %v318
    %367 = vmatpush.msra.mxu0 %v314
    %368 = vmatpush.msra.mxu0 %v310
    %369 = vmatpush.msra.mxu0 %v306
    %370 = vmatpush.msra.mxu0 %v302
    %371 = vmatpush.msra.mxu0 %v298
    %372 = vmatpush.msra.mxu0 %v294
    %373 = vmatpush.msra.mxu0 %v290
    %374 = vmatpush.msra.mxu0 %v286
    %375 = vmatpush.msra.mxu0 %v282
    %376 = vmatpush.msra.mxu0 %v278
    %377 = vmatmul.f32.gmra.mxu0 0.0
    %v378 = vpop.f32.mrf.mxu0
    %v379 = vadd.f32 0.0, %v378
    %380 = vdwg.mxu0
    %381 = vmatpush.msra.mxu0 %v339
    %382 = vmatpush.msra.mxu0 %v335
    %383 = vmatpush.msra.mxu0 %v331
    %384 = vmatpush.msra.mxu0 %v327
    %385 = vmatpush.msra.mxu0 %v323
    %386 = vmatpush.msra.mxu0 %v319
    %387 = vmatpush.msra.mxu0 %v315
    %388 = vmatpush.msra.mxu0 %v311
    %389 = vmatpush.msra.mxu0 %v307
    %390 = vmatpush.msra.mxu0 %v303
    %391 = vmatpush.msra.mxu0 %v299
    %392 = vmatpush.msra.mxu0 %v295
    %393 = vmatpush.msra.mxu0 %v291
    %394 = vmatpush.msra.mxu0 %v287
    %395 = vmatpush.msra.mxu0 %v283
    %396 = vmatpush.msra.mxu0 %v279
    %397 = vmatmul.f32.gmra.mxu0 0.0
    %v398 = vpop.f32.mrf.mxu0
    %v399 = vadd.f32 0.0, %v398
    %400 = vdwg.mxu0
    %401 = vmatpush.msra.mxu0 %v340
    %402 = vmatpush.msra.mxu0 %v336
    %403 = vmatpush.msra.mxu0 %v332
    %404 = vmatpush.msra.mxu0 %v328
    %405 = vmatpush.msra.mxu0 %v324
    %406 = vmatpush.msra.mxu0 %v320
    %407 = vmatpush.msra.mxu0 %v316
    %408 = vmatpush.msra.mxu0 %v312
    %409 = vmatpush.msra.mxu0 %v308
    %410 = vmatpush.msra.mxu0 %v304
    %411 = vmatpush.msra.mxu0 %v300
    %412 = vmatpush.msra.mxu0 %v296
    %413 = vmatpush.msra.mxu0 %v292
    %414 = vmatpush.msra.mxu0 %v288
    %415 = vmatpush.msra.mxu0 %v284
    %416 = vmatpush.msra.mxu0 %v280
    %417 = vmatmul.f32.gmra.mxu0 0.0
    %v418 = vpop.f32.mrf.mxu0
    %v419 = vadd.f32 0.0, %v418
    %420 = vdwg.mxu0
    %v421 = vadd.f32 %v121, %v359
    %v422 = vadd.f32 %v144, %v379
    %v423 = vadd.f32 %v167, %v399
    %v424 = vadd.f32 %v190, %v419
    %v425 = vmul.f32 %v421, 0.5
    %v426 = vmul.f32 %v422, 0.5
    %v427 = vmul.f32 %v423, 0.5
    %v428 = vtanh.pop %v425
    %v429 = vtanh.pop %v426
    %v430 = vtanh.pop %v427
    %v431 = vmul.f32 %v428, 0.5
    %v432 = vmul.f32 %v429, 0.5
    %v433 = vmul.f32 %v430, 0.5
    %v434 = vadd.f32 %v431, 0.5
    %v435 = vadd.f32 %v432, 0.5
    %v436 = vadd.f32 %v433, 0.5
    %v437 = vtanh.pop %v424
    %v438 = vmul.f32 %v435, 0.0
    %v439 = vmul.f32 %v434, %v437
    %v440 = vadd.f32 %v438, %v439
    %v441 = vtanh.pop %v440
    %v442 = vmul.f32 %v436, %v441
    %v443 = vld [vmem:[#allocation4] sm:$0xff]
    %v444 = vld [vmem:[#allocation4 + $0x8] sm:$0xff]
    %v445 = vld [vmem:[#allocation4 + $0x10] sm:$0xff]
    %v446 = vld [vmem:[#allocation4 + $0x18] sm:$0xff]
    %v447 = vld [vmem:[#allocation4 + $0x20] sm:$0xff]
    %v448 = vld [vmem:[#allocation4 + $0x28] sm:$0xff]
    %v449 = vld [vmem:[#allocation4 + $0x30] sm:$0xff]
    %v450 = vld [vmem:[#allocation4 + $0x38] sm:$0xff]
    %v451 = vld [vmem:[#allocation4 + $0x40] sm:$0xff]
    %v452 = vld [vmem:[#allocation4 + $0x48] sm:$0xff]
    %v453 = vld [vmem:[#allocation4 + $0x50] sm:$0xff]
    %v454 = vld [vmem:[#allocation4 + $0x58] sm:$0xff]
    %v455 = vld [vmem:[#allocation4 + $0x60] sm:$0xff]
    %v456 = vld [vmem:[#allocation4 + $0x68] sm:$0xff]
    %v457 = vld [vmem:[#allocation4 + $0x70] sm:$0xff]
    %v458 = vld [vmem:[#allocation4 + $0x78] sm:$0xff]
    %v459 = vld [vmem:[#allocation4 + $0x80] sm:$0xff]
    %v460 = vld [vmem:[#allocation4 + $0x88] sm:$0xff]
    %v461 = vld [vmem:[#allocation4 + $0x90] sm:$0xff]
    %v462 = vld [vmem:[#allocation4 + $0x98] sm:$0xff]
    %v463 = vld [vmem:[#allocation4 + $0xa0] sm:$0xff]
    %v464 = vld [vmem:[#allocation4 + $0xa8] sm:$0xff]
    %v465 = vld [vmem:[#allocation4 + $0xb0] sm:$0xff]
    %v466 = vld [vmem:[#allocation4 + $0xb8] sm:$0xff]
    %v467 = vld [vmem:[#allocation4 + $0xc0] sm:$0xff]
    %v468 = vld [vmem:[#allocation4 + $0xc8] sm:$0xff]
    %v469 = vld [vmem:[#allocation4 + $0xd0] sm:$0xff]
    %v470 = vld [vmem:[#allocation4 + $0xd8] sm:$0xff]
    %v471 = vld [vmem:[#allocation4 + $0xe0] sm:$0xff]
    %v472 = vld [vmem:[#allocation4 + $0xe8] sm:$0xff]
    %v473 = vld [vmem:[#allocation4 + $0xf0] sm:$0xff]
    %v474 = vld [vmem:[#allocation4 + $0xf8] sm:$0xff]
    %v475 = vld [vmem:[#allocation4 + $0x100] sm:$0xff]
    %v476 = vld [vmem:[#allocation4 + $0x108] sm:$0xff]
    %v477 = vld [vmem:[#allocation4 + $0x110] sm:$0xff]
    %v478 = vld [vmem:[#allocation4 + $0x118] sm:$0xff]
    %v479 = vld [vmem:[#allocation4 + $0x120] sm:$0xff]
    %v480 = vld [vmem:[#allocation4 + $0x128] sm:$0xff]
    %v481 = vld [vmem:[#allocation4 + $0x130] sm:$0xff]
    %v482 = vld [vmem:[#allocation4 + $0x138] sm:$0xff]
    %v483 = vld [vmem:[#allocation4 + $0x140] sm:$0xff]
    %v484 = vld [vmem:[#allocation4 + $0x148] sm:$0xff]
    %v485 = vld [vmem:[#allocation4 + $0x150] sm:$0xff]
    %v486 = vld [vmem:[#allocation4 + $0x158] sm:$0xff]
    %v487 = vld [vmem:[#allocation4 + $0x160] sm:$0xff]
    %v488 = vld [vmem:[#allocation4 + $0x168] sm:$0xff]
    %v489 = vld [vmem:[#allocation4 + $0x170] sm:$0xff]
    %v490 = vld [vmem:[#allocation4 + $0x178] sm:$0xff]
    %v491 = vld [vmem:[#allocation4 + $0x180] sm:$0xff]
    %v492 = vld [vmem:[#allocation4 + $0x188] sm:$0xff]
    %v493 = vld [vmem:[#allocation4 + $0x190] sm:$0xff]
    %v494 = vld [vmem:[#allocation4 + $0x198] sm:$0xff]
    %v495 = vld [vmem:[#allocation4 + $0x1a0] sm:$0xff]
    %v496 = vld [vmem:[#allocation4 + $0x1a8] sm:$0xff]
    %v497 = vld [vmem:[#allocation4 + $0x1b0] sm:$0xff]
    %v498 = vld [vmem:[#allocation4 + $0x1b8] sm:$0xff]
    %v499 = vld [vmem:[#allocation4 + $0x1c0] sm:$0xff]
    %v500 = vld [vmem:[#allocation4 + $0x1c8] sm:$0xff]
    %v501 = vld [vmem:[#allocation4 + $0x1d0] sm:$0xff]
    %v502 = vld [vmem:[#allocation4 + $0x1d8] sm:$0xff]
    %v503 = vld [vmem:[#allocation4 + $0x1e0] sm:$0xff]
    %v504 = vld [vmem:[#allocation4 + $0x1e8] sm:$0xff]
    %v505 = vld [vmem:[#allocation4 + $0x1f0] sm:$0xff]
    %v506 = vld [vmem:[#allocation4 + $0x1f8] sm:$0xff]
    %507 = vmatpush.msra.mxu0 %v503
    %508 = vmatpush.msra.mxu0 %v499
    %509 = vmatpush.msra.mxu0 %v495
    %510 = vmatpush.msra.mxu0 %v491
    %511 = vmatpush.msra.mxu0 %v487
    %512 = vmatpush.msra.mxu0 %v483
    %513 = vmatpush.msra.mxu0 %v479
    %514 = vmatpush.msra.mxu0 %v475
    %515 = vmatpush.msra.mxu0 %v471
    %516 = vmatpush.msra.mxu0 %v467
    %517 = vmatpush.msra.mxu0 %v463
    %518 = vmatpush.msra.mxu0 %v459
    %519 = vmatpush.msra.mxu0 %v455
    %520 = vmatpush.msra.mxu0 %v451
    %521 = vmatpush.msra.mxu0 %v447
    %522 = vmatpush.msra.mxu0 %v443
    %523 = vmatmul.f32.gmra.mxu0 %v442
    %v524 = vpop.f32.mrf.mxu0
    %v525 = vadd.f32 0.0, %v524
    %526 = vdwg.mxu0
    %527 = vmatpush.msra.mxu0 %v504
    %528 = vmatpush.msra.mxu0 %v500
    %529 = vmatpush.msra.mxu0 %v496
    %530 = vmatpush.msra.mxu0 %v492
    %531 = vmatpush.msra.mxu0 %v488
    %532 = vmatpush.msra.mxu0 %v484
    %533 = vmatpush.msra.mxu0 %v480
    %534 = vmatpush.msra.mxu0 %v476
    %535 = vmatpush.msra.mxu0 %v472
    %536 = vmatpush.msra.mxu0 %v468
    %537 = vmatpush.msra.mxu0 %v464
    %538 = vmatpush.msra.mxu0 %v460
    %539 = vmatpush.msra.mxu0 %v456
    %540 = vmatpush.msra.mxu0 %v452
    %541 = vmatpush.msra.mxu0 %v448
    %542 = vmatpush.msra.mxu0 %v444
    %543 = vmatmul.f32.gmra.mxu0 %v442
    %v544 = vpop.f32.mrf.mxu0
    %v545 = vadd.f32 0.0, %v544
    %546 = vdwg.mxu0
    %547 = vmatpush.msra.mxu0 %v505
    %548 = vmatpush.msra.mxu0 %v501
    %549 = vmatpush.msra.mxu0 %v497
    %550 = vmatpush.msra.mxu0 %v493
    %551 = vmatpush.msra.mxu0 %v489
    %552 = vmatpush.msra.mxu0 %v485
    %553 = vmatpush.msra.mxu0 %v481
    %554 = vmatpush.msra.mxu0 %v477
    %555 = vmatpush.msra.mxu0 %v473
    %556 = vmatpush.msra.mxu0 %v469
    %557 = vmatpush.msra.mxu0 %v465
    %558 = vmatpush.msra.mxu0 %v461
    %559 = vmatpush.msra.mxu0 %v457
    %560 = vmatpush.msra.mxu0 %v453
    %561 = vmatpush.msra.mxu0 %v449
    %562 = vmatpush.msra.mxu0 %v445
    %563 = vmatmul.f32.gmra.mxu0 %v442
    %v564 = vpop.f32.mrf.mxu0
    %v565 = vadd.f32 0.0, %v564
    %566 = vdwg.mxu0
    %567 = vmatpush.msra.mxu0 %v506
    %568 = vmatpush.msra.mxu0 %v502
    %569 = vmatpush.msra.mxu0 %v498
    %570 = vmatpush.msra.mxu0 %v494
    %571 = vmatpush.msra.mxu0 %v490
    %572 = vmatpush.msra.mxu0 %v486
    %573 = vmatpush.msra.mxu0 %v482
    %574 = vmatpush.msra.mxu0 %v478
    %575 = vmatpush.msra.mxu0 %v474
    %576 = vmatpush.msra.mxu0 %v470
    %577 = vmatpush.msra.mxu0 %v466
    %578 = vmatpush.msra.mxu0 %v462
    %579 = vmatpush.msra.mxu0 %v458
    %580 = vmatpush.msra.mxu0 %v454
    %581 = vmatpush.msra.mxu0 %v450
    %582 = vmatpush.msra.mxu0 %v446
    %583 = vmatmul.f32.gmra.mxu0 %v442
    %v584 = vpop.f32.mrf.mxu0
    %v585 = vadd.f32 0.0, %v584
    %586 = vdwg.mxu0
    %587 = vmatpush.msra.mxu0 %v273
    %588 = vmatpush.msra.mxu0 %v269
    %589 = vmatpush.msra.mxu0 %v265
    %590 = vmatpush.msra.mxu0 %v261
    %591 = vmatpush.msra.mxu0 %v257
    %592 = vmatpush.msra.mxu0 %v253
    %593 = vmatpush.msra.mxu0 %v249
    %594 = vmatpush.msra.mxu0 %v245
    %595 = vmatpush.msra.mxu0 %v241
    %596 = vmatpush.msra.mxu0 %v237
    %597 = vmatpush.msra.mxu0 %v233
    %598 = vmatpush.msra.mxu0 %v229
    %599 = vmatpush.msra.mxu0 %v225
    %600 = vmatpush.msra.mxu0 %v221
    %601 = vmatpush.msra.mxu0 %v217
    %602 = vmatpush.msra.mxu0 %v213
    %603 = vmatmul.f32.gmra.mxu0 0.0
    %v604 = vpop.f32.mrf.mxu0
    %v605 = vadd.f32 %v525, %v604
    %606 = vdwg.mxu0
    %607 = vmatpush.msra.mxu0 %v274
    %608 = vmatpush.msra.mxu0 %v270
    %609 = vmatpush.msra.mxu0 %v266
    %610 = vmatpush.msra.mxu0 %v262
    %611 = vmatpush.msra.mxu0 %v258
    %612 = vmatpush.msra.mxu0 %v254
    %613 = vmatpush.msra.mxu0 %v250
    %614 = vmatpush.msra.mxu0 %v246
    %615 = vmatpush.msra.mxu0 %v242
    %616 = vmatpush.msra.mxu0 %v238
    %617 = vmatpush.msra.mxu0 %v234
    %618 = vmatpush.msra.mxu0 %v230
    %619 = vmatpush.msra.mxu0 %v226
    %620 = vmatpush.msra.mxu0 %v222
    %621 = vmatpush.msra.mxu0 %v218
    %622 = vmatpush.msra.mxu0 %v214
    %623 = vmatmul.f32.gmra.mxu0 0.0
    %v624 = vpop.f32.mrf.mxu0
    %v625 = vadd.f32 %v545, %v624
    %626 = vdwg.mxu0
    %627 = vmatpush.msra.mxu0 %v275
    %628 = vmatpush.msra.mxu0 %v271
    %629 = vmatpush.msra.mxu0 %v267
    %630 = vmatpush.msra.mxu0 %v263
    %631 = vmatpush.msra.mxu0 %v259
    %632 = vmatpush.msra.mxu0 %v255
    %633 = vmatpush.msra.mxu0 %v251
    %634 = vmatpush.msra.mxu0 %v247
    %635 = vmatpush.msra.mxu0 %v243
    %636 = vmatpush.msra.mxu0 %v239
    %637 = vmatpush.msra.mxu0 %v235
    %638 = vmatpush.msra.mxu0 %v231
    %639 = vmatpush.msra.mxu0 %v227
    %640 = vmatpush.msra.mxu0 %v223
    %641 = vmatpush.msra.mxu0 %v219
    %642 = vmatpush.msra.mxu0 %v215
    %643 = vmatmul.f32.gmra.mxu0 0.0
    %v644 = vpop.f32.mrf.mxu0
    %v645 = vadd.f32 %v565, %v644
    %646 = vdwg.mxu0
    %647 = vmatpush.msra.mxu0 %v276
    %648 = vmatpush.msra.mxu0 %v272
    %649 = vmatpush.msra.mxu0 %v268
    %650 = vmatpush.msra.mxu0 %v264
    %651 = vmatpush.msra.mxu0 %v260
    %652 = vmatpush.msra.mxu0 %v256
    %653 = vmatpush.msra.mxu0 %v252
    %654 = vmatpush.msra.mxu0 %v248
    %655 = vmatpush.msra.mxu0 %v244
    %656 = vmatpush.msra.mxu0 %v240
    %657 = vmatpush.msra.mxu0 %v236
    %658 = vmatpush.msra.mxu0 %v232
    %659 = vmatpush.msra.mxu0 %v228
    %660 = vmatpush.msra.mxu0 %v224
    %661 = vmatpush.msra.mxu0 %v220
    %662 = vmatpush.msra.mxu0 %v216
    %663 = vmatmul.f32.gmra.mxu0 0.0
    %v664 = vpop.f32.mrf.mxu0
    %v665 = vadd.f32 %v585, %v664
    %666 = vdwg.mxu0
    %v667 = vadd.f32 %v605, %v197
    %v668 = vadd.f32 %v625, %v198
    %v669 = vadd.f32 %v645, %v199
    %v670 = vadd.f32 %v665, %v200
    %v671 = vmul.f32 %v667, 0.5
    %v672 = vmul.f32 %v668, 0.5
    %v673 = vmul.f32 %v669, 0.5
    %v674 = vtanh.pop %v671
    %v675 = vtanh.pop %v672
    %v676 = vtanh.pop %v673
    %v677 = vmul.f32 %v674, 0.5
    %v678 = vmul.f32 %v675, 0.5
    %v679 = vmul.f32 %v676, 0.5
    %v680 = vadd.f32 %v677, 0.5
    %v681 = vadd.f32 %v678, 0.5
    %v682 = vadd.f32 %v679, 0.5
    %v683 = vtanh.pop %v670
    %v684 = vmul.f32 %v681, 0.0
    %v685 = vmul.f32 %v680, %v683
    %v686 = vadd.f32 %v684, %v685
    %v687 = vtanh.pop %v686
    %v688 = vmul.f32 %v682, %v687
    %689 = vmatpush.msra.mxu0 %v337
    %690 = vmatpush.msra.mxu0 %v333
    %691 = vmatpush.msra.mxu0 %v329
    %692 = vmatpush.msra.mxu0 %v325
    %693 = vmatpush.msra.mxu0 %v321
    %694 = vmatpush.msra.mxu0 %v317
    %695 = vmatpush.msra.mxu0 %v313
    %696 = vmatpush.msra.mxu0 %v309
    %697 = vmatpush.msra.mxu0 %v305
    %698 = vmatpush.msra.mxu0 %v301
    %699 = vmatpush.msra.mxu0 %v297
    %700 = vmatpush.msra.mxu0 %v293
    %701 = vmatpush.msra.mxu0 %v289
    %702 = vmatpush.msra.mxu0 %v285
    %703 = vmatpush.msra.mxu0 %v281
    %704 = vmatpush.msra.mxu0 %v277
    %705 = vmatmul.f32.gmra.mxu0 %v442
    %v706 = vpop.f32.mrf.mxu0
    %v707 = vadd.f32 0.0, %v706
    %708 = vdwg.mxu0
    %709 = vmatpush.msra.mxu0 %v338
    %710 = vmatpush.msra.mxu0 %v334
    %711 = vmatpush.msra.mxu0 %v330
    %712 = vmatpush.msra.mxu0 %v326
    %713 = vmatpush.msra.mxu0 %v322
    %714 = vmatpush.msra.mxu0 %v318
    %715 = vmatpush.msra.mxu0 %v314
    %716 = vmatpush.msra.mxu0 %v310
    %717 = vmatpush.msra.mxu0 %v306
    %718 = vmatpush.msra.mxu0 %v302
    %719 = vmatpush.msra.mxu0 %v298
    %720 = vmatpush.msra.mxu0 %v294
    %721 = vmatpush.msra.mxu0 %v290
    %722 = vmatpush.msra.mxu0 %v286
    %723 = vmatpush.msra.mxu0 %v282
    %724 = vmatpush.msra.mxu0 %v278
    %725 = vmatmul.f32.gmra.mxu0 %v442
    %v726 = vpop.f32.mrf.mxu0
    %v727 = vadd.f32 0.0, %v726
    %728 = vdwg.mxu0
    %729 = vmatpush.msra.mxu0 %v339
    %730 = vmatpush.msra.mxu0 %v335
    %731 = vmatpush.msra.mxu0 %v331
    %732 = vmatpush.msra.mxu0 %v327
    %733 = vmatpush.msra.mxu0 %v323
    %734 = vmatpush.msra.mxu0 %v319
    %735 = vmatpush.msra.mxu0 %v315
    %736 = vmatpush.msra.mxu0 %v311
    %737 = vmatpush.msra.mxu0 %v307
    %738 = vmatpush.msra.mxu0 %v303
    %739 = vmatpush.msra.mxu0 %v299
    %740 = vmatpush.msra.mxu0 %v295
    %741 = vmatpush.msra.mxu0 %v291
    %742 = vmatpush.msra.mxu0 %v287
    %743 = vmatpush.msra.mxu0 %v283
    %744 = vmatpush.msra.mxu0 %v279
    %745 = vmatmul.f32.gmra.mxu0 %v442
    %v746 = vpop.f32.mrf.mxu0
    %v747 = vadd.f32 0.0, %v746
    %748 = vdwg.mxu0
    %749 = vmatpush.msra.mxu0 %v340
    %750 = vmatpush.msra.mxu0 %v336
    %751 = vmatpush.msra.mxu0 %v332
    %752 = vmatpush.msra.mxu0 %v328
    %753 = vmatpush.msra.mxu0 %v324
    %754 = vmatpush.msra.mxu0 %v320
    %755 = vmatpush.msra.mxu0 %v316
    %756 = vmatpush.msra.mxu0 %v312
    %757 = vmatpush.msra.mxu0 %v308
    %758 = vmatpush.msra.mxu0 %v304
    %759 = vmatpush.msra.mxu0 %v300
    %760 = vmatpush.msra.mxu0 %v296
    %761 = vmatpush.msra.mxu0 %v292
    %762 = vmatpush.msra.mxu0 %v288
    %763 = vmatpush.msra.mxu0 %v284
    %764 = vmatpush.msra.mxu0 %v280
    %765 = vmatmul.f32.gmra.mxu0 %v442
    %v766 = vpop.f32.mrf.mxu0
    %v767 = vadd.f32 0.0, %v766
    %768 = vdwg.mxu0
    %v773 = vrot.slane %v707, 6
    %v774 = vrot.slane %v727, 6
    %v775 = vrot.slane %v747, 6
    %v776 = vrot.slane %v767, 6
    %v781 = vadd.f32 %v121, %v773
    %v782 = vadd.f32 %v144, %v774
    %v783 = vadd.f32 %v167, %v775
    %v784 = vadd.f32 %v190, %v776
    %v785 = vmul.f32 %v781, 0.5
    %v786 = vmul.f32 %v782, 0.5
    %v787 = vmul.f32 %v783, 0.5
    %v788 = vtanh.pop %v785
    %v789 = vtanh.pop %v786
    %v790 = vtanh.pop %v787
    %v791 = vmul.f32 %v788, 0.5
    %v792 = vmul.f32 %v789, 0.5
    %v793 = vmul.f32 %v790, 0.5
    %v794 = vadd.f32 %v791, 0.5
    %v795 = vadd.f32 %v792, 0.5
    %v796 = vadd.f32 %v793, 0.5
    %v797 = vtanh.pop %v784
    %v799 = vrot.slane %v440, 6
    %v801 = vmul.f32 %v795, %v799
    %v802 = vmul.f32 %v794, %v797
    %v803 = vadd.f32 %v801, %v802
    %v804 = vtanh.pop %v803
    %v805 = vmul.f32 %v796, %v804
    %v807 = vrot.slane %v805, 2
    %809 = vmatpush.msra.mxu0 %v503
    %810 = vmatpush.msra.mxu0 %v499
    %811 = vmatpush.msra.mxu0 %v495
    %812 = vmatpush.msra.mxu0 %v491
    %813 = vmatpush.msra.mxu0 %v487
    %814 = vmatpush.msra.mxu0 %v483
    %815 = vmatpush.msra.mxu0 %v479
    %816 = vmatpush.msra.mxu0 %v475
    %817 = vmatpush.msra.mxu0 %v471
    %818 = vmatpush.msra.mxu0 %v467
    %819 = vmatpush.msra.mxu0 %v463
    %820 = vmatpush.msra.mxu0 %v459
    %821 = vmatpush.msra.mxu0 %v455
    %822 = vmatpush.msra.mxu0 %v451
    %823 = vmatpush.msra.mxu0 %v447
    %824 = vmatpush.msra.mxu0 %v443
    %825 = vmatmul.f32.gmra.mxu0 %v807
    %v826 = vpop.f32.mrf.mxu0
    %v827 = vadd.f32 0.0, %v826
    %828 = vdwg.mxu0
    %829 = vmatpush.msra.mxu0 %v504
    %830 = vmatpush.msra.mxu0 %v500
    %831 = vmatpush.msra.mxu0 %v496
    %832 = vmatpush.msra.mxu0 %v492
    %833 = vmatpush.msra.mxu0 %v488
    %834 = vmatpush.msra.mxu0 %v484
    %835 = vmatpush.msra.mxu0 %v480
    %836 = vmatpush.msra.mxu0 %v476
    %837 = vmatpush.msra.mxu0 %v472
    %838 = vmatpush.msra.mxu0 %v468
    %839 = vmatpush.msra.mxu0 %v464
    %840 = vmatpush.msra.mxu0 %v460
    %841 = vmatpush.msra.mxu0 %v456
    %842 = vmatpush.msra.mxu0 %v452
    %843 = vmatpush.msra.mxu0 %v448
    %844 = vmatpush.msra.mxu0 %v444
    %845 = vmatmul.f32.gmra.mxu0 %v807
    %v846 = vpop.f32.mrf.mxu0
    %v847 = vadd.f32 0.0, %v846
    %848 = vdwg.mxu0
    %849 = vmatpush.msra.mxu0 %v505
    %850 = vmatpush.msra.mxu0 %v501
    %851 = vmatpush.msra.mxu0 %v497
    %852 = vmatpush.msra.mxu0 %v493
    %853 = vmatpush.msra.mxu0 %v489
    %854 = vmatpush.msra.mxu0 %v485
    %855 = vmatpush.msra.mxu0 %v481
    %856 = vmatpush.msra.mxu0 %v477
    %857 = vmatpush.msra.mxu0 %v473
    %858 = vmatpush.msra.mxu0 %v469
    %859 = vmatpush.msra.mxu0 %v465
    %860 = vmatpush.msra.mxu0 %v461
    %861 = vmatpush.msra.mxu0 %v457
    %862 = vmatpush.msra.mxu0 %v453
    %863 = vmatpush.msra.mxu0 %v449
    %864 = vmatpush.msra.mxu0 %v445
    %865 = vmatmul.f32.gmra.mxu0 %v807
    %v866 = vpop.f32.mrf.mxu0
    %v867 = vadd.f32 0.0, %v866
    %868 = vdwg.mxu0
    %869 = vmatpush.msra.mxu0 %v506
    %870 = vmatpush.msra.mxu0 %v502
    %871 = vmatpush.msra.mxu0 %v498
    %872 = vmatpush.msra.mxu0 %v494
    %873 = vmatpush.msra.mxu0 %v490
    %874 = vmatpush.msra.mxu0 %v486
    %875 = vmatpush.msra.mxu0 %v482
    %876 = vmatpush.msra.mxu0 %v478
    %877 = vmatpush.msra.mxu0 %v474
    %878 = vmatpush.msra.mxu0 %v470
    %879 = vmatpush.msra.mxu0 %v466
    %880 = vmatpush.msra.mxu0 %v462
    %881 = vmatpush.msra.mxu0 %v458
    %882 = vmatpush.msra.mxu0 %v454
    %883 = vmatpush.msra.mxu0 %v450
    %884 = vmatpush.msra.mxu0 %v446
    %885 = vmatmul.f32.gmra.mxu0 %v807
    %v886 = vpop.f32.mrf.mxu0
    %v887 = vadd.f32 0.0, %v886
    %888 = vdwg.mxu0
    %889 = vmatpush.msra.mxu0 %v273
    %890 = vmatpush.msra.mxu0 %v269
    %891 = vmatpush.msra.mxu0 %v265
    %892 = vmatpush.msra.mxu0 %v261
    %893 = vmatpush.msra.mxu0 %v257
    %894 = vmatpush.msra.mxu0 %v253
    %895 = vmatpush.msra.mxu0 %v249
    %896 = vmatpush.msra.mxu0 %v245
    %897 = vmatpush.msra.mxu0 %v241
    %898 = vmatpush.msra.mxu0 %v237
    %899 = vmatpush.msra.mxu0 %v233
    %900 = vmatpush.msra.mxu0 %v229
    %901 = vmatpush.msra.mxu0 %v225
    %902 = vmatpush.msra.mxu0 %v221
    %903 = vmatpush.msra.mxu0 %v217
    %904 = vmatpush.msra.mxu0 %v213
    %905 = vmatmul.f32.gmra.mxu0 %v688
    %v906 = vpop.f32.mrf.mxu0
    %v907 = vadd.f32 %v827, %v906
    %908 = vdwg.mxu0
    %909 = vmatpush.msra.mxu0 %v274
    %910 = vmatpush.msra.mxu0 %v270
    %911 = vmatpush.msra.mxu0 %v266
    %912 = vmatpush.msra.mxu0 %v262
    %913 = vmatpush.msra.mxu0 %v258
    %914 = vmatpush.msra.mxu0 %v254
    %915 = vmatpush.msra.mxu0 %v250
    %916 = vmatpush.msra.mxu0 %v246
    %917 = vmatpush.msra.mxu0 %v242
    %918 = vmatpush.msra.mxu0 %v238
    %919 = vmatpush.msra.mxu0 %v234
    %920 = vmatpush.msra.mxu0 %v230
    %921 = vmatpush.msra.mxu0 %v226
    %922 = vmatpush.msra.mxu0 %v222
    %923 = vmatpush.msra.mxu0 %v218
    %924 = vmatpush.msra.mxu0 %v214
    %925 = vmatmul.f32.gmra.mxu0 %v688
    %v926 = vpop.f32.mrf.mxu0
    %v927 = vadd.f32 %v847, %v926
    %928 = vdwg.mxu0
    %929 = vmatpush.msra.mxu0 %v275
    %930 = vmatpush.msra.mxu0 %v271
    %931 = vmatpush.msra.mxu0 %v267
    %932 = vmatpush.msra.mxu0 %v263
    %933 = vmatpush.msra.mxu0 %v259
    %934 = vmatpush.msra.mxu0 %v255
    %935 = vmatpush.msra.mxu0 %v251
    %936 = vmatpush.msra.mxu0 %v247
    %937 = vmatpush.msra.mxu0 %v243
    %938 = vmatpush.msra.mxu0 %v239
    %939 = vmatpush.msra.mxu0 %v235
    %940 = vmatpush.msra.mxu0 %v231
    %941 = vmatpush.msra.mxu0 %v227
    %942 = vmatpush.msra.mxu0 %v223
    %943 = vmatpush.msra.mxu0 %v219
    %944 = vmatpush.msra.mxu0 %v215
    %945 = vmatmul.f32.gmra.mxu0 %v688
    %v946 = vpop.f32.mrf.mxu0
    %v947 = vadd.f32 %v867, %v946
    %948 = vdwg.mxu0
    %949 = vmatpush.msra.mxu0 %v276
    %950 = vmatpush.msra.mxu0 %v272
    %951 = vmatpush.msra.mxu0 %v268
    %952 = vmatpush.msra.mxu0 %v264
    %953 = vmatpush.msra.mxu0 %v260
    %954 = vmatpush.msra.mxu0 %v256
    %955 = vmatpush.msra.mxu0 %v252
    %956 = vmatpush.msra.mxu0 %v248
    %957 = vmatpush.msra.mxu0 %v244
    %958 = vmatpush.msra.mxu0 %v240
    %959 = vmatpush.msra.mxu0 %v236
    %960 = vmatpush.msra.mxu0 %v232
    %961 = vmatpush.msra.mxu0 %v228
    %962 = vmatpush.msra.mxu0 %v224
    %963 = vmatpush.msra.mxu0 %v220
    %964 = vmatpush.msra.mxu0 %v216
    %965 = vmatmul.f32.gmra.mxu0 %v688
    %v966 = vpop.f32.mrf.mxu0
    %v967 = vadd.f32 %v887, %v966
    %968 = vdwg.mxu0
    %v969 = vadd.f32 %v907, %v197
    %v970 = vadd.f32 %v927, %v198
    %v971 = vadd.f32 %v947, %v199
    %v972 = vadd.f32 %v967, %v200
    %v973 = vmul.f32 %v969, 0.5
    %v974 = vmul.f32 %v970, 0.5
    %v975 = vmul.f32 %v971, 0.5
    %v976 = vtanh.pop %v973
    %v977 = vtanh.pop %v974
    %v978 = vtanh.pop %v975
    %v979 = vmul.f32 %v976, 0.5
    %v980 = vmul.f32 %v977, 0.5
    %v981 = vmul.f32 %v978, 0.5
    %v982 = vadd.f32 %v979, 0.5
    %v983 = vadd.f32 %v980, 0.5
    %v984 = vadd.f32 %v981, 0.5
    %v985 = vtanh.pop %v972
    %v986 = vmul.f32 %v983, %v686
    %v987 = vmul.f32 %v982, %v985
    %v988 = vadd.f32 %v986, %v987
    %v989 = vtanh.pop %v988
    %v990 = vmul.f32 %v984, %v989
    %991 = vmatpush.msra.mxu0 %v337
    %992 = vmatpush.msra.mxu0 %v333
    %993 = vmatpush.msra.mxu0 %v329
    %994 = vmatpush.msra.mxu0 %v325
    %995 = vmatpush.msra.mxu0 %v321
    %996 = vmatpush.msra.mxu0 %v317
    %997 = vmatpush.msra.mxu0 %v313
    %998 = vmatpush.msra.mxu0 %v309
    %999 = vmatpush.msra.mxu0 %v305
    %1000 = vmatpush.msra.mxu0 %v301
    %1001 = vmatpush.msra.mxu0 %v297
    %1002 = vmatpush.msra.mxu0 %v293
    %1003 = vmatpush.msra.mxu0 %v289
    %1004 = vmatpush.msra.mxu0 %v285
    %1005 = vmatpush.msra.mxu0 %v281
    %1006 = vmatpush.msra.mxu0 %v277
    %1007 = vmatmul.f32.gmra.mxu0 %v807
    %v1008 = vpop.f32.mrf.mxu0
    %v1009 = vadd.f32 0.0, %v1008
    %1010 = vdwg.mxu0
    %1011 = vmatpush.msra.mxu0 %v338
    %1012 = vmatpush.msra.mxu0 %v334
    %1013 = vmatpush.msra.mxu0 %v330
    %1014 = vmatpush.msra.mxu0 %v326
    %1015 = vmatpush.msra.mxu0 %v322
    %1016 = vmatpush.msra.mxu0 %v318
    %1017 = vmatpush.msra.mxu0 %v314
    %1018 = vmatpush.msra.mxu0 %v310
    %1019 = vmatpush.msra.mxu0 %v306
    %1020 = vmatpush.msra.mxu0 %v302
    %1021 = vmatpush.msra.mxu0 %v298
    %1022 = vmatpush.msra.mxu0 %v294
    %1023 = vmatpush.msra.mxu0 %v290
    %1024 = vmatpush.msra.mxu0 %v286
    %1025 = vmatpush.msra.mxu0 %v282
    %1026 = vmatpush.msra.mxu0 %v278
    %1027 = vmatmul.f32.gmra.mxu0 %v807
    %v1028 = vpop.f32.mrf.mxu0
    %v1029 = vadd.f32 0.0, %v1028
    %1030 = vdwg.mxu0
    %1031 = vmatpush.msra.mxu0 %v339
    %1032 = vmatpush.msra.mxu0 %v335
    %1033 = vmatpush.msra.mxu0 %v331
    %1034 = vmatpush.msra.mxu0 %v327
    %1035 = vmatpush.msra.mxu0 %v323
    %1036 = vmatpush.msra.mxu0 %v319
    %1037 = vmatpush.msra.mxu0 %v315
    %1038 = vmatpush.msra.mxu0 %v311
    %1039 = vmatpush.msra.mxu0 %v307
    %1040 = vmatpush.msra.mxu0 %v303
    %1041 = vmatpush.msra.mxu0 %v299
    %1042 = vmatpush.msra.mxu0 %v295
    %1043 = vmatpush.msra.mxu0 %v291
    %1044 = vmatpush.msra.mxu0 %v287
    %1045 = vmatpush.msra.mxu0 %v283
    %1046 = vmatpush.msra.mxu0 %v279
    %1047 = vmatmul.f32.gmra.mxu0 %v807
    %v1048 = vpop.f32.mrf.mxu0
    %v1049 = vadd.f32 0.0, %v1048
    %1050 = vdwg.mxu0
    %1051 = vmatpush.msra.mxu0 %v340
    %1052 = vmatpush.msra.mxu0 %v336
    %1053 = vmatpush.msra.mxu0 %v332
    %1054 = vmatpush.msra.mxu0 %v328
    %1055 = vmatpush.msra.mxu0 %v324
    %1056 = vmatpush.msra.mxu0 %v320
    %1057 = vmatpush.msra.mxu0 %v316
    %1058 = vmatpush.msra.mxu0 %v312
    %1059 = vmatpush.msra.mxu0 %v308
    %1060 = vmatpush.msra.mxu0 %v304
    %1061 = vmatpush.msra.mxu0 %v300
    %1062 = vmatpush.msra.mxu0 %v296
    %1063 = vmatpush.msra.mxu0 %v292
    %1064 = vmatpush.msra.mxu0 %v288
    %1065 = vmatpush.msra.mxu0 %v284
    %1066 = vmatpush.msra.mxu0 %v280
    %1067 = vmatmul.f32.gmra.mxu0 %v807
    %v1068 = vpop.f32.mrf.mxu0
    %v1069 = vadd.f32 0.0, %v1068
    %1070 = vdwg.mxu0
    %v1075 = vrot.slane %v1009, 4
    %v1076 = vrot.slane %v1029, 4
    %v1077 = vrot.slane %v1049, 4
    %v1078 = vrot.slane %v1069, 4
    %v1083 = vadd.f32 %v121, %v1075
    %v1084 = vadd.f32 %v144, %v1076
    %v1085 = vadd.f32 %v167, %v1077
    %v1086 = vadd.f32 %v190, %v1078
    %v1087 = vmul.f32 %v1083, 0.5
    %v1088 = vmul.f32 %v1084, 0.5
    %v1089 = vmul.f32 %v1085, 0.5
    %v1090 = vtanh.pop %v1087
    %v1091 = vtanh.pop %v1088
    %v1092 = vtanh.pop %v1089
    %v1093 = vmul.f32 %v1090, 0.5
    %v1094 = vmul.f32 %v1091, 0.5
    %v1095 = vmul.f32 %v1092, 0.5
    %v1096 = vadd.f32 %v1093, 0.5
    %v1097 = vadd.f32 %v1094, 0.5
    %v1098 = vadd.f32 %v1095, 0.5
    %v1099 = vtanh.pop %v1086
    %v1101 = vrot.slane %v803, 6
    %v1103 = vmul.f32 %v1097, %v1101
    %v1104 = vmul.f32 %v1096, %v1099
    %v1105 = vadd.f32 %v1103, %v1104
    %v1106 = vtanh.pop %v1105
    %v1107 = vmul.f32 %v1098, %v1106
    %v1109 = vrot.slane %v1107, 4
    %1111 = vmatpush.msra.mxu0 %v503
    %1112 = vmatpush.msra.mxu0 %v499
    %1113 = vmatpush.msra.mxu0 %v495
    %1114 = vmatpush.msra.mxu0 %v491
    %1115 = vmatpush.msra.mxu0 %v487
    %1116 = vmatpush.msra.mxu0 %v483
    %1117 = vmatpush.msra.mxu0 %v479
    %1118 = vmatpush.msra.mxu0 %v475
    %1119 = vmatpush.msra.mxu0 %v471
    %1120 = vmatpush.msra.mxu0 %v467
    %1121 = vmatpush.msra.mxu0 %v463
    %1122 = vmatpush.msra.mxu0 %v459
    %1123 = vmatpush.msra.mxu0 %v455
    %1124 = vmatpush.msra.mxu0 %v451
    %1125 = vmatpush.msra.mxu0 %v447
    %1126 = vmatpush.msra.mxu0 %v443
    %1127 = vmatmul.f32.gmra.mxu0 %v1109
    %v1128 = vpop.f32.mrf.mxu0
    %v1129 = vadd.f32 0.0, %v1128
    %1130 = vdwg.mxu0
    %1131 = vmatpush.msra.mxu0 %v504
    %1132 = vmatpush.msra.mxu0 %v500
    %1133 = vmatpush.msra.mxu0 %v496
    %1134 = vmatpush.msra.mxu0 %v492
    %1135 = vmatpush.msra.mxu0 %v488
    %1136 = vmatpush.msra.mxu0 %v484
    %1137 = vmatpush.msra.mxu0 %v480
    %1138 = vmatpush.msra.mxu0 %v476
    %1139 = vmatpush.msra.mxu0 %v472
    %1140 = vmatpush.msra.mxu0 %v468
    %1141 = vmatpush.msra.mxu0 %v464
    %1142 = vmatpush.msra.mxu0 %v460
    %1143 = vmatpush.msra.mxu0 %v456
    %1144 = vmatpush.msra.mxu0 %v452
    %1145 = vmatpush.msra.mxu0 %v448
    %1146 = vmatpush.msra.mxu0 %v444
    %1147 = vmatmul.f32.gmra.mxu0 %v1109
    %v1148 = vpop.f32.mrf.mxu0
    %v1149 = vadd.f32 0.0, %v1148
    %1150 = vdwg.mxu0
    %1151 = vmatpush.msra.mxu0 %v505
    %1152 = vmatpush.msra.mxu0 %v501
    %1153 = vmatpush.msra.mxu0 %v497
    %1154 = vmatpush.msra.mxu0 %v493
    %1155 = vmatpush.msra.mxu0 %v489
    %1156 = vmatpush.msra.mxu0 %v485
    %1157 = vmatpush.msra.mxu0 %v481
    %1158 = vmatpush.msra.mxu0 %v477
    %1159 = vmatpush.msra.mxu0 %v473
    %1160 = vmatpush.msra.mxu0 %v469
    %1161 = vmatpush.msra.mxu0 %v465
    %1162 = vmatpush.msra.mxu0 %v461
    %1163 = vmatpush.msra.mxu0 %v457
    %1164 = vmatpush.msra.mxu0 %v453
    %1165 = vmatpush.msra.mxu0 %v449
    %1166 = vmatpush.msra.mxu0 %v445
    %1167 = vmatmul.f32.gmra.mxu0 %v1109
    %v1168 = vpop.f32.mrf.mxu0
    %v1169 = vadd.f32 0.0, %v1168
    %1170 = vdwg.mxu0
    %1171 = vmatpush.msra.mxu0 %v506
    %1172 = vmatpush.msra.mxu0 %v502
    %1173 = vmatpush.msra.mxu0 %v498
    %1174 = vmatpush.msra.mxu0 %v494
    %1175 = vmatpush.msra.mxu0 %v490
    %1176 = vmatpush.msra.mxu0 %v486
    %1177 = vmatpush.msra.mxu0 %v482
    %1178 = vmatpush.msra.mxu0 %v478
    %1179 = vmatpush.msra.mxu0 %v474
    %1180 = vmatpush.msra.mxu0 %v470
    %1181 = vmatpush.msra.mxu0 %v466
    %1182 = vmatpush.msra.mxu0 %v462
    %1183 = vmatpush.msra.mxu0 %v458
    %1184 = vmatpush.msra.mxu0 %v454
    %1185 = vmatpush.msra.mxu0 %v450
    %1186 = vmatpush.msra.mxu0 %v446
    %1187 = vmatmul.f32.gmra.mxu0 %v1109
    %v1188 = vpop.f32.mrf.mxu0
    %v1189 = vadd.f32 0.0, %v1188
    %1190 = vdwg.mxu0
    %1191 = vmatpush.msra.mxu0 %v273
    %1192 = vmatpush.msra.mxu0 %v269
    %1193 = vmatpush.msra.mxu0 %v265
    %1194 = vmatpush.msra.mxu0 %v261
    %1195 = vmatpush.msra.mxu0 %v257
    %1196 = vmatpush.msra.mxu0 %v253
    %1197 = vmatpush.msra.mxu0 %v249
    %1198 = vmatpush.msra.mxu0 %v245
    %1199 = vmatpush.msra.mxu0 %v241
    %1200 = vmatpush.msra.mxu0 %v237
    %1201 = vmatpush.msra.mxu0 %v233
    %1202 = vmatpush.msra.mxu0 %v229
    %1203 = vmatpush.msra.mxu0 %v225
    %1204 = vmatpush.msra.mxu0 %v221
    %1205 = vmatpush.msra.mxu0 %v217
    %1206 = vmatpush.msra.mxu0 %v213
    %1207 = vmatmul.f32.gmra.mxu0 %v990
    %v1208 = vpop.f32.mrf.mxu0
    %v1209 = vadd.f32 %v1129, %v1208
    %1210 = vdwg.mxu0
    %1211 = vmatpush.msra.mxu0 %v274
    %1212 = vmatpush.msra.mxu0 %v270
    %1213 = vmatpush.msra.mxu0 %v266
    %1214 = vmatpush.msra.mxu0 %v262
    %1215 = vmatpush.msra.mxu0 %v258
    %1216 = vmatpush.msra.mxu0 %v254
    %1217 = vmatpush.msra.mxu0 %v250
    %1218 = vmatpush.msra.mxu0 %v246
    %1219 = vmatpush.msra.mxu0 %v242
    %1220 = vmatpush.msra.mxu0 %v238
    %1221 = vmatpush.msra.mxu0 %v234
    %1222 = vmatpush.msra.mxu0 %v230
    %1223 = vmatpush.msra.mxu0 %v226
    %1224 = vmatpush.msra.mxu0 %v222
    %1225 = vmatpush.msra.mxu0 %v218
    %1226 = vmatpush.msra.mxu0 %v214
    %1227 = vmatmul.f32.gmra.mxu0 %v990
    %v1228 = vpop.f32.mrf.mxu0
    %v1229 = vadd.f32 %v1149, %v1228
    %1230 = vdwg.mxu0
    %1231 = vmatpush.msra.mxu0 %v275
    %1232 = vmatpush.msra.mxu0 %v271
    %1233 = vmatpush.msra.mxu0 %v267
    %1234 = vmatpush.msra.mxu0 %v263
    %1235 = vmatpush.msra.mxu0 %v259
    %1236 = vmatpush.msra.mxu0 %v255
    %1237 = vmatpush.msra.mxu0 %v251
    %1238 = vmatpush.msra.mxu0 %v247
    %1239 = vmatpush.msra.mxu0 %v243
    %1240 = vmatpush.msra.mxu0 %v239
    %1241 = vmatpush.msra.mxu0 %v235
    %1242 = vmatpush.msra.mxu0 %v231
    %1243 = vmatpush.msra.mxu0 %v227
    %1244 = vmatpush.msra.mxu0 %v223
    %1245 = vmatpush.msra.mxu0 %v219
    %1246 = vmatpush.msra.mxu0 %v215
    %1247 = vmatmul.f32.gmra.mxu0 %v990
    %v1248 = vpop.f32.mrf.mxu0
    %v1249 = vadd.f32 %v1169, %v1248
    %1250 = vdwg.mxu0
    %1251 = vmatpush.msra.mxu0 %v276
    %1252 = vmatpush.msra.mxu0 %v272
    %1253 = vmatpush.msra.mxu0 %v268
    %1254 = vmatpush.msra.mxu0 %v264
    %1255 = vmatpush.msra.mxu0 %v260
    %1256 = vmatpush.msra.mxu0 %v256
    %1257 = vmatpush.msra.mxu0 %v252
    %1258 = vmatpush.msra.mxu0 %v248
    %1259 = vmatpush.msra.mxu0 %v244
    %1260 = vmatpush.msra.mxu0 %v240
    %1261 = vmatpush.msra.mxu0 %v236
    %1262 = vmatpush.msra.mxu0 %v232
    %1263 = vmatpush.msra.mxu0 %v228
    %1264 = vmatpush.msra.mxu0 %v224
    %1265 = vmatpush.msra.mxu0 %v220
    %1266 = vmatpush.msra.mxu0 %v216
    %1267 = vmatmul.f32.gmra.mxu0 %v990
    %v1268 = vpop.f32.mrf.mxu0
    %v1269 = vadd.f32 %v1189, %v1268
    %1270 = vdwg.mxu0
    %v1271 = vadd.f32 %v1209, %v197
    %v1272 = vadd.f32 %v1229, %v198
    %v1273 = vadd.f32 %v1249, %v199
    %v1274 = vadd.f32 %v1269, %v200
    %v1275 = vmul.f32 %v1271, 0.5
    %v1276 = vmul.f32 %v1272, 0.5
    %v1277 = vmul.f32 %v1273, 0.5
    %v1278 = vtanh.pop %v1275
    %v1279 = vtanh.pop %v1276
    %v1280 = vtanh.pop %v1277
    %v1281 = vmul.f32 %v1278, 0.5
    %v1282 = vmul.f32 %v1279, 0.5
    %v1283 = vmul.f32 %v1280, 0.5
    %v1284 = vadd.f32 %v1281, 0.5
    %v1285 = vadd.f32 %v1282, 0.5
    %v1286 = vadd.f32 %v1283, 0.5
    %v1287 = vtanh.pop %v1274
    %v1288 = vmul.f32 %v1285, %v988
    %v1289 = vmul.f32 %v1284, %v1287
    %v1290 = vadd.f32 %v1288, %v1289
    %v1291 = vtanh.pop %v1290
    %v1292 = vmul.f32 %v1286, %v1291
    %1293 = vmatpush.msra.mxu0 %v337
    %1294 = vmatpush.msra.mxu0 %v333
    %1295 = vmatpush.msra.mxu0 %v329
    %1296 = vmatpush.msra.mxu0 %v325
    %1297 = vmatpush.msra.mxu0 %v321
    %1298 = vmatpush.msra.mxu0 %v317
    %1299 = vmatpush.msra.mxu0 %v313
    %1300 = vmatpush.msra.mxu0 %v309
    %1301 = vmatpush.msra.mxu0 %v305
    %1302 = vmatpush.msra.mxu0 %v301
    %1303 = vmatpush.msra.mxu0 %v297
    %1304 = vmatpush.msra.mxu0 %v293
    %1305 = vmatpush.msra.mxu0 %v289
    %1306 = vmatpush.msra.mxu0 %v285
    %1307 = vmatpush.msra.mxu0 %v281
    %1308 = vmatpush.msra.mxu0 %v277
    %1309 = vmatmul.f32.gmra.mxu0 %v1109
    %v1310 = vpop.f32.mrf.mxu0
    %v1311 = vadd.f32 0.0, %v1310
    %1312 = vdwg.mxu0
    %1313 = vmatpush.msra.mxu0 %v338
    %1314 = vmatpush.msra.mxu0 %v334
    %1315 = vmatpush.msra.mxu0 %v330
    %1316 = vmatpush.msra.mxu0 %v326
    %1317 = vmatpush.msra.mxu0 %v322
    %1318 = vmatpush.msra.mxu0 %v318
    %1319 = vmatpush.msra.mxu0 %v314
    %1320 = vmatpush.msra.mxu0 %v310
    %1321 = vmatpush.msra.mxu0 %v306
    %1322 = vmatpush.msra.mxu0 %v302
    %1323 = vmatpush.msra.mxu0 %v298
    %1324 = vmatpush.msra.mxu0 %v294
    %1325 = vmatpush.msra.mxu0 %v290
    %1326 = vmatpush.msra.mxu0 %v286
    %1327 = vmatpush.msra.mxu0 %v282
    %1328 = vmatpush.msra.mxu0 %v278
    %1329 = vmatmul.f32.gmra.mxu0 %v1109
    %v1330 = vpop.f32.mrf.mxu0
    %v1331 = vadd.f32 0.0, %v1330
    %1332 = vdwg.mxu0
    %1333 = vmatpush.msra.mxu0 %v339
    %1334 = vmatpush.msra.mxu0 %v335
    %1335 = vmatpush.msra.mxu0 %v331
    %1336 = vmatpush.msra.mxu0 %v327
    %1337 = vmatpush.msra.mxu0 %v323
    %1338 = vmatpush.msra.mxu0 %v319
    %1339 = vmatpush.msra.mxu0 %v315
    %1340 = vmatpush.msra.mxu0 %v311
    %1341 = vmatpush.msra.mxu0 %v307
    %1342 = vmatpush.msra.mxu0 %v303
    %1343 = vmatpush.msra.mxu0 %v299
    %1344 = vmatpush.msra.mxu0 %v295
    %1345 = vmatpush.msra.mxu0 %v291
    %1346 = vmatpush.msra.mxu0 %v287
    %1347 = vmatpush.msra.mxu0 %v283
    %1348 = vmatpush.msra.mxu0 %v279
    %1349 = vmatmul.f32.gmra.mxu0 %v1109
    %v1350 = vpop.f32.mrf.mxu0
    %v1351 = vadd.f32 0.0, %v1350
    %1352 = vdwg.mxu0
    %1353 = vmatpush.msra.mxu0 %v340
    %1354 = vmatpush.msra.mxu0 %v336
    %1355 = vmatpush.msra.mxu0 %v332
    %1356 = vmatpush.msra.mxu0 %v328
    %1357 = vmatpush.msra.mxu0 %v324
    %1358 = vmatpush.msra.mxu0 %v320
    %1359 = vmatpush.msra.mxu0 %v316
    %1360 = vmatpush.msra.mxu0 %v312
    %1361 = vmatpush.msra.mxu0 %v308
    %1362 = vmatpush.msra.mxu0 %v304
    %1363 = vmatpush.msra.mxu0 %v300
    %1364 = vmatpush.msra.mxu0 %v296
    %1365 = vmatpush.msra.mxu0 %v292
    %1366 = vmatpush.msra.mxu0 %v288
    %1367 = vmatpush.msra.mxu0 %v284
    %1368 = vmatpush.msra.mxu0 %v280
    %1369 = vmatmul.f32.gmra.mxu0 %v1109
    %v1370 = vpop.f32.mrf.mxu0
    %v1371 = vadd.f32 0.0, %v1370
    %1372 = vdwg.mxu0
    %v1377 = vrot.slane %v1311, 2
    %v1378 = vrot.slane %v1331, 2
    %v1379 = vrot.slane %v1351, 2
    %v1380 = vrot.slane %v1371, 2
    %v1385 = vadd.f32 %v121, %v1377
    %v1386 = vadd.f32 %v144, %v1378
    %v1387 = vadd.f32 %v167, %v1379
    %v1388 = vadd.f32 %v190, %v1380
    %v1389 = vmul.f32 %v1385, 0.5
    %v1390 = vmul.f32 %v1386, 0.5
    %v1391 = vmul.f32 %v1387, 0.5
    %v1392 = vtanh.pop %v1389
    %v1393 = vtanh.pop %v1390
    %v1394 = vtanh.pop %v1391
    %v1395 = vmul.f32 %v1392, 0.5
    %v1396 = vmul.f32 %v1393, 0.5
    %v1397 = vmul.f32 %v1394, 0.5
    %v1398 = vadd.f32 %v1395, 0.5
    %v1399 = vadd.f32 %v1396, 0.5
    %v1400 = vadd.f32 %v1397, 0.5
    %v1401 = vtanh.pop %v1388
    %v1403 = vrot.slane %v1105, 6
    %v1405 = vmul.f32 %v1399, %v1403
    %v1406 = vmul.f32 %v1398, %v1401
    %v1407 = vadd.f32 %v1405, %v1406
    %v1408 = vtanh.pop %v1407
    %v1409 = vmul.f32 %v1400, %v1408
    %v1411 = vrot.slane %v1409, 6
    %1413 = vmatpush.msra.mxu0 %v503
    %1414 = vmatpush.msra.mxu0 %v499
    %1415 = vmatpush.msra.mxu0 %v495
    %1416 = vmatpush.msra.mxu0 %v491
    %1417 = vmatpush.msra.mxu0 %v487
    %1418 = vmatpush.msra.mxu0 %v483
    %1419 = vmatpush.msra.mxu0 %v479
    %1420 = vmatpush.msra.mxu0 %v475
    %1421 = vmatpush.msra.mxu0 %v471
    %1422 = vmatpush.msra.mxu0 %v467
    %1423 = vmatpush.msra.mxu0 %v463
    %1424 = vmatpush.msra.mxu0 %v459
    %1425 = vmatpush.msra.mxu0 %v455
    %1426 = vmatpush.msra.mxu0 %v451
    %1427 = vmatpush.msra.mxu0 %v447
    %1428 = vmatpush.msra.mxu0 %v443
    %1429 = vmatmul.f32.gmra.mxu0 %v1411
    %v1430 = vpop.f32.mrf.mxu0
    %v1431 = vadd.f32 0.0, %v1430
    %1432 = vdwg.mxu0
    %1433 = vmatpush.msra.mxu0 %v504
    %1434 = vmatpush.msra.mxu0 %v500
    %1435 = vmatpush.msra.mxu0 %v496
    %1436 = vmatpush.msra.mxu0 %v492
    %1437 = vmatpush.msra.mxu0 %v488
    %1438 = vmatpush.msra.mxu0 %v484
    %1439 = vmatpush.msra.mxu0 %v480
    %1440 = vmatpush.msra.mxu0 %v476
    %1441 = vmatpush.msra.mxu0 %v472
    %1442 = vmatpush.msra.mxu0 %v468
    %1443 = vmatpush.msra.mxu0 %v464
    %1444 = vmatpush.msra.mxu0 %v460
    %1445 = vmatpush.msra.mxu0 %v456
    %1446 = vmatpush.msra.mxu0 %v452
    %1447 = vmatpush.msra.mxu0 %v448
    %1448 = vmatpush.msra.mxu0 %v444
    %1449 = vmatmul.f32.gmra.mxu0 %v1411
    %v1450 = vpop.f32.mrf.mxu0
    %v1451 = vadd.f32 0.0, %v1450
    %1452 = vdwg.mxu0
    %1453 = vmatpush.msra.mxu0 %v505
    %1454 = vmatpush.msra.mxu0 %v501
    %1455 = vmatpush.msra.mxu0 %v497
    %1456 = vmatpush.msra.mxu0 %v493
    %1457 = vmatpush.msra.mxu0 %v489
    %1458 = vmatpush.msra.mxu0 %v485
    %1459 = vmatpush.msra.mxu0 %v481
    %1460 = vmatpush.msra.mxu0 %v477
    %1461 = vmatpush.msra.mxu0 %v473
    %1462 = vmatpush.msra.mxu0 %v469
    %1463 = vmatpush.msra.mxu0 %v465
    %1464 = vmatpush.msra.mxu0 %v461
    %1465 = vmatpush.msra.mxu0 %v457
    %1466 = vmatpush.msra.mxu0 %v453
    %1467 = vmatpush.msra.mxu0 %v449
    %1468 = vmatpush.msra.mxu0 %v445
    %1469 = vmatmul.f32.gmra.mxu0 %v1411
    %v1470 = vpop.f32.mrf.mxu0
    %v1471 = vadd.f32 0.0, %v1470
    %1472 = vdwg.mxu0
    %1473 = vmatpush.msra.mxu0 %v506
    %1474 = vmatpush.msra.mxu0 %v502
    %1475 = vmatpush.msra.mxu0 %v498
    %1476 = vmatpush.msra.mxu0 %v494
    %1477 = vmatpush.msra.mxu0 %v490
    %1478 = vmatpush.msra.mxu0 %v486
    %1479 = vmatpush.msra.mxu0 %v482
    %1480 = vmatpush.msra.mxu0 %v478
    %1481 = vmatpush.msra.mxu0 %v474
    %1482 = vmatpush.msra.mxu0 %v470
    %1483 = vmatpush.msra.mxu0 %v466
    %1484 = vmatpush.msra.mxu0 %v462
    %1485 = vmatpush.msra.mxu0 %v458
    %1486 = vmatpush.msra.mxu0 %v454
    %1487 = vmatpush.msra.mxu0 %v450
    %1488 = vmatpush.msra.mxu0 %v446
    %1489 = vmatmul.f32.gmra.mxu0 %v1411
    %v1490 = vpop.f32.mrf.mxu0
    %v1491 = vadd.f32 0.0, %v1490
    %1492 = vdwg.mxu0
    %1493 = vmatpush.msra.mxu0 %v273
    %1494 = vmatpush.msra.mxu0 %v269
    %1495 = vmatpush.msra.mxu0 %v265
    %1496 = vmatpush.msra.mxu0 %v261
    %1497 = vmatpush.msra.mxu0 %v257
    %1498 = vmatpush.msra.mxu0 %v253
    %1499 = vmatpush.msra.mxu0 %v249
    %1500 = vmatpush.msra.mxu0 %v245
    %1501 = vmatpush.msra.mxu0 %v241
    %1502 = vmatpush.msra.mxu0 %v237
    %1503 = vmatpush.msra.mxu0 %v233
    %1504 = vmatpush.msra.mxu0 %v229
    %1505 = vmatpush.msra.mxu0 %v225
    %1506 = vmatpush.msra.mxu0 %v221
    %1507 = vmatpush.msra.mxu0 %v217
    %1508 = vmatpush.msra.mxu0 %v213
    %1509 = vmatmul.f32.gmra.mxu0 %v1292
    %v1510 = vpop.f32.mrf.mxu0
    %v1511 = vadd.f32 %v1431, %v1510
    %1512 = vdwg.mxu0
    %1513 = vmatpush.msra.mxu0 %v274
    %1514 = vmatpush.msra.mxu0 %v270
    %1515 = vmatpush.msra.mxu0 %v266
    %1516 = vmatpush.msra.mxu0 %v262
    %1517 = vmatpush.msra.mxu0 %v258
    %1518 = vmatpush.msra.mxu0 %v254
    %1519 = vmatpush.msra.mxu0 %v250
    %1520 = vmatpush.msra.mxu0 %v246
    %1521 = vmatpush.msra.mxu0 %v242
    %1522 = vmatpush.msra.mxu0 %v238
    %1523 = vmatpush.msra.mxu0 %v234
    %1524 = vmatpush.msra.mxu0 %v230
    %1525 = vmatpush.msra.mxu0 %v226
    %1526 = vmatpush.msra.mxu0 %v222
    %1527 = vmatpush.msra.mxu0 %v218
    %1528 = vmatpush.msra.mxu0 %v214
    %1529 = vmatmul.f32.gmra.mxu0 %v1292
    %v1530 = vpop.f32.mrf.mxu0
    %v1531 = vadd.f32 %v1451, %v1530
    %1532 = vdwg.mxu0
    %1533 = vmatpush.msra.mxu0 %v275
    %1534 = vmatpush.msra.mxu0 %v271
    %1535 = vmatpush.msra.mxu0 %v267
    %1536 = vmatpush.msra.mxu0 %v263
    %1537 = vmatpush.msra.mxu0 %v259
    %1538 = vmatpush.msra.mxu0 %v255
    %1539 = vmatpush.msra.mxu0 %v251
    %1540 = vmatpush.msra.mxu0 %v247
    %1541 = vmatpush.msra.mxu0 %v243
    %1542 = vmatpush.msra.mxu0 %v239
    %1543 = vmatpush.msra.mxu0 %v235
    %1544 = vmatpush.msra.mxu0 %v231
    %1545 = vmatpush.msra.mxu0 %v227
    %1546 = vmatpush.msra.mxu0 %v223
    %1547 = vmatpush.msra.mxu0 %v219
    %1548 = vmatpush.msra.mxu0 %v215
    %1549 = vmatmul.f32.gmra.mxu0 %v1292
    %v1550 = vpop.f32.mrf.mxu0
    %v1551 = vadd.f32 %v1471, %v1550
    %1552 = vdwg.mxu0
    %1553 = vmatpush.msra.mxu0 %v276
    %1554 = vmatpush.msra.mxu0 %v272
    %1555 = vmatpush.msra.mxu0 %v268
    %1556 = vmatpush.msra.mxu0 %v264
    %1557 = vmatpush.msra.mxu0 %v260
    %1558 = vmatpush.msra.mxu0 %v256
    %1559 = vmatpush.msra.mxu0 %v252
    %1560 = vmatpush.msra.mxu0 %v248
    %1561 = vmatpush.msra.mxu0 %v244
    %1562 = vmatpush.msra.mxu0 %v240
    %1563 = vmatpush.msra.mxu0 %v236
    %1564 = vmatpush.msra.mxu0 %v232
    %1565 = vmatpush.msra.mxu0 %v228
    %1566 = vmatpush.msra.mxu0 %v224
    %1567 = vmatpush.msra.mxu0 %v220
    %1568 = vmatpush.msra.mxu0 %v216
    %1569 = vmatmul.f32.gmra.mxu0 %v1292
    %v1570 = vpop.f32.mrf.mxu0
    %v1571 = vadd.f32 %v1491, %v1570
    %1572 = vdwg.mxu0
    %v1573 = vadd.f32 %v1511, %v197
    %v1574 = vadd.f32 %v1531, %v198
    %v1575 = vadd.f32 %v1551, %v199
    %v1576 = vadd.f32 %v1571, %v200
    %v1577 = vmul.f32 %v1573, 0.5
    %v1578 = vmul.f32 %v1574, 0.5
    %v1579 = vmul.f32 %v1575, 0.5
    %v1580 = vtanh.pop %v1577
    %v1581 = vtanh.pop %v1578
    %v1582 = vtanh.pop %v1579
    %v1583 = vmul.f32 %v1580, 0.5
    %v1584 = vmul.f32 %v1581, 0.5
    %v1585 = vmul.f32 %v1582, 0.5
    %v1586 = vadd.f32 %v1583, 0.5
    %v1587 = vadd.f32 %v1584, 0.5
    %v1588 = vadd.f32 %v1585, 0.5
    %v1589 = vtanh.pop %v1576
    %v1590 = vmul.f32 %v1587, %v1290
    %v1591 = vmul.f32 %v1586, %v1589
    %v1592 = vadd.f32 %v1590, %v1591
    %v1593 = vtanh.pop %v1592
    %v1594 = vmul.f32 %v1588, %v1593
    %1595 = vmatpush.msra.mxu0 %v337
    %1596 = vmatpush.msra.mxu0 %v333
    %1597 = vmatpush.msra.mxu0 %v329
    %1598 = vmatpush.msra.mxu0 %v325
    %1599 = vmatpush.msra.mxu0 %v321
    %1600 = vmatpush.msra.mxu0 %v317
    %1601 = vmatpush.msra.mxu0 %v313
    %1602 = vmatpush.msra.mxu0 %v309
    %1603 = vmatpush.msra.mxu0 %v305
    %1604 = vmatpush.msra.mxu0 %v301
    %1605 = vmatpush.msra.mxu0 %v297
    %1606 = vmatpush.msra.mxu0 %v293
    %1607 = vmatpush.msra.mxu0 %v289
    %1608 = vmatpush.msra.mxu0 %v285
    %1609 = vmatpush.msra.mxu0 %v281
    %1610 = vmatpush.msra.mxu0 %v277
    %1611 = vmatmul.f32.gmra.mxu0 %v1411
    %v1612 = vpop.f32.mrf.mxu0
    %v1613 = vadd.f32 0.0, %v1612
    %1614 = vdwg.mxu0
    %1615 = vmatpush.msra.mxu0 %v338
    %1616 = vmatpush.msra.mxu0 %v334
    %1617 = vmatpush.msra.mxu0 %v330
    %1618 = vmatpush.msra.mxu0 %v326
    %1619 = vmatpush.msra.mxu0 %v322
    %1620 = vmatpush.msra.mxu0 %v318
    %1621 = vmatpush.msra.mxu0 %v314
    %1622 = vmatpush.msra.mxu0 %v310
    %1623 = vmatpush.msra.mxu0 %v306
    %1624 = vmatpush.msra.mxu0 %v302
    %1625 = vmatpush.msra.mxu0 %v298
    %1626 = vmatpush.msra.mxu0 %v294
    %1627 = vmatpush.msra.mxu0 %v290
    %1628 = vmatpush.msra.mxu0 %v286
    %1629 = vmatpush.msra.mxu0 %v282
    %1630 = vmatpush.msra.mxu0 %v278
    %1631 = vmatmul.f32.gmra.mxu0 %v1411
    %v1632 = vpop.f32.mrf.mxu0
    %v1633 = vadd.f32 0.0, %v1632
    %1634 = vdwg.mxu0
    %1635 = vmatpush.msra.mxu0 %v339
    %1636 = vmatpush.msra.mxu0 %v335
    %1637 = vmatpush.msra.mxu0 %v331
    %1638 = vmatpush.msra.mxu0 %v327
    %1639 = vmatpush.msra.mxu0 %v323
    %1640 = vmatpush.msra.mxu0 %v319
    %1641 = vmatpush.msra.mxu0 %v315
    %1642 = vmatpush.msra.mxu0 %v311
    %1643 = vmatpush.msra.mxu0 %v307
    %1644 = vmatpush.msra.mxu0 %v303
    %1645 = vmatpush.msra.mxu0 %v299
    %1646 = vmatpush.msra.mxu0 %v295
    %1647 = vmatpush.msra.mxu0 %v291
    %1648 = vmatpush.msra.mxu0 %v287
    %1649 = vmatpush.msra.mxu0 %v283
    %1650 = vmatpush.msra.mxu0 %v279
    %1651 = vmatmul.f32.gmra.mxu0 %v1411
    %v1652 = vpop.f32.mrf.mxu0
    %v1653 = vadd.f32 0.0, %v1652
    %1654 = vdwg.mxu0
    %1655 = vmatpush.msra.mxu0 %v340
    %1656 = vmatpush.msra.mxu0 %v336
    %1657 = vmatpush.msra.mxu0 %v332
    %1658 = vmatpush.msra.mxu0 %v328
    %1659 = vmatpush.msra.mxu0 %v324
    %1660 = vmatpush.msra.mxu0 %v320
    %1661 = vmatpush.msra.mxu0 %v316
    %1662 = vmatpush.msra.mxu0 %v312
    %1663 = vmatpush.msra.mxu0 %v308
    %1664 = vmatpush.msra.mxu0 %v304
    %1665 = vmatpush.msra.mxu0 %v300
    %1666 = vmatpush.msra.mxu0 %v296
    %1667 = vmatpush.msra.mxu0 %v292
    %1668 = vmatpush.msra.mxu0 %v288
    %1669 = vmatpush.msra.mxu0 %v284
    %1670 = vmatpush.msra.mxu0 %v280
    %1671 = vmatmul.f32.gmra.mxu0 %v1411
    %v1672 = vpop.f32.mrf.mxu0
    %v1673 = vadd.f32 0.0, %v1672
    %1674 = vdwg.mxu0
    %v1675 = vadd.f32 %v124, %v1613
    %v1676 = vadd.f32 %v147, %v1633
    %v1677 = vadd.f32 %v170, %v1653
    %v1678 = vadd.f32 %v193, %v1673
    %v1679 = vmul.f32 %v1675, 0.5
    %v1680 = vmul.f32 %v1676, 0.5
    %v1681 = vmul.f32 %v1677, 0.5
    %v1682 = vtanh.pop %v1679
    %v1683 = vtanh.pop %v1680
    %v1684 = vtanh.pop %v1681
    %v1685 = vmul.f32 %v1682, 0.5
    %v1686 = vmul.f32 %v1683, 0.5
    %v1687 = vmul.f32 %v1684, 0.5
    %v1688 = vadd.f32 %v1685, 0.5
    %v1689 = vadd.f32 %v1686, 0.5
    %v1690 = vadd.f32 %v1687, 0.5
    %v1691 = vtanh.pop %v1678
    %v1693 = vrot.slane %v1407, 6
    %v1695 = vmul.f32 %v1689, %v1693
    %v1696 = vmul.f32 %v1688, %v1691
    %v1697 = vadd.f32 %v1695, %v1696
    %v1698 = vtanh.pop %v1697
    %v1699 = vmul.f32 %v1690, %v1698
    %1700 = vmatpush.msra.mxu0 %v503
    %1701 = vmatpush.msra.mxu0 %v499
    %1702 = vmatpush.msra.mxu0 %v495
    %1703 = vmatpush.msra.mxu0 %v491
    %1704 = vmatpush.msra.mxu0 %v487
    %1705 = vmatpush.msra.mxu0 %v483
    %1706 = vmatpush.msra.mxu0 %v479
    %1707 = vmatpush.msra.mxu0 %v475
    %1708 = vmatpush.msra.mxu0 %v471
    %1709 = vmatpush.msra.mxu0 %v467
    %1710 = vmatpush.msra.mxu0 %v463
    %1711 = vmatpush.msra.mxu0 %v459
    %1712 = vmatpush.msra.mxu0 %v455
    %1713 = vmatpush.msra.mxu0 %v451
    %1714 = vmatpush.msra.mxu0 %v447
    %1715 = vmatpush.msra.mxu0 %v443
    %1716 = vmatmul.f32.gmra.mxu0 %v1699
    %v1717 = vpop.f32.mrf.mxu0
    %v1718 = vadd.f32 0.0, %v1717
    %1719 = vdwg.mxu0
    %1720 = vmatpush.msra.mxu0 %v504
    %1721 = vmatpush.msra.mxu0 %v500
    %1722 = vmatpush.msra.mxu0 %v496
    %1723 = vmatpush.msra.mxu0 %v492
    %1724 = vmatpush.msra.mxu0 %v488
    %1725 = vmatpush.msra.mxu0 %v484
    %1726 = vmatpush.msra.mxu0 %v480
    %1727 = vmatpush.msra.mxu0 %v476
    %1728 = vmatpush.msra.mxu0 %v472
    %1729 = vmatpush.msra.mxu0 %v468
    %1730 = vmatpush.msra.mxu0 %v464
    %1731 = vmatpush.msra.mxu0 %v460
    %1732 = vmatpush.msra.mxu0 %v456
    %1733 = vmatpush.msra.mxu0 %v452
    %1734 = vmatpush.msra.mxu0 %v448
    %1735 = vmatpush.msra.mxu0 %v444
    %1736 = vmatmul.f32.gmra.mxu0 %v1699
    %v1737 = vpop.f32.mrf.mxu0
    %v1738 = vadd.f32 0.0, %v1737
    %1739 = vdwg.mxu0
    %1740 = vmatpush.msra.mxu0 %v505
    %1741 = vmatpush.msra.mxu0 %v501
    %1742 = vmatpush.msra.mxu0 %v497
    %1743 = vmatpush.msra.mxu0 %v493
    %1744 = vmatpush.msra.mxu0 %v489
    %1745 = vmatpush.msra.mxu0 %v485
    %1746 = vmatpush.msra.mxu0 %v481
    %1747 = vmatpush.msra.mxu0 %v477
    %1748 = vmatpush.msra.mxu0 %v473
    %1749 = vmatpush.msra.mxu0 %v469
    %1750 = vmatpush.msra.mxu0 %v465
    %1751 = vmatpush.msra.mxu0 %v461
    %1752 = vmatpush.msra.mxu0 %v457
    %1753 = vmatpush.msra.mxu0 %v453
    %1754 = vmatpush.msra.mxu0 %v449
    %1755 = vmatpush.msra.mxu0 %v445
    %1756 = vmatmul.f32.gmra.mxu0 %v1699
    %v1757 = vpop.f32.mrf.mxu0
    %v1758 = vadd.f32 0.0, %v1757
    %1759 = vdwg.mxu0
    %1760 = vmatpush.msra.mxu0 %v506
    %1761 = vmatpush.msra.mxu0 %v502
    %1762 = vmatpush.msra.mxu0 %v498
    %1763 = vmatpush.msra.mxu0 %v494
    %1764 = vmatpush.msra.mxu0 %v490
    %1765 = vmatpush.msra.mxu0 %v486
    %1766 = vmatpush.msra.mxu0 %v482
    %1767 = vmatpush.msra.mxu0 %v478
    %1768 = vmatpush.msra.mxu0 %v474
    %1769 = vmatpush.msra.mxu0 %v470
    %1770 = vmatpush.msra.mxu0 %v466
    %1771 = vmatpush.msra.mxu0 %v462
    %1772 = vmatpush.msra.mxu0 %v458
    %1773 = vmatpush.msra.mxu0 %v454
    %1774 = vmatpush.msra.mxu0 %v450
    %1775 = vmatpush.msra.mxu0 %v446
    %1776 = vmatmul.f32.gmra.mxu0 %v1699
    %v1777 = vpop.f32.mrf.mxu0
    %v1778 = vadd.f32 0.0, %v1777
    %1779 = vdwg.mxu0
    %1780 = vmatpush.msra.mxu0 %v273
    %1781 = vmatpush.msra.mxu0 %v269
    %1782 = vmatpush.msra.mxu0 %v265
    %1783 = vmatpush.msra.mxu0 %v261
    %1784 = vmatpush.msra.mxu0 %v257
    %1785 = vmatpush.msra.mxu0 %v253
    %1786 = vmatpush.msra.mxu0 %v249
    %1787 = vmatpush.msra.mxu0 %v245
    %1788 = vmatpush.msra.mxu0 %v241
    %1789 = vmatpush.msra.mxu0 %v237
    %1790 = vmatpush.msra.mxu0 %v233
    %1791 = vmatpush.msra.mxu0 %v229
    %1792 = vmatpush.msra.mxu0 %v225
    %1793 = vmatpush.msra.mxu0 %v221
    %1794 = vmatpush.msra.mxu0 %v217
    %1795 = vmatpush.msra.mxu0 %v213
    %1796 = vmatmul.f32.gmra.mxu0 %v1594
    %v1797 = vpop.f32.mrf.mxu0
    %v1798 = vadd.f32 %v1718, %v1797
    %1799 = vdwg.mxu0
    %1800 = vmatpush.msra.mxu0 %v274
    %1801 = vmatpush.msra.mxu0 %v270
    %1802 = vmatpush.msra.mxu0 %v266
    %1803 = vmatpush.msra.mxu0 %v262
    %1804 = vmatpush.msra.mxu0 %v258
    %1805 = vmatpush.msra.mxu0 %v254
    %1806 = vmatpush.msra.mxu0 %v250
    %1807 = vmatpush.msra.mxu0 %v246
    %1808 = vmatpush.msra.mxu0 %v242
    %1809 = vmatpush.msra.mxu0 %v238
    %1810 = vmatpush.msra.mxu0 %v234
    %1811 = vmatpush.msra.mxu0 %v230
    %1812 = vmatpush.msra.mxu0 %v226
    %1813 = vmatpush.msra.mxu0 %v222
    %1814 = vmatpush.msra.mxu0 %v218
    %1815 = vmatpush.msra.mxu0 %v214
    %1816 = vmatmul.f32.gmra.mxu0 %v1594
    %v1817 = vpop.f32.mrf.mxu0
    %v1818 = vadd.f32 %v1738, %v1817
    %1819 = vdwg.mxu0
    %1820 = vmatpush.msra.mxu0 %v275
    %1821 = vmatpush.msra.mxu0 %v271
    %1822 = vmatpush.msra.mxu0 %v267
    %1823 = vmatpush.msra.mxu0 %v263
    %1824 = vmatpush.msra.mxu0 %v259
    %1825 = vmatpush.msra.mxu0 %v255
    %1826 = vmatpush.msra.mxu0 %v251
    %1827 = vmatpush.msra.mxu0 %v247
    %1828 = vmatpush.msra.mxu0 %v243
    %1829 = vmatpush.msra.mxu0 %v239
    %1830 = vmatpush.msra.mxu0 %v235
    %1831 = vmatpush.msra.mxu0 %v231
    %1832 = vmatpush.msra.mxu0 %v227
    %1833 = vmatpush.msra.mxu0 %v223
    %1834 = vmatpush.msra.mxu0 %v219
    %1835 = vmatpush.msra.mxu0 %v215
    %1836 = vmatmul.f32.gmra.mxu0 %v1594
    %v1837 = vpop.f32.mrf.mxu0
    %v1838 = vadd.f32 %v1758, %v1837
    %1839 = vdwg.mxu0
    %1840 = vmatpush.msra.mxu0 %v276
    %1841 = vmatpush.msra.mxu0 %v272
    %1842 = vmatpush.msra.mxu0 %v268
    %1843 = vmatpush.msra.mxu0 %v264
    %1844 = vmatpush.msra.mxu0 %v260
    %1845 = vmatpush.msra.mxu0 %v256
    %1846 = vmatpush.msra.mxu0 %v252
    %1847 = vmatpush.msra.mxu0 %v248
    %1848 = vmatpush.msra.mxu0 %v244
    %1849 = vmatpush.msra.mxu0 %v240
    %1850 = vmatpush.msra.mxu0 %v236
    %1851 = vmatpush.msra.mxu0 %v232
    %1852 = vmatpush.msra.mxu0 %v228
    %1853 = vmatpush.msra.mxu0 %v224
    %1854 = vmatpush.msra.mxu0 %v220
    %1855 = vmatpush.msra.mxu0 %v216
    %1856 = vmatmul.f32.gmra.mxu0 %v1594
    %v1857 = vpop.f32.mrf.mxu0
    %v1858 = vadd.f32 %v1778, %v1857
    %1859 = vdwg.mxu0
    %v1860 = vadd.f32 %v1798, %v197
    %v1861 = vadd.f32 %v1818, %v198
    %v1862 = vadd.f32 %v1838, %v199
    %v1863 = vadd.f32 %v1858, %v200
    %v1864 = vmul.f32 %v1860, 0.5
    %v1865 = vmul.f32 %v1861, 0.5
    %v1866 = vmul.f32 %v1862, 0.5
    %v1867 = vtanh.pop %v1864
    %v1868 = vtanh.pop %v1865
    %v1869 = vtanh.pop %v1866
    %v1870 = vmul.f32 %v1867, 0.5
    %v1871 = vmul.f32 %v1868, 0.5
    %v1872 = vmul.f32 %v1869, 0.5
    %v1873 = vadd.f32 %v1870, 0.5
    %v1874 = vadd.f32 %v1871, 0.5
    %v1875 = vadd.f32 %v1872, 0.5
    %v1876 = vtanh.pop %v1863
    %v1877 = vmul.f32 %v1874, %v1592
    %v1878 = vmul.f32 %v1873, %v1876
    %v1879 = vadd.f32 %v1877, %v1878
    %v1880 = vtanh.pop %v1879
    %v1881 = vmul.f32 %v1875, %v1880
    %1882 = vmatpush.msra.mxu0 %v337
    %1883 = vmatpush.msra.mxu0 %v333
    %1884 = vmatpush.msra.mxu0 %v329
    %1885 = vmatpush.msra.mxu0 %v325
    %1886 = vmatpush.msra.mxu0 %v321
    %1887 = vmatpush.msra.mxu0 %v317
    %1888 = vmatpush.msra.mxu0 %v313
    %1889 = vmatpush.msra.mxu0 %v309
    %1890 = vmatpush.msra.mxu0 %v305
    %1891 = vmatpush.msra.mxu0 %v301
    %1892 = vmatpush.msra.mxu0 %v297
    %1893 = vmatpush.msra.mxu0 %v293
    %1894 = vmatpush.msra.mxu0 %v289
    %1895 = vmatpush.msra.mxu0 %v285
    %1896 = vmatpush.msra.mxu0 %v281
    %1897 = vmatpush.msra.mxu0 %v277
    %1898 = vmatmul.f32.gmra.mxu0 %v1699
    %v1899 = vpop.f32.mrf.mxu0
    %v1900 = vadd.f32 0.0, %v1899
    %1901 = vdwg.mxu0
    %1902 = vmatpush.msra.mxu0 %v338
    %1903 = vmatpush.msra.mxu0 %v334
    %1904 = vmatpush.msra.mxu0 %v330
    %1905 = vmatpush.msra.mxu0 %v326
    %1906 = vmatpush.msra.mxu0 %v322
    %1907 = vmatpush.msra.mxu0 %v318
    %1908 = vmatpush.msra.mxu0 %v314
    %1909 = vmatpush.msra.mxu0 %v310
    %1910 = vmatpush.msra.mxu0 %v306
    %1911 = vmatpush.msra.mxu0 %v302
    %1912 = vmatpush.msra.mxu0 %v298
    %1913 = vmatpush.msra.mxu0 %v294
    %1914 = vmatpush.msra.mxu0 %v290
    %1915 = vmatpush.msra.mxu0 %v286
    %1916 = vmatpush.msra.mxu0 %v282
    %1917 = vmatpush.msra.mxu0 %v278
    %1918 = vmatmul.f32.gmra.mxu0 %v1699
    %v1919 = vpop.f32.mrf.mxu0
    %v1920 = vadd.f32 0.0, %v1919
    %1921 = vdwg.mxu0
    %1922 = vmatpush.msra.mxu0 %v339
    %1923 = vmatpush.msra.mxu0 %v335
    %1924 = vmatpush.msra.mxu0 %v331
    %1925 = vmatpush.msra.mxu0 %v327
    %1926 = vmatpush.msra.mxu0 %v323
    %1927 = vmatpush.msra.mxu0 %v319
    %1928 = vmatpush.msra.mxu0 %v315
    %1929 = vmatpush.msra.mxu0 %v311
    %1930 = vmatpush.msra.mxu0 %v307
    %1931 = vmatpush.msra.mxu0 %v303
    %1932 = vmatpush.msra.mxu0 %v299
    %1933 = vmatpush.msra.mxu0 %v295
    %1934 = vmatpush.msra.mxu0 %v291
    %1935 = vmatpush.msra.mxu0 %v287
    %1936 = vmatpush.msra.mxu0 %v283
    %1937 = vmatpush.msra.mxu0 %v279
    %1938 = vmatmul.f32.gmra.mxu0 %v1699
    %v1939 = vpop.f32.mrf.mxu0
    %v1940 = vadd.f32 0.0, %v1939
    %1941 = vdwg.mxu0
    %1942 = vmatpush.msra.mxu0 %v340
    %1943 = vmatpush.msra.mxu0 %v336
    %1944 = vmatpush.msra.mxu0 %v332
    %1945 = vmatpush.msra.mxu0 %v328
    %1946 = vmatpush.msra.mxu0 %v324
    %1947 = vmatpush.msra.mxu0 %v320
    %1948 = vmatpush.msra.mxu0 %v316
    %1949 = vmatpush.msra.mxu0 %v312
    %1950 = vmatpush.msra.mxu0 %v308
    %1951 = vmatpush.msra.mxu0 %v304
    %1952 = vmatpush.msra.mxu0 %v300
    %1953 = vmatpush.msra.mxu0 %v296
    %1954 = vmatpush.msra.mxu0 %v292
    %1955 = vmatpush.msra.mxu0 %v288
    %1956 = vmatpush.msra.mxu0 %v284
    %1957 = vmatpush.msra.mxu0 %v280
    %1958 = vmatmul.f32.gmra.mxu0 %v1699
    %v1959 = vpop.f32.mrf.mxu0
    %v1960 = vadd.f32 0.0, %v1959
    %1961 = vdwg.mxu0
    %v1966 = vrot.slane %v1900, 6
    %v1967 = vrot.slane %v1920, 6
    %v1968 = vrot.slane %v1940, 6
    %v1969 = vrot.slane %v1960, 6
    %v1974 = vadd.f32 %v124, %v1966
    %v1975 = vadd.f32 %v147, %v1967
    %v1976 = vadd.f32 %v170, %v1968
    %v1977 = vadd.f32 %v193, %v1969
    %v1978 = vmul.f32 %v1974, 0.5
    %v1979 = vmul.f32 %v1975, 0.5
    %v1980 = vmul.f32 %v1976, 0.5
    %v1981 = vtanh.pop %v1978
    %v1982 = vtanh.pop %v1979
    %v1983 = vtanh.pop %v1980
    %v1984 = vmul.f32 %v1981, 0.5
    %v1985 = vmul.f32 %v1982, 0.5
    %v1986 = vmul.f32 %v1983, 0.5
    %v1987 = vadd.f32 %v1984, 0.5
    %v1988 = vadd.f32 %v1985, 0.5
    %v1989 = vadd.f32 %v1986, 0.5
    %v1990 = vtanh.pop %v1977
    %v1992 = vrot.slane %v1697, 6
    %v1994 = vmul.f32 %v1988, %v1992
    %v1995 = vmul.f32 %v1987, %v1990
    %v1996 = vadd.f32 %v1994, %v1995
    %v1997 = vtanh.pop %v1996
    %v1998 = vmul.f32 %v1989, %v1997
    %v2000 = vrot.slane %v1998, 2
    %2002 = vmatpush.msra.mxu0 %v503
    %2003 = vmatpush.msra.mxu0 %v499
    %2004 = vmatpush.msra.mxu0 %v495
    %2005 = vmatpush.msra.mxu0 %v491
    %2006 = vmatpush.msra.mxu0 %v487
    %2007 = vmatpush.msra.mxu0 %v483
    %2008 = vmatpush.msra.mxu0 %v479
    %2009 = vmatpush.msra.mxu0 %v475
    %2010 = vmatpush.msra.mxu0 %v471
    %2011 = vmatpush.msra.mxu0 %v467
    %2012 = vmatpush.msra.mxu0 %v463
    %2013 = vmatpush.msra.mxu0 %v459
    %2014 = vmatpush.msra.mxu0 %v455
    %2015 = vmatpush.msra.mxu0 %v451
    %2016 = vmatpush.msra.mxu0 %v447
    %2017 = vmatpush.msra.mxu0 %v443
    %2018 = vmatmul.f32.gmra.mxu0 %v2000
    %v2019 = vpop.f32.mrf.mxu0
    %v2020 = vadd.f32 0.0, %v2019
    %2021 = vdwg.mxu0
    %2022 = vmatpush.msra.mxu0 %v504
    %2023 = vmatpush.msra.mxu0 %v500
    %2024 = vmatpush.msra.mxu0 %v496
    %2025 = vmatpush.msra.mxu0 %v492
    %2026 = vmatpush.msra.mxu0 %v488
    %2027 = vmatpush.msra.mxu0 %v484
    %2028 = vmatpush.msra.mxu0 %v480
    %2029 = vmatpush.msra.mxu0 %v476
    %2030 = vmatpush.msra.mxu0 %v472
    %2031 = vmatpush.msra.mxu0 %v468
    %2032 = vmatpush.msra.mxu0 %v464
    %2033 = vmatpush.msra.mxu0 %v460
    %2034 = vmatpush.msra.mxu0 %v456
    %2035 = vmatpush.msra.mxu0 %v452
    %2036 = vmatpush.msra.mxu0 %v448
    %2037 = vmatpush.msra.mxu0 %v444
    %2038 = vmatmul.f32.gmra.mxu0 %v2000
    %v2039 = vpop.f32.mrf.mxu0
    %v2040 = vadd.f32 0.0, %v2039
    %2041 = vdwg.mxu0
    %2042 = vmatpush.msra.mxu0 %v505
    %2043 = vmatpush.msra.mxu0 %v501
    %2044 = vmatpush.msra.mxu0 %v497
    %2045 = vmatpush.msra.mxu0 %v493
    %2046 = vmatpush.msra.mxu0 %v489
    %2047 = vmatpush.msra.mxu0 %v485
    %2048 = vmatpush.msra.mxu0 %v481
    %2049 = vmatpush.msra.mxu0 %v477
    %2050 = vmatpush.msra.mxu0 %v473
    %2051 = vmatpush.msra.mxu0 %v469
    %2052 = vmatpush.msra.mxu0 %v465
    %2053 = vmatpush.msra.mxu0 %v461
    %2054 = vmatpush.msra.mxu0 %v457
    %2055 = vmatpush.msra.mxu0 %v453
    %2056 = vmatpush.msra.mxu0 %v449
    %2057 = vmatpush.msra.mxu0 %v445
    %2058 = vmatmul.f32.gmra.mxu0 %v2000
    %v2059 = vpop.f32.mrf.mxu0
    %v2060 = vadd.f32 0.0, %v2059
    %2061 = vdwg.mxu0
    %2062 = vmatpush.msra.mxu0 %v506
    %2063 = vmatpush.msra.mxu0 %v502
    %2064 = vmatpush.msra.mxu0 %v498
    %2065 = vmatpush.msra.mxu0 %v494
    %2066 = vmatpush.msra.mxu0 %v490
    %2067 = vmatpush.msra.mxu0 %v486
    %2068 = vmatpush.msra.mxu0 %v482
    %2069 = vmatpush.msra.mxu0 %v478
    %2070 = vmatpush.msra.mxu0 %v474
    %2071 = vmatpush.msra.mxu0 %v470
    %2072 = vmatpush.msra.mxu0 %v466
    %2073 = vmatpush.msra.mxu0 %v462
    %2074 = vmatpush.msra.mxu0 %v458
    %2075 = vmatpush.msra.mxu0 %v454
    %2076 = vmatpush.msra.mxu0 %v450
    %2077 = vmatpush.msra.mxu0 %v446
    %2078 = vmatmul.f32.gmra.mxu0 %v2000
    %v2079 = vpop.f32.mrf.mxu0
    %v2080 = vadd.f32 0.0, %v2079
    %2081 = vdwg.mxu0
    %2082 = vmatpush.msra.mxu0 %v273
    %2083 = vmatpush.msra.mxu0 %v269
    %2084 = vmatpush.msra.mxu0 %v265
    %2085 = vmatpush.msra.mxu0 %v261
    %2086 = vmatpush.msra.mxu0 %v257
    %2087 = vmatpush.msra.mxu0 %v253
    %2088 = vmatpush.msra.mxu0 %v249
    %2089 = vmatpush.msra.mxu0 %v245
    %2090 = vmatpush.msra.mxu0 %v241
    %2091 = vmatpush.msra.mxu0 %v237
    %2092 = vmatpush.msra.mxu0 %v233
    %2093 = vmatpush.msra.mxu0 %v229
    %2094 = vmatpush.msra.mxu0 %v225
    %2095 = vmatpush.msra.mxu0 %v221
    %2096 = vmatpush.msra.mxu0 %v217
    %2097 = vmatpush.msra.mxu0 %v213
    %2098 = vmatmul.f32.gmra.mxu0 %v1881
    %v2099 = vpop.f32.mrf.mxu0
    %v2100 = vadd.f32 %v2020, %v2099
    %2101 = vdwg.mxu0
    %2102 = vmatpush.msra.mxu0 %v274
    %2103 = vmatpush.msra.mxu0 %v270
    %2104 = vmatpush.msra.mxu0 %v266
    %2105 = vmatpush.msra.mxu0 %v262
    %2106 = vmatpush.msra.mxu0 %v258
    %2107 = vmatpush.msra.mxu0 %v254
    %2108 = vmatpush.msra.mxu0 %v250
    %2109 = vmatpush.msra.mxu0 %v246
    %2110 = vmatpush.msra.mxu0 %v242
    %2111 = vmatpush.msra.mxu0 %v238
    %2112 = vmatpush.msra.mxu0 %v234
    %2113 = vmatpush.msra.mxu0 %v230
    %2114 = vmatpush.msra.mxu0 %v226
    %2115 = vmatpush.msra.mxu0 %v222
    %2116 = vmatpush.msra.mxu0 %v218
    %2117 = vmatpush.msra.mxu0 %v214
    %2118 = vmatmul.f32.gmra.mxu0 %v1881
    %v2119 = vpop.f32.mrf.mxu0
    %v2120 = vadd.f32 %v2040, %v2119
    %2121 = vdwg.mxu0
    %2122 = vmatpush.msra.mxu0 %v275
    %2123 = vmatpush.msra.mxu0 %v271
    %2124 = vmatpush.msra.mxu0 %v267
    %2125 = vmatpush.msra.mxu0 %v263
    %2126 = vmatpush.msra.mxu0 %v259
    %2127 = vmatpush.msra.mxu0 %v255
    %2128 = vmatpush.msra.mxu0 %v251
    %2129 = vmatpush.msra.mxu0 %v247
    %2130 = vmatpush.msra.mxu0 %v243
    %2131 = vmatpush.msra.mxu0 %v239
    %2132 = vmatpush.msra.mxu0 %v235
    %2133 = vmatpush.msra.mxu0 %v231
    %2134 = vmatpush.msra.mxu0 %v227
    %2135 = vmatpush.msra.mxu0 %v223
    %2136 = vmatpush.msra.mxu0 %v219
    %2137 = vmatpush.msra.mxu0 %v215
    %2138 = vmatmul.f32.gmra.mxu0 %v1881
    %v2139 = vpop.f32.mrf.mxu0
    %v2140 = vadd.f32 %v2060, %v2139
    %2141 = vdwg.mxu0
    %2142 = vmatpush.msra.mxu0 %v276
    %2143 = vmatpush.msra.mxu0 %v272
    %2144 = vmatpush.msra.mxu0 %v268
    %2145 = vmatpush.msra.mxu0 %v264
    %2146 = vmatpush.msra.mxu0 %v260
    %2147 = vmatpush.msra.mxu0 %v256
    %2148 = vmatpush.msra.mxu0 %v252
    %2149 = vmatpush.msra.mxu0 %v248
    %2150 = vmatpush.msra.mxu0 %v244
    %2151 = vmatpush.msra.mxu0 %v240
    %2152 = vmatpush.msra.mxu0 %v236
    %2153 = vmatpush.msra.mxu0 %v232
    %2154 = vmatpush.msra.mxu0 %v228
    %2155 = vmatpush.msra.mxu0 %v224
    %2156 = vmatpush.msra.mxu0 %v220
    %2157 = vmatpush.msra.mxu0 %v216
    %2158 = vmatmul.f32.gmra.mxu0 %v1881
    %v2159 = vpop.f32.mrf.mxu0
    %v2160 = vadd.f32 %v2080, %v2159
    %2161 = vdwg.mxu0
    %v2162 = vadd.f32 %v2100, %v197
    %v2163 = vadd.f32 %v2120, %v198
    %v2164 = vadd.f32 %v2140, %v199
    %v2165 = vadd.f32 %v2160, %v200
    %v2166 = vmul.f32 %v2162, 0.5
    %v2167 = vmul.f32 %v2163, 0.5
    %v2168 = vmul.f32 %v2164, 0.5
    %v2169 = vtanh.pop %v2166
    %v2170 = vtanh.pop %v2167
    %v2171 = vtanh.pop %v2168
    %v2172 = vmul.f32 %v2169, 0.5
    %v2173 = vmul.f32 %v2170, 0.5
    %v2174 = vmul.f32 %v2171, 0.5
    %v2175 = vadd.f32 %v2172, 0.5
    %v2176 = vadd.f32 %v2173, 0.5
    %v2177 = vadd.f32 %v2174, 0.5
    %v2178 = vtanh.pop %v2165
    %v2179 = vmul.f32 %v2176, %v1879
    %v2180 = vmul.f32 %v2175, %v2178
    %v2181 = vadd.f32 %v2179, %v2180
    %v2182 = vtanh.pop %v2181
    %v2183 = vmul.f32 %v2177, %v2182
    %2184 = vmatpush.msra.mxu0 %v337
    %2185 = vmatpush.msra.mxu0 %v333
    %2186 = vmatpush.msra.mxu0 %v329
    %2187 = vmatpush.msra.mxu0 %v325
    %2188 = vmatpush.msra.mxu0 %v321
    %2189 = vmatpush.msra.mxu0 %v317
    %2190 = vmatpush.msra.mxu0 %v313
    %2191 = vmatpush.msra.mxu0 %v309
    %2192 = vmatpush.msra.mxu0 %v305
    %2193 = vmatpush.msra.mxu0 %v301
    %2194 = vmatpush.msra.mxu0 %v297
    %2195 = vmatpush.msra.mxu0 %v293
    %2196 = vmatpush.msra.mxu0 %v289
    %2197 = vmatpush.msra.mxu0 %v285
    %2198 = vmatpush.msra.mxu0 %v281
    %2199 = vmatpush.msra.mxu0 %v277
    %2200 = vmatmul.f32.gmra.mxu0 %v2000
    %v2201 = vpop.f32.mrf.mxu0
    %v2202 = vadd.f32 0.0, %v2201
    %2203 = vdwg.mxu0
    %2204 = vmatpush.msra.mxu0 %v338
    %2205 = vmatpush.msra.mxu0 %v334
    %2206 = vmatpush.msra.mxu0 %v330
    %2207 = vmatpush.msra.mxu0 %v326
    %2208 = vmatpush.msra.mxu0 %v322
    %2209 = vmatpush.msra.mxu0 %v318
    %2210 = vmatpush.msra.mxu0 %v314
    %2211 = vmatpush.msra.mxu0 %v310
    %2212 = vmatpush.msra.mxu0 %v306
    %2213 = vmatpush.msra.mxu0 %v302
    %2214 = vmatpush.msra.mxu0 %v298
    %2215 = vmatpush.msra.mxu0 %v294
    %2216 = vmatpush.msra.mxu0 %v290
    %2217 = vmatpush.msra.mxu0 %v286
    %2218 = vmatpush.msra.mxu0 %v282
    %2219 = vmatpush.msra.mxu0 %v278
    %2220 = vmatmul.f32.gmra.mxu0 %v2000
    %v2221 = vpop.f32.mrf.mxu0
    %v2222 = vadd.f32 0.0, %v2221
    %2223 = vdwg.mxu0
    %2224 = vmatpush.msra.mxu0 %v339
    %2225 = vmatpush.msra.mxu0 %v335
    %2226 = vmatpush.msra.mxu0 %v331
    %2227 = vmatpush.msra.mxu0 %v327
    %2228 = vmatpush.msra.mxu0 %v323
    %2229 = vmatpush.msra.mxu0 %v319
    %2230 = vmatpush.msra.mxu0 %v315
    %2231 = vmatpush.msra.mxu0 %v311
    %2232 = vmatpush.msra.mxu0 %v307
    %2233 = vmatpush.msra.mxu0 %v303
    %2234 = vmatpush.msra.mxu0 %v299
    %2235 = vmatpush.msra.mxu0 %v295
    %2236 = vmatpush.msra.mxu0 %v291
    %2237 = vmatpush.msra.mxu0 %v287
    %2238 = vmatpush.msra.mxu0 %v283
    %2239 = vmatpush.msra.mxu0 %v279
    %2240 = vmatmul.f32.gmra.mxu0 %v2000
    %v2241 = vpop.f32.mrf.mxu0
    %v2242 = vadd.f32 0.0, %v2241
    %2243 = vdwg.mxu0
    %2244 = vmatpush.msra.mxu0 %v340
    %2245 = vmatpush.msra.mxu0 %v336
    %2246 = vmatpush.msra.mxu0 %v332
    %2247 = vmatpush.msra.mxu0 %v328
    %2248 = vmatpush.msra.mxu0 %v324
    %2249 = vmatpush.msra.mxu0 %v320
    %2250 = vmatpush.msra.mxu0 %v316
    %2251 = vmatpush.msra.mxu0 %v312
    %2252 = vmatpush.msra.mxu0 %v308
    %2253 = vmatpush.msra.mxu0 %v304
    %2254 = vmatpush.msra.mxu0 %v300
    %2255 = vmatpush.msra.mxu0 %v296
    %2256 = vmatpush.msra.mxu0 %v292
    %2257 = vmatpush.msra.mxu0 %v288
    %2258 = vmatpush.msra.mxu0 %v284
    %2259 = vmatpush.msra.mxu0 %v280
    %2260 = vmatmul.f32.gmra.mxu0 %v2000
    %v2261 = vpop.f32.mrf.mxu0
    %v2262 = vadd.f32 0.0, %v2261
    %2263 = vdwg.mxu0
    %v2268 = vrot.slane %v2202, 4
    %v2269 = vrot.slane %v2222, 4
    %v2270 = vrot.slane %v2242, 4
    %v2271 = vrot.slane %v2262, 4
    %v2276 = vadd.f32 %v124, %v2268
    %v2277 = vadd.f32 %v147, %v2269
    %v2278 = vadd.f32 %v170, %v2270
    %v2279 = vadd.f32 %v193, %v2271
    %v2280 = vmul.f32 %v2276, 0.5
    %v2281 = vmul.f32 %v2277, 0.5
    %v2282 = vmul.f32 %v2278, 0.5
    %v2283 = vtanh.pop %v2280
    %v2284 = vtanh.pop %v2281
    %v2285 = vtanh.pop %v2282
    %v2286 = vmul.f32 %v2283, 0.5
    %v2287 = vmul.f32 %v2284, 0.5
    %v2288 = vmul.f32 %v2285, 0.5
    %v2289 = vadd.f32 %v2286, 0.5
    %v2290 = vadd.f32 %v2287, 0.5
    %v2291 = vadd.f32 %v2288, 0.5
    %v2292 = vtanh.pop %v2279
    %v2294 = vrot.slane %v1996, 6
    %v2296 = vmul.f32 %v2290, %v2294
    %v2297 = vmul.f32 %v2289, %v2292
    %v2298 = vadd.f32 %v2296, %v2297
    %v2299 = vtanh.pop %v2298
    %v2300 = vmul.f32 %v2291, %v2299
    %v2302 = vrot.slane %v2300, 4
    %2304 = vmatpush.msra.mxu0 %v503
    %2305 = vmatpush.msra.mxu0 %v499
    %2306 = vmatpush.msra.mxu0 %v495
    %2307 = vmatpush.msra.mxu0 %v491
    %2308 = vmatpush.msra.mxu0 %v487
    %2309 = vmatpush.msra.mxu0 %v483
    %2310 = vmatpush.msra.mxu0 %v479
    %2311 = vmatpush.msra.mxu0 %v475
    %2312 = vmatpush.msra.mxu0 %v471
    %2313 = vmatpush.msra.mxu0 %v467
    %2314 = vmatpush.msra.mxu0 %v463
    %2315 = vmatpush.msra.mxu0 %v459
    %2316 = vmatpush.msra.mxu0 %v455
    %2317 = vmatpush.msra.mxu0 %v451
    %2318 = vmatpush.msra.mxu0 %v447
    %2319 = vmatpush.msra.mxu0 %v443
    %2320 = vmatmul.f32.gmra.mxu0 %v2302
    %v2321 = vpop.f32.mrf.mxu0
    %v2322 = vadd.f32 0.0, %v2321
    %2323 = vdwg.mxu0
    %2324 = vmatpush.msra.mxu0 %v504
    %2325 = vmatpush.msra.mxu0 %v500
    %2326 = vmatpush.msra.mxu0 %v496
    %2327 = vmatpush.msra.mxu0 %v492
    %2328 = vmatpush.msra.mxu0 %v488
    %2329 = vmatpush.msra.mxu0 %v484
    %2330 = vmatpush.msra.mxu0 %v480
    %2331 = vmatpush.msra.mxu0 %v476
    %2332 = vmatpush.msra.mxu0 %v472
    %2333 = vmatpush.msra.mxu0 %v468
    %2334 = vmatpush.msra.mxu0 %v464
    %2335 = vmatpush.msra.mxu0 %v460
    %2336 = vmatpush.msra.mxu0 %v456
    %2337 = vmatpush.msra.mxu0 %v452
    %2338 = vmatpush.msra.mxu0 %v448
    %2339 = vmatpush.msra.mxu0 %v444
    %2340 = vmatmul.f32.gmra.mxu0 %v2302
    %v2341 = vpop.f32.mrf.mxu0
    %v2342 = vadd.f32 0.0, %v2341
    %2343 = vdwg.mxu0
    %2344 = vmatpush.msra.mxu0 %v505
    %2345 = vmatpush.msra.mxu0 %v501
    %2346 = vmatpush.msra.mxu0 %v497
    %2347 = vmatpush.msra.mxu0 %v493
    %2348 = vmatpush.msra.mxu0 %v489
    %2349 = vmatpush.msra.mxu0 %v485
    %2350 = vmatpush.msra.mxu0 %v481
    %2351 = vmatpush.msra.mxu0 %v477
    %2352 = vmatpush.msra.mxu0 %v473
    %2353 = vmatpush.msra.mxu0 %v469
    %2354 = vmatpush.msra.mxu0 %v465
    %2355 = vmatpush.msra.mxu0 %v461
    %2356 = vmatpush.msra.mxu0 %v457
    %2357 = vmatpush.msra.mxu0 %v453
    %2358 = vmatpush.msra.mxu0 %v449
    %2359 = vmatpush.msra.mxu0 %v445
    %2360 = vmatmul.f32.gmra.mxu0 %v2302
    %v2361 = vpop.f32.mrf.mxu0
    %v2362 = vadd.f32 0.0, %v2361
    %2363 = vdwg.mxu0
    %2364 = vmatpush.msra.mxu0 %v506
    %2365 = vmatpush.msra.mxu0 %v502
    %2366 = vmatpush.msra.mxu0 %v498
    %2367 = vmatpush.msra.mxu0 %v494
    %2368 = vmatpush.msra.mxu0 %v490
    %2369 = vmatpush.msra.mxu0 %v486
    %2370 = vmatpush.msra.mxu0 %v482
    %2371 = vmatpush.msra.mxu0 %v478
    %2372 = vmatpush.msra.mxu0 %v474
    %2373 = vmatpush.msra.mxu0 %v470
    %2374 = vmatpush.msra.mxu0 %v466
    %2375 = vmatpush.msra.mxu0 %v462
    %2376 = vmatpush.msra.mxu0 %v458
    %2377 = vmatpush.msra.mxu0 %v454
    %2378 = vmatpush.msra.mxu0 %v450
    %2379 = vmatpush.msra.mxu0 %v446
    %2380 = vmatmul.f32.gmra.mxu0 %v2302
    %v2381 = vpop.f32.mrf.mxu0
    %v2382 = vadd.f32 0.0, %v2381
    %2383 = vdwg.mxu0
    %2384 = vmatpush.msra.mxu0 %v273
    %2385 = vmatpush.msra.mxu0 %v269
    %2386 = vmatpush.msra.mxu0 %v265
    %2387 = vmatpush.msra.mxu0 %v261
    %2388 = vmatpush.msra.mxu0 %v257
    %2389 = vmatpush.msra.mxu0 %v253
    %2390 = vmatpush.msra.mxu0 %v249
    %2391 = vmatpush.msra.mxu0 %v245
    %2392 = vmatpush.msra.mxu0 %v241
    %2393 = vmatpush.msra.mxu0 %v237
    %2394 = vmatpush.msra.mxu0 %v233
    %2395 = vmatpush.msra.mxu0 %v229
    %2396 = vmatpush.msra.mxu0 %v225
    %2397 = vmatpush.msra.mxu0 %v221
    %2398 = vmatpush.msra.mxu0 %v217
    %2399 = vmatpush.msra.mxu0 %v213
    %2400 = vmatmul.f32.gmra.mxu0 %v2183
    %v2401 = vpop.f32.mrf.mxu0
    %v2402 = vadd.f32 %v2322, %v2401
    %2403 = vdwg.mxu0
    %2404 = vmatpush.msra.mxu0 %v274
    %2405 = vmatpush.msra.mxu0 %v270
    %2406 = vmatpush.msra.mxu0 %v266
    %2407 = vmatpush.msra.mxu0 %v262
    %2408 = vmatpush.msra.mxu0 %v258
    %2409 = vmatpush.msra.mxu0 %v254
    %2410 = vmatpush.msra.mxu0 %v250
    %2411 = vmatpush.msra.mxu0 %v246
    %2412 = vmatpush.msra.mxu0 %v242
    %2413 = vmatpush.msra.mxu0 %v238
    %2414 = vmatpush.msra.mxu0 %v234
    %2415 = vmatpush.msra.mxu0 %v230
    %2416 = vmatpush.msra.mxu0 %v226
    %2417 = vmatpush.msra.mxu0 %v222
    %2418 = vmatpush.msra.mxu0 %v218
    %2419 = vmatpush.msra.mxu0 %v214
    %2420 = vmatmul.f32.gmra.mxu0 %v2183
    %v2421 = vpop.f32.mrf.mxu0
    %v2422 = vadd.f32 %v2342, %v2421
    %2423 = vdwg.mxu0
    %2424 = vmatpush.msra.mxu0 %v275
    %2425 = vmatpush.msra.mxu0 %v271
    %2426 = vmatpush.msra.mxu0 %v267
    %2427 = vmatpush.msra.mxu0 %v263
    %2428 = vmatpush.msra.mxu0 %v259
    %2429 = vmatpush.msra.mxu0 %v255
    %2430 = vmatpush.msra.mxu0 %v251
    %2431 = vmatpush.msra.mxu0 %v247
    %2432 = vmatpush.msra.mxu0 %v243
    %2433 = vmatpush.msra.mxu0 %v239
    %2434 = vmatpush.msra.mxu0 %v235
    %2435 = vmatpush.msra.mxu0 %v231
    %2436 = vmatpush.msra.mxu0 %v227
    %2437 = vmatpush.msra.mxu0 %v223
    %2438 = vmatpush.msra.mxu0 %v219
    %2439 = vmatpush.msra.mxu0 %v215
    %2440 = vmatmul.f32.gmra.mxu0 %v2183
    %v2441 = vpop.f32.mrf.mxu0
    %v2442 = vadd.f32 %v2362, %v2441
    %2443 = vdwg.mxu0
    %2444 = vmatpush.msra.mxu0 %v276
    %2445 = vmatpush.msra.mxu0 %v272
    %2446 = vmatpush.msra.mxu0 %v268
    %2447 = vmatpush.msra.mxu0 %v264
    %2448 = vmatpush.msra.mxu0 %v260
    %2449 = vmatpush.msra.mxu0 %v256
    %2450 = vmatpush.msra.mxu0 %v252
    %2451 = vmatpush.msra.mxu0 %v248
    %2452 = vmatpush.msra.mxu0 %v244
    %2453 = vmatpush.msra.mxu0 %v240
    %2454 = vmatpush.msra.mxu0 %v236
    %2455 = vmatpush.msra.mxu0 %v232
    %2456 = vmatpush.msra.mxu0 %v228
    %2457 = vmatpush.msra.mxu0 %v224
    %2458 = vmatpush.msra.mxu0 %v220
    %2459 = vmatpush.msra.mxu0 %v216
    %2460 = vmatmul.f32.gmra.mxu0 %v2183
    %v2461 = vpop.f32.mrf.mxu0
    %v2462 = vadd.f32 %v2382, %v2461
    %2463 = vdwg.mxu0
    %v2464 = vadd.f32 %v2402, %v197
    %v2465 = vadd.f32 %v2422, %v198
    %v2466 = vadd.f32 %v2442, %v199
    %v2467 = vadd.f32 %v2462, %v200
    %v2468 = vmul.f32 %v2464, 0.5
    %v2469 = vmul.f32 %v2465, 0.5
    %v2470 = vmul.f32 %v2466, 0.5
    %v2471 = vtanh.pop %v2468
    %v2472 = vtanh.pop %v2469
    %v2473 = vtanh.pop %v2470
    %v2474 = vmul.f32 %v2471, 0.5
    %v2475 = vmul.f32 %v2472, 0.5
    %v2476 = vmul.f32 %v2473, 0.5
    %v2477 = vadd.f32 %v2474, 0.5
    %v2478 = vadd.f32 %v2475, 0.5
    %v2479 = vadd.f32 %v2476, 0.5
    %v2480 = vtanh.pop %v2467
    %v2481 = vmul.f32 %v2478, %v2181
    %v2482 = vmul.f32 %v2477, %v2480
    %v2483 = vadd.f32 %v2481, %v2482
    %v2484 = vtanh.pop %v2483
    %v2485 = vmul.f32 %v2479, %v2484
    %2486 = vmatpush.msra.mxu0 %v337
    %2487 = vmatpush.msra.mxu0 %v333
    %2488 = vmatpush.msra.mxu0 %v329
    %2489 = vmatpush.msra.mxu0 %v325
    %2490 = vmatpush.msra.mxu0 %v321
    %2491 = vmatpush.msra.mxu0 %v317
    %2492 = vmatpush.msra.mxu0 %v313
    %2493 = vmatpush.msra.mxu0 %v309
    %2494 = vmatpush.msra.mxu0 %v305
    %2495 = vmatpush.msra.mxu0 %v301
    %2496 = vmatpush.msra.mxu0 %v297
    %2497 = vmatpush.msra.mxu0 %v293
    %2498 = vmatpush.msra.mxu0 %v289
    %2499 = vmatpush.msra.mxu0 %v285
    %2500 = vmatpush.msra.mxu0 %v281
    %2501 = vmatpush.msra.mxu0 %v277
    %2502 = vmatmul.f32.gmra.mxu0 %v2302
    %v2503 = vpop.f32.mrf.mxu0
    %v2504 = vadd.f32 0.0, %v2503
    %2505 = vdwg.mxu0
    %2506 = vmatpush.msra.mxu0 %v338
    %2507 = vmatpush.msra.mxu0 %v334
    %2508 = vmatpush.msra.mxu0 %v330
    %2509 = vmatpush.msra.mxu0 %v326
    %2510 = vmatpush.msra.mxu0 %v322
    %2511 = vmatpush.msra.mxu0 %v318
    %2512 = vmatpush.msra.mxu0 %v314
    %2513 = vmatpush.msra.mxu0 %v310
    %2514 = vmatpush.msra.mxu0 %v306
    %2515 = vmatpush.msra.mxu0 %v302
    %2516 = vmatpush.msra.mxu0 %v298
    %2517 = vmatpush.msra.mxu0 %v294
    %2518 = vmatpush.msra.mxu0 %v290
    %2519 = vmatpush.msra.mxu0 %v286
    %2520 = vmatpush.msra.mxu0 %v282
    %2521 = vmatpush.msra.mxu0 %v278
    %2522 = vmatmul.f32.gmra.mxu0 %v2302
    %v2523 = vpop.f32.mrf.mxu0
    %v2524 = vadd.f32 0.0, %v2523
    %2525 = vdwg.mxu0
    %2526 = vmatpush.msra.mxu0 %v339
    %2527 = vmatpush.msra.mxu0 %v335
    %2528 = vmatpush.msra.mxu0 %v331
    %2529 = vmatpush.msra.mxu0 %v327
    %2530 = vmatpush.msra.mxu0 %v323
    %2531 = vmatpush.msra.mxu0 %v319
    %2532 = vmatpush.msra.mxu0 %v315
    %2533 = vmatpush.msra.mxu0 %v311
    %2534 = vmatpush.msra.mxu0 %v307
    %2535 = vmatpush.msra.mxu0 %v303
    %2536 = vmatpush.msra.mxu0 %v299
    %2537 = vmatpush.msra.mxu0 %v295
    %2538 = vmatpush.msra.mxu0 %v291
    %2539 = vmatpush.msra.mxu0 %v287
    %2540 = vmatpush.msra.mxu0 %v283
    %2541 = vmatpush.msra.mxu0 %v279
    %2542 = vmatmul.f32.gmra.mxu0 %v2302
    %v2543 = vpop.f32.mrf.mxu0
    %v2544 = vadd.f32 0.0, %v2543
    %2545 = vdwg.mxu0
    %2546 = vmatpush.msra.mxu0 %v340
    %2547 = vmatpush.msra.mxu0 %v336
    %2548 = vmatpush.msra.mxu0 %v332
    %2549 = vmatpush.msra.mxu0 %v328
    %2550 = vmatpush.msra.mxu0 %v324
    %2551 = vmatpush.msra.mxu0 %v320
    %2552 = vmatpush.msra.mxu0 %v316
    %2553 = vmatpush.msra.mxu0 %v312
    %2554 = vmatpush.msra.mxu0 %v308
    %2555 = vmatpush.msra.mxu0 %v304
    %2556 = vmatpush.msra.mxu0 %v300
    %2557 = vmatpush.msra.mxu0 %v296
    %2558 = vmatpush.msra.mxu0 %v292
    %2559 = vmatpush.msra.mxu0 %v288
    %2560 = vmatpush.msra.mxu0 %v284
    %2561 = vmatpush.msra.mxu0 %v280
    %2562 = vmatmul.f32.gmra.mxu0 %v2302
    %v2563 = vpop.f32.mrf.mxu0
    %v2564 = vadd.f32 0.0, %v2563
    %2565 = vdwg.mxu0
    %v2570 = vrot.slane %v2504, 2
    %v2571 = vrot.slane %v2524, 2
    %v2572 = vrot.slane %v2544, 2
    %v2573 = vrot.slane %v2564, 2
    %v2578 = vadd.f32 %v124, %v2570
    %v2579 = vadd.f32 %v147, %v2571
    %v2580 = vadd.f32 %v170, %v2572
    %v2581 = vadd.f32 %v193, %v2573
    %v2582 = vmul.f32 %v2578, 0.5
    %v2583 = vmul.f32 %v2579, 0.5
    %v2584 = vmul.f32 %v2580, 0.5
    %v2585 = vtanh.pop %v2582
    %v2586 = vtanh.pop %v2583
    %v2587 = vtanh.pop %v2584
    %v2588 = vmul.f32 %v2585, 0.5
    %v2589 = vmul.f32 %v2586, 0.5
    %v2590 = vmul.f32 %v2587, 0.5
    %v2591 = vadd.f32 %v2588, 0.5
    %v2592 = vadd.f32 %v2589, 0.5
    %v2593 = vadd.f32 %v2590, 0.5
    %v2594 = vtanh.pop %v2581
    %v2596 = vrot.slane %v2298, 6
    %v2598 = vmul.f32 %v2592, %v2596
    %v2599 = vmul.f32 %v2591, %v2594
    %v2600 = vadd.f32 %v2598, %v2599
    %v2601 = vtanh.pop %v2600
    %v2602 = vmul.f32 %v2593, %v2601
    %v2604 = vrot.slane %v2602, 6
    %2606 = vmatpush.msra.mxu0 %v503
    %2607 = vmatpush.msra.mxu0 %v499
    %2608 = vmatpush.msra.mxu0 %v495
    %2609 = vmatpush.msra.mxu0 %v491
    %2610 = vmatpush.msra.mxu0 %v487
    %2611 = vmatpush.msra.mxu0 %v483
    %2612 = vmatpush.msra.mxu0 %v479
    %2613 = vmatpush.msra.mxu0 %v475
    %2614 = vmatpush.msra.mxu0 %v471
    %2615 = vmatpush.msra.mxu0 %v467
    %2616 = vmatpush.msra.mxu0 %v463
    %2617 = vmatpush.msra.mxu0 %v459
    %2618 = vmatpush.msra.mxu0 %v455
    %2619 = vmatpush.msra.mxu0 %v451
    %2620 = vmatpush.msra.mxu0 %v447
    %2621 = vmatpush.msra.mxu0 %v443
    %2622 = vmatmul.f32.gmra.mxu0 %v2604
    %v2623 = vpop.f32.mrf.mxu0
    %v2624 = vadd.f32 0.0, %v2623
    %2625 = vdwg.mxu0
    %2626 = vmatpush.msra.mxu0 %v504
    %2627 = vmatpush.msra.mxu0 %v500
    %2628 = vmatpush.msra.mxu0 %v496
    %2629 = vmatpush.msra.mxu0 %v492
    %2630 = vmatpush.msra.mxu0 %v488
    %2631 = vmatpush.msra.mxu0 %v484
    %2632 = vmatpush.msra.mxu0 %v480
    %2633 = vmatpush.msra.mxu0 %v476
    %2634 = vmatpush.msra.mxu0 %v472
    %2635 = vmatpush.msra.mxu0 %v468
    %2636 = vmatpush.msra.mxu0 %v464
    %2637 = vmatpush.msra.mxu0 %v460
    %2638 = vmatpush.msra.mxu0 %v456
    %2639 = vmatpush.msra.mxu0 %v452
    %2640 = vmatpush.msra.mxu0 %v448
    %2641 = vmatpush.msra.mxu0 %v444
    %2642 = vmatmul.f32.gmra.mxu0 %v2604
    %v2643 = vpop.f32.mrf.mxu0
    %v2644 = vadd.f32 0.0, %v2643
    %2645 = vdwg.mxu0
    %2646 = vmatpush.msra.mxu0 %v505
    %2647 = vmatpush.msra.mxu0 %v501
    %2648 = vmatpush.msra.mxu0 %v497
    %2649 = vmatpush.msra.mxu0 %v493
    %2650 = vmatpush.msra.mxu0 %v489
    %2651 = vmatpush.msra.mxu0 %v485
    %2652 = vmatpush.msra.mxu0 %v481
    %2653 = vmatpush.msra.mxu0 %v477
    %2654 = vmatpush.msra.mxu0 %v473
    %2655 = vmatpush.msra.mxu0 %v469
    %2656 = vmatpush.msra.mxu0 %v465
    %2657 = vmatpush.msra.mxu0 %v461
    %2658 = vmatpush.msra.mxu0 %v457
    %2659 = vmatpush.msra.mxu0 %v453
    %2660 = vmatpush.msra.mxu0 %v449
    %2661 = vmatpush.msra.mxu0 %v445
    %2662 = vmatmul.f32.gmra.mxu0 %v2604
    %v2663 = vpop.f32.mrf.mxu0
    %v2664 = vadd.f32 0.0, %v2663
    %2665 = vdwg.mxu0
    %2666 = vmatpush.msra.mxu0 %v506
    %2667 = vmatpush.msra.mxu0 %v502
    %2668 = vmatpush.msra.mxu0 %v498
    %2669 = vmatpush.msra.mxu0 %v494
    %2670 = vmatpush.msra.mxu0 %v490
    %2671 = vmatpush.msra.mxu0 %v486
    %2672 = vmatpush.msra.mxu0 %v482
    %2673 = vmatpush.msra.mxu0 %v478
    %2674 = vmatpush.msra.mxu0 %v474
    %2675 = vmatpush.msra.mxu0 %v470
    %2676 = vmatpush.msra.mxu0 %v466
    %2677 = vmatpush.msra.mxu0 %v462
    %2678 = vmatpush.msra.mxu0 %v458
    %2679 = vmatpush.msra.mxu0 %v454
    %2680 = vmatpush.msra.mxu0 %v450
    %2681 = vmatpush.msra.mxu0 %v446
    %2682 = vmatmul.f32.gmra.mxu0 %v2604
    %v2683 = vpop.f32.mrf.mxu0
    %v2684 = vadd.f32 0.0, %v2683
    %2685 = vdwg.mxu0
    %2686 = vmatpush.msra.mxu0 %v273
    %2687 = vmatpush.msra.mxu0 %v269
    %2688 = vmatpush.msra.mxu0 %v265
    %2689 = vmatpush.msra.mxu0 %v261
    %2690 = vmatpush.msra.mxu0 %v257
    %2691 = vmatpush.msra.mxu0 %v253
    %2692 = vmatpush.msra.mxu0 %v249
    %2693 = vmatpush.msra.mxu0 %v245
    %2694 = vmatpush.msra.mxu0 %v241
    %2695 = vmatpush.msra.mxu0 %v237
    %2696 = vmatpush.msra.mxu0 %v233
    %2697 = vmatpush.msra.mxu0 %v229
    %2698 = vmatpush.msra.mxu0 %v225
    %2699 = vmatpush.msra.mxu0 %v221
    %2700 = vmatpush.msra.mxu0 %v217
    %2701 = vmatpush.msra.mxu0 %v213
    %2702 = vmatmul.f32.gmra.mxu0 %v2485
    %v2703 = vpop.f32.mrf.mxu0
    %v2704 = vadd.f32 %v2624, %v2703
    %2705 = vdwg.mxu0
    %2706 = vmatpush.msra.mxu0 %v274
    %2707 = vmatpush.msra.mxu0 %v270
    %2708 = vmatpush.msra.mxu0 %v266
    %2709 = vmatpush.msra.mxu0 %v262
    %2710 = vmatpush.msra.mxu0 %v258
    %2711 = vmatpush.msra.mxu0 %v254
    %2712 = vmatpush.msra.mxu0 %v250
    %2713 = vmatpush.msra.mxu0 %v246
    %2714 = vmatpush.msra.mxu0 %v242
    %2715 = vmatpush.msra.mxu0 %v238
    %2716 = vmatpush.msra.mxu0 %v234
    %2717 = vmatpush.msra.mxu0 %v230
    %2718 = vmatpush.msra.mxu0 %v226
    %2719 = vmatpush.msra.mxu0 %v222
    %2720 = vmatpush.msra.mxu0 %v218
    %2721 = vmatpush.msra.mxu0 %v214
    %2722 = vmatmul.f32.gmra.mxu0 %v2485
    %v2723 = vpop.f32.mrf.mxu0
    %v2724 = vadd.f32 %v2644, %v2723
    %2725 = vdwg.mxu0
    %2726 = vmatpush.msra.mxu0 %v275
    %2727 = vmatpush.msra.mxu0 %v271
    %2728 = vmatpush.msra.mxu0 %v267
    %2729 = vmatpush.msra.mxu0 %v263
    %2730 = vmatpush.msra.mxu0 %v259
    %2731 = vmatpush.msra.mxu0 %v255
    %2732 = vmatpush.msra.mxu0 %v251
    %2733 = vmatpush.msra.mxu0 %v247
    %2734 = vmatpush.msra.mxu0 %v243
    %2735 = vmatpush.msra.mxu0 %v239
    %2736 = vmatpush.msra.mxu0 %v235
    %2737 = vmatpush.msra.mxu0 %v231
    %2738 = vmatpush.msra.mxu0 %v227
    %2739 = vmatpush.msra.mxu0 %v223
    %2740 = vmatpush.msra.mxu0 %v219
    %2741 = vmatpush.msra.mxu0 %v215
    %2742 = vmatmul.f32.gmra.mxu0 %v2485
    %v2743 = vpop.f32.mrf.mxu0
    %v2744 = vadd.f32 %v2664, %v2743
    %2745 = vdwg.mxu0
    %2746 = vmatpush.msra.mxu0 %v276
    %2747 = vmatpush.msra.mxu0 %v272
    %2748 = vmatpush.msra.mxu0 %v268
    %2749 = vmatpush.msra.mxu0 %v264
    %2750 = vmatpush.msra.mxu0 %v260
    %2751 = vmatpush.msra.mxu0 %v256
    %2752 = vmatpush.msra.mxu0 %v252
    %2753 = vmatpush.msra.mxu0 %v248
    %2754 = vmatpush.msra.mxu0 %v244
    %2755 = vmatpush.msra.mxu0 %v240
    %2756 = vmatpush.msra.mxu0 %v236
    %2757 = vmatpush.msra.mxu0 %v232
    %2758 = vmatpush.msra.mxu0 %v228
    %2759 = vmatpush.msra.mxu0 %v224
    %2760 = vmatpush.msra.mxu0 %v220
    %2761 = vmatpush.msra.mxu0 %v216
    %2762 = vmatmul.f32.gmra.mxu0 %v2485
    %v2763 = vpop.f32.mrf.mxu0
    %v2764 = vadd.f32 %v2684, %v2763
    %2765 = vdwg.mxu0
    %v2766 = vadd.f32 %v2704, %v197
    %v2767 = vadd.f32 %v2724, %v198
    %v2768 = vadd.f32 %v2744, %v199
    %v2769 = vadd.f32 %v2764, %v200
    %v2770 = vmul.f32 %v2766, 0.5
    %v2771 = vmul.f32 %v2767, 0.5
    %v2772 = vmul.f32 %v2768, 0.5
    %v2773 = vtanh.pop %v2770
    %v2774 = vtanh.pop %v2771
    %v2775 = vtanh.pop %v2772
    %v2776 = vmul.f32 %v2773, 0.5
    %v2777 = vmul.f32 %v2774, 0.5
    %v2778 = vmul.f32 %v2775, 0.5
    %v2779 = vadd.f32 %v2776, 0.5
    %v2780 = vadd.f32 %v2777, 0.5
    %v2781 = vadd.f32 %v2778, 0.5
    %v2782 = vtanh.pop %v2769
    %v2783 = vmul.f32 %v2780, %v2483
    %v2784 = vmul.f32 %v2779, %v2782
    %v2785 = vadd.f32 %v2783, %v2784
    %v2786 = vtanh.pop %v2785
    %v2787 = vmul.f32 %v2781, %v2786
    %v2788 = vld [vmem:[%s4] sm:$0xff]
    %v2789 = vld [vmem:[%s4 + $0x8] sm:$0xff]
    %v2790 = vld [vmem:[%s4 + $0x10] sm:$0xff]
    %v2791 = vld [vmem:[%s4 + $0x18] sm:$0xff]
    %v2792 = vld [vmem:[%s4 + $0x20] sm:$0xff]
    %v2793 = vld [vmem:[%s4 + $0x28] sm:$0xff]
    %v2794 = vld [vmem:[%s4 + $0x30] sm:$0xff]
    %v2795 = vld [vmem:[%s4 + $0x38] sm:$0xff]
    %v2796 = vld [vmem:[%s4 + $0x40] sm:$0xff]
    %v2797 = vld [vmem:[%s4 + $0x48] sm:$0xff]
    %v2798 = vld [vmem:[%s4 + $0x50] sm:$0xff]
    %v2799 = vld [vmem:[%s4 + $0x58] sm:$0xff]
    %v2800 = vld [vmem:[%s4 + $0x60] sm:$0xff]
    %v2801 = vld [vmem:[%s4 + $0x68] sm:$0xff]
    %v2802 = vld [vmem:[%s4 + $0x70] sm:$0xff]
    %v2803 = vld [vmem:[%s4 + $0x78] sm:$0xff]
    %v2804 = vld [vmem:[%s5] sm:$0x1]
    %v2806 = vperm.slane %v2804, 0
    %2808 = vmatpush.msra.mxu0 %v2803
    %2809 = vmatpush.msra.mxu0 %v2802
    %2810 = vmatpush.msra.mxu0 %v2801
    %2811 = vmatpush.msra.mxu0 %v2800
    %2812 = vmatpush.msra.mxu0 %v2799
    %2813 = vmatpush.msra.mxu0 %v2798
    %2814 = vmatpush.msra.mxu0 %v2797
    %2815 = vmatpush.msra.mxu0 %v2796
    %2816 = vmatpush.msra.mxu0 %v2795
    %2817 = vmatpush.msra.mxu0 %v2794
    %2818 = vmatpush.msra.mxu0 %v2793
    %2819 = vmatpush.msra.mxu0 %v2792
    %2820 = vmatpush.msra.mxu0 %v2791
    %2821 = vmatpush.msra.mxu0 %v2790
    %2822 = vmatpush.msra.mxu0 %v2789
    %2823 = vmatpush.msra.mxu0 %v2788
    %2824 = vmatmul.f32.gmra.mxu0 %v2787
    %v2825 = vpop.f32.mrf.mxu0
    %v2826 = vadd.f32 %v2806, %v2825
    %2827 = vdwg.mxu0
    %vm2828 = vcmask 9216
    %2829 = vst.msk [vmem:[#allocation6] sm:$0x3] %vm2828, %v2826
    // Predicated region
    $region38: #{lstm_forward.1} parent=1 // pred_check
      _
    $region39: #{lstm_forward.1} parent=1 // pred_check_branch
      %2831 = sbr.rel (0) target = $region41
    $region40: #{lstm_forward.1} parent=1 // pred_region
      %2833 = vsyncadd [#allocation7], 0
      %s2835 = sshll.u32 [#allocation6], 4
      %s2836 = int_to_ptr.vmem [resolvable:$true] %s2835
      %s2837 = sshll.u32 %s9, 4
      %s2838 = int_to_ptr.hbm [resolvable:$true] %s2837
      %2840 = dma.vmem_to_hbm [thread:$0]  %s2836, 32, %s2838, [#allocation7]
    $region41: #{lstm_forward.1} parent=1 // pred_fallthru
      _
    // Predicated region
    $region42: #{lstm_forward.1} parent=1 // pred_check
      _
    $region43: #{lstm_forward.1} parent=1 // pred_check_branch
      %2842 = sbr.rel (0) target = $region45
    $region44: #{lstm_forward.1} parent=1 // pred_region
      %2844 = dma.done [#allocation7], 32
    $region45: #{lstm_forward.1} parent=1 // pred_fallthru
      _
    %2845 = vsyncpa [#allocation7], 1
  %2846 = vsyncmov [#allocation5]
  %s2847 = vpop.sfrf %2846
  %p2848 = scmp.eq.s32.totalorder %s2847, 0
  %p2849 = pneg %p2848
  %2851 = shalt.err (%p2849)
  %s2852 = scalar_lea.sflag [#allocation5], 1
  %2853 = vsyncmov %s2852
  %s2854 = vpop.sfrf %2853
  %p2855 = scmp.eq.s32.totalorder %s2854, 0
  %p2856 = pneg %p2855
  %2858 = shalt.err (%p2856)
  %s2859 = scalar_lea.sflag [#allocation5], 2
  %2860 = vsyncmov %s2859
  %s2861 = vpop.sfrf %2860
  %p2862 = scmp.eq.s32.totalorder %s2861, 0
  %p2863 = pneg %p2862
  %2865 = shalt.err (%p2863)

</llo_original>
